<compile_context>
chip_gen: v7x
topology: tpu7x:2x2x1
jax: 0.10.0
libtpu: 0.0.40
codegen_flags: <defaults>
</compile_context>

<pallas_src>
import math

import jax
import jax.numpy as jnp
from jax.experimental import pallas as pl
from jax.experimental.pallas import tpu as pltpu

MAX_M_TILE = 1024  # lane-dim tile cap (review: sweep 512-2048; f32 acc = 16 vregs @1024)


def _choose_m_tile(M):
    """Lane tile: multiple of 128, capped at MAX_M_TILE, small enough that the grid
    has >= 2 steps (keeps both v7x TensorCores busy even at tiny batch)."""
    half = (M + 1) // 2
    tile = ((half + 127) // 128) * 128
    return max(128, min(MAX_M_TILE, tile))


# ----------------------------------------------------------------------------
# Pallas kernel: transposed conv-as-matmul, one M-tile per grid step.
#   out[:, m] = relu(W @ X^T[:, m] + b)
# ----------------------------------------------------------------------------
def _conv_mm_kernel(xT_ref, w_ref, b_ref, o_ref):
    # xT: (K, Mt) bf16 | w: (C_out, K) bf16 | b: (C_out, 1) f32 | o: (C_out, Mt) bf16
    acc = jnp.dot(w_ref[...], xT_ref[...], preferred_element_type=jnp.float32)
    o_ref[...] = jnp.maximum(acc + b_ref[...], 0.0).astype(o_ref.dtype)


def conv_matmul_relu_T(xT, w, b):
    """xT: (K, M) bf16 transposed patches; w: (C_out, K) bf16; b: (C_out, 1) f32.
    Returns (C_out, M) bf16 = relu(w @ xT + b). No pad / post-slice: the partial
    final block is masked by Pallas (garbage lanes read past M are discarded)."""
    K, M = xT.shape
    C_out = w.shape[0]
    tile = _choose_m_tile(M)
    n_tiles = pl.cdiv(M, tile)

    cost = pl.CostEstimate(
        flops=2 * C_out * K * M,
        transcendentals=0,
        bytes_accessed=(K * M + C_out * M) * 2 + C_out * K * 2 + C_out * 4,
    )

    return pl.pallas_call(
        _conv_mm_kernel,
        out_shape=jax.ShapeDtypeStruct((C_out, M), jnp.bfloat16),
        grid_spec=pltpu.PrefetchScalarGridSpec(
            num_scalar_prefetch=0,
            grid=(n_tiles,),
            in_specs=[
                pl.BlockSpec((K, tile), lambda m: (0, m)),   # pipelined patch stream
                pl.BlockSpec((C_out, K), lambda m: (0, 0)),  # resident weight
                pl.BlockSpec((C_out, 1), lambda m: (0, 0)),  # resident bias
            ],
            out_specs=pl.BlockSpec((C_out, tile), lambda m: (0, m)),
        ),
        compiler_params=pltpu.CompilerParams(dimension_semantics=("parallel",)),
        cost_estimate=cost,
    )(xT, w, b)


# ----------------------------------------------------------------------------
# Pallas kernel: fused head.
#   flat = [prong(x1); prong(x2)] (2B, 784) -> d = x1 - x2 -> ++ visited_partitions
#   -> fc1+ReLU -> fc2     (concat realized as split fc1 weight: d@W1a + vp@W1b + b1)
# ----------------------------------------------------------------------------
def _head_kernel(flat_ref, vp_ref, w1a_ref, w1b_ref, b1_ref, w2_ref, b2_ref, o_ref):
    B = o_ref.shape[0]
    f = flat_ref[...]
    d = f[:B, :].astype(jnp.float32) - f[B:, :].astype(jnp.float32)
    h = jnp.dot(d.astype(jnp.bfloat16), w1a_ref[...],
                preferred_element_type=jnp.float32)
    h = h + jnp.dot(vp_ref[...].astype(jnp.bfloat16), w1b_ref[...],
                    preferred_element_type=jnp.float32)
    h = jnp.maximum(h + b1_ref[...], 0.0)
    q = jnp.dot(h.astype(jnp.bfloat16), w2_ref[...],
                preferred_element_type=jnp.float32)
    o_ref[...] = (q + b2_ref[...]).astype(o_ref.dtype)


def head_matmul(flat, vp, w1a, w1b, b1, w2, b2):
    N, F = flat.shape
    B = N // 2
    P = vp.shape[1]
    Dh = w1a.shape[1]
    A = w2.shape[1]
    cost = pl.CostEstimate(
        flops=2 * B * (F + P) * Dh + 2 * B * Dh * A,
        transcendentals=0,
        bytes_accessed=(N * F * 2 + B * P * 4 + (F + P) * Dh * 2
                        + Dh * A * 2 + (Dh + A) * 4 + B * A * 4),
    )
    return pl.pallas_call(
        _head_kernel,
        out_shape=jax.ShapeDtypeStruct((B, A), jnp.float32),
        in_specs=[
            pl.BlockSpec((N, F), lambda: (0, 0)),
            pl.BlockSpec((B, P), lambda: (0, 0)),
            pl.BlockSpec((F, Dh), lambda: (0, 0)),
            pl.BlockSpec((P, Dh), lambda: (0, 0)),
            pl.BlockSpec((1, Dh), lambda: (0, 0)),
            pl.BlockSpec((Dh, A), lambda: (0, 0)),
            pl.BlockSpec((1, A), lambda: (0, 0)),
        ],
        out_specs=pl.BlockSpec((B, A), lambda: (0, 0)),
        cost_estimate=cost,
    )(flat, vp, w1a, w1b, b1, w2, b2)


# ----------------------------------------------------------------------------
# im2col in channel-leading layout (plain JAX glue; fuses into one XLA fusion).
#   a: (C, N, H, W) -> (C*k*k, N*Ho*Wo), row order (c, kh, kw) = torch
#   weight.reshape(C_out, C_in*k*k) column order.
# ----------------------------------------------------------------------------
def im2colT(a, k, s):
    C, N, H, W = a.shape
    Ho = (H - k) // s + 1
    Wo = (W - k) // s + 1
    cols = []
    for i in range(k):
        for j in range(k):
            cols.append(a[:, :, i: i + s * Ho: s, j: j + s * Wo: s])  # (C,N,Ho,Wo)
    p = jnp.stack(cols, axis=1)                  # (C, k*k, N, Ho, Wo)
    p = p.reshape(C * k * k, N * Ho * Wo)        # row = c*k*k + i*k + j
    return p, Ho, Wo


# ----------------------------------------------------------------------------
# Parameter init (PyTorch-like uniform(-1/sqrt(fan_in), +)) and one-time prep.
# ----------------------------------------------------------------------------
def init_params(key, n_actions, max_partitions):
    ks = jax.random.split(key, 10)

    def u(k, shape, fan_in):
        b = 1.0 / math.sqrt(fan_in)
        return jax.random.uniform(k, shape, jnp.float32, -b, b)

    raw = {}
    raw["conv1_w"] = u(ks[0], (16, 1, 8, 8), 1 * 8 * 8)
    raw["conv1_b"] = u(ks[1], (16,), 1 * 8 * 8)
    raw["conv2_w"] = u(ks[2], (16, 16, 4, 4), 16 * 4 * 4)
    raw["conv2_b"] = u(ks[3], (16,), 16 * 4 * 4)
    raw["conv3_w"] = u(ks[4], (16, 16, 3, 3), 16 * 3 * 3)
    raw["conv3_b"] = u(ks[5], (16,), 16 * 3 * 3)
    fc1_in = 784 + max_partitions
    raw["fc1_w"] = u(ks[6], (128, fc1_in), fc1_in)
    raw["fc1_b"] = u(ks[7], (128,), fc1_in)
    raw["fc2_w"] = u(ks[8], (n_actions, 128), 128)
    raw["fc2_b"] = u(ks[9], (n_actions,), 128)
    return raw


def prepare_params(raw):
    """One-time: reshape/transpose weights for the kernels, cast to bf16,
    fold the 1/255 input scale into conv1, shape biases for in-kernel broadcast."""
    p = {}
    p["conv1_w"] = (raw["conv1_w"].reshape(16, -1) * (1.0 / 255.0)).astype(jnp.bfloat16)
    p["conv1_b"] = raw["conv1_b"].reshape(16, 1)
    p["conv2_w"] = raw["conv2_w"].reshape(16, -1).astype(jnp.bfloat16)
    p["conv2_b"] = raw["conv2_b"].reshape(16, 1)
    p["conv3_w"] = raw["conv3_w"].reshape(16, -1).astype(jnp.bfloat16)
    p["conv3_b"] = raw["conv3_b"].reshape(16, 1)
    w1t = raw["fc1_w"].T                       # (784 + P, 128)
    p["fc1_wa"] = w1t[:784].astype(jnp.bfloat16)
    p["fc1_wb"] = w1t[784:].astype(jnp.bfloat16)
    p["fc1_b"] = raw["fc1_b"].reshape(1, -1)
    p["fc2_w"] = raw["fc2_w"].T.astype(jnp.bfloat16)   # (128, A)
    p["fc2_b"] = raw["fc2_b"].reshape(1, -1)
    return p


# ----------------------------------------------------------------------------
# Forward pass: EENetwork.forward(x, visited_partitions)
# ----------------------------------------------------------------------------
def eenetwork_forward(params, x, visited_partitions):
    B, C2, H, W = x.shape            # C2 == 2 (the two split channels)
    N = C2 * B                       # doubled batch: [x1 batch | x2 batch]
    # Channel-leading (C=1, N, H, W); 1/255 is already folded into conv1_w, so the
    # uint8-valued activations are exact in bf16.
    a = jnp.transpose(x, (1, 0, 2, 3)).reshape(1, N, H, W).astype(jnp.bfloat16)

    for name, k, s in (("conv1", 8, 4), ("conv2", 4, 2), ("conv3", 3, 1)):
        pT, Ho, Wo = im2colT(a, k, s)                              # (K, N*Ho*Wo) bf16
        y = conv_matmul_relu_T(pT, params[name + "_w"], params[name + "_b"])
        a = y.reshape(y.shape[0], N, Ho, Wo)                       # (C_out, N, Ho, Wo)

    # nn.Flatten: per-sample channel-major (c, h, w) flatten; x1/x2 split + subtract
    # happen inside the head kernel.
    flat = jnp.transpose(a, (1, 0, 2, 3)).reshape(N, -1)           # (2B, 784) bf16

    return head_matmul(
        flat, visited_partitions,
        params["fc1_wa"], params["fc1_wb"], params["fc1_b"],
        params["fc2_w"], params["fc2_b"])


# ----------------------------------------------------------------------------
# Pure-JAX f32 reference (mirrors the PyTorch module) for a sanity check.
# ----------------------------------------------------------------------------
def eenetwork_reference(raw, x, visited_partitions):
    def conv2d_relu(a, w, b, s):
        y = jax.lax.conv_general_dilated(
            a, w, window_strides=(s, s), padding="VALID",
            dimension_numbers=("NCHW", "OIHW", "NCHW"))
        return jax.nn.relu(y + b[None, :, None, None])

    xs = x / 255.0
    x1, x2 = xs[:, 0:1], xs[:, 1:2]

    def prong(z):
        z = conv2d_relu(z, raw["conv1_w"], raw["conv1_b"], 4)
        z = conv2d_relu(z, raw["conv2_w"], raw["conv2_b"], 2)
        z = conv2d_relu(z, raw["conv3_w"], raw["conv3_b"], 1)
        return z.reshape(z.shape[0], -1)

    d = prong(x1) - prong(x2)
    h = jnp.concatenate([d, visited_partitions], axis=1)
    h = jax.nn.relu(h @ raw["fc1_w"].T + raw["fc1_b"])
    return h @ raw["fc2_w"].T + raw["fc2_b"]


if __name__ == "__main__":
    N_ACTIONS = 6
    MAX_PARTITIONS = 16
    B, H, W = 2, 84, 84   # 84x84 is what the module implies (prong flatten = 16*7*7 = 784)

    key = jax.random.PRNGKey(0)
    k_params, k_x, k_vp = jax.random.split(key, 3)

    raw = init_params(k_params, N_ACTIONS, MAX_PARTITIONS)
    params = prepare_params(raw)

    # Deterministic "uint8-like" 2-channel frame pair + binary visited-partition mask.
    x = jax.random.randint(k_x, (B, 2, H, W), 0, 256).astype(jnp.float32)
    visited = (jax.random.uniform(k_vp, (B, MAX_PARTITIONS)) < 0.3).astype(jnp.float32)

    q = jax.jit(eenetwork_forward)(params, x, visited)
    q = jax.block_until_ready(q)
    assert q.shape == (B, N_ACTIONS), q.shape
    assert bool(jnp.all(jnp.isfinite(q)))

    # Loose tolerance: kernel path uses bf16 MXU operands (f32 accumulation).
    q_ref = jax.block_until_ready(eenetwork_reference(raw, x, visited))
    err = float(jnp.max(jnp.abs(q - q_ref)))
    scale = float(jnp.max(jnp.abs(q_ref)))
    assert err <= 0.1 + 0.05 * scale, (err, scale)

    print("KERNEL_OK")
</pallas_src>

<mosaic_0001>
module attributes {stable_mosaic.version = 11 : i64} {
  func.func @_conv_mm_kernel(%arg0: i32, %arg1: memref<64x896xbf16, #tpu.memory_space<vmem>>, %arg2: memref<16x64xbf16, #tpu.memory_space<vmem>>, %arg3: memref<16x1xf32, #tpu.memory_space<vmem>>, %arg4: memref<16x896xbf16, #tpu.memory_space<vmem>>) attributes {dimension_semantics = [#tpu.dimension_semantics<parallel>], iteration_bounds = array<i64: 2>, scalar_prefetch = 0 : i64, scratch_operands = 0 : i64, tpu.core_type = #tpu.core_type<tc>, window_params = [{transform_indices = @transform_0, window_bounds = array<i64: 64, 896>}, {pipeline_mode = #tpu.pipeline_mode<synchronous>, transform_indices = @transform_1, window_bounds = array<i64: 16, 64>}, {pipeline_mode = #tpu.pipeline_mode<synchronous>, transform_indices = @transform_2, window_bounds = array<i64: 16, 1>}, {transform_indices = @transform_3, window_bounds = array<i64: 16, 896>}]} {
    %c0 = arith.constant 0 : index
    %c0_0 = arith.constant 0 : index
    %0 = vector.load %arg2[%c0, %c0_0] : memref<16x64xbf16, #tpu.memory_space<vmem>>, vector<16x64xbf16>
    %c0_1 = arith.constant 0 : index
    %c0_2 = arith.constant 0 : index
    %1 = vector.load %arg1[%c0_1, %c0_2] : memref<64x896xbf16, #tpu.memory_space<vmem>>, vector<64x896xbf16>
    %cst = arith.constant dense<0.000000e+00> : vector<16x896xf32>
    %2 = tpu.matmul %0, %1, %cst {dimension_numbers = #tpu.dot_dimension_numbers<[1], [0], [0], [1], [0, 0, 1, 1], [], []>} : vector<16x64xbf16>, vector<64x896xbf16>, vector<16x896xf32> -> vector<16x896xf32>
    %c0_3 = arith.constant 0 : index
    %c0_4 = arith.constant 0 : index
    %3 = vector.load %arg3[%c0_3, %c0_4] : memref<16x1xf32, #tpu.memory_space<vmem>>, vector<16x1xf32>
    %4 = vector.broadcast %3 : vector<16x1xf32> to vector<16x896xf32>
    %5 = arith.addf %2, %4 : vector<16x896xf32>
    %cst_5 = arith.constant 0.000000e+00 : f32
    %6 = vector.broadcast %cst_5 : f32 to vector<16x896xf32>
    %7 = arith.maximumf %5, %6 : vector<16x896xf32>
    %8 = arith.truncf %7 : vector<16x896xf32> to vector<16x896xbf16>
    %c0_6 = arith.constant 0 : index
    %c0_7 = arith.constant 0 : index
    %9 = vector.load %arg4[%c0_6, %c0_7] : memref<16x896xbf16, #tpu.memory_space<vmem>>, vector<16x896xbf16>
    tpu.vector_store %arg4[%c0_6, %c0_7], %8 {strides = array<i32>} : memref<16x896xbf16, #tpu.memory_space<vmem>>, vector<16x896xbf16>,
    return
  }
  func.func @transform_0(%arg0: i32) -> (i32, i32) {
    %c0_i32 = arith.constant 0 : i32
    %c0_i32_0 = arith.constant 0 : i32
    return %c0_i32, %arg0 : i32, i32
  }
  func.func @transform_1(%arg0: i32) -> (i32, i32) {
    %c0_i32 = arith.constant 0 : i32
    %c0_i32_0 = arith.constant 0 : i32
    %c0_i32_1 = arith.constant 0 : i32
    return %c0_i32, %c0_i32_0 : i32, i32
  }
  func.func @transform_2(%arg0: i32) -> (i32, i32) {
    %c0_i32 = arith.constant 0 : i32
    %c0_i32_0 = arith.constant 0 : i32
    %c0_i32_1 = arith.constant 0 : i32
    return %c0_i32, %c0_i32_0 : i32, i32
  }
  func.func @transform_3(%arg0: i32) -> (i32, i32) {
    %c0_i32 = arith.constant 0 : i32
    %c0_i32_0 = arith.constant 0 : i32
    return %c0_i32, %arg0 : i32, i32
  }
}

module attributes {stable_mosaic.version = 11 : i64} {
  func.func @_conv_mm_kernel(%arg0: i32, %arg1: memref<256x256xbf16, #tpu.memory_space<vmem>>, %arg2: memref<16x256xbf16, #tpu.memory_space<vmem>>, %arg3: memref<16x1xf32, #tpu.memory_space<vmem>>, %arg4: memref<16x256xbf16, #tpu.memory_space<vmem>>) attributes {dimension_semantics = [#tpu.dimension_semantics<parallel>], iteration_bounds = array<i64: 2>, scalar_prefetch = 0 : i64, scratch_operands = 0 : i64, tpu.core_type = #tpu.core_type<tc>, window_params = [{transform_indices = @transform_0, window_bounds = array<i64: 256, 256>}, {pipeline_mode = #tpu.pipeline_mode<synchronous>, transform_indices = @transform_1, window_bounds = array<i64: 16, 256>}, {pipeline_mode = #tpu.pipeline_mode<synchronous>, transform_indices = @transform_2, window_bounds = array<i64: 16, 1>}, {transform_indices = @transform_3, window_bounds = array<i64: 16, 256>}]} {
    %c0 = arith.constant 0 : index
    %c0_0 = arith.constant 0 : index
    %0 = vector.load %arg2[%c0, %c0_0] : memref<16x256xbf16, #tpu.memory_space<vmem>>, vector<16x256xbf16>
    %c0_1 = arith.constant 0 : index
    %c0_2 = arith.constant 0 : index
    %1 = vector.load %arg1[%c0_1, %c0_2] : memref<256x256xbf16, #tpu.memory_space<vmem>>, vector<256x256xbf16>
    %cst = arith.constant dense<0.000000e+00> : vector<16x256xf32>
    %2 = tpu.matmul %0, %1, %cst {dimension_numbers = #tpu.dot_dimension_numbers<[1], [0], [0], [1], [0, 0, 1, 1], [], []>} : vector<16x256xbf16>, vector<256x256xbf16>, vector<16x256xf32> -> vector<16x256xf32>
    %c0_3 = arith.constant 0 : index
    %c0_4 = arith.constant 0 : index
    %3 = vector.load %arg3[%c0_3, %c0_4] : memref<16x1xf32, #tpu.memory_space<vmem>>, vector<16x1xf32>
    %4 = vector.broadcast %3 : vector<16x1xf32> to vector<16x256xf32>
    %5 = arith.addf %2, %4 : vector<16x256xf32>
    %cst_5 = arith.constant 0.000000e+00 : f32
    %6 = vector.broadcast %cst_5 : f32 to vector<16x256xf32>
    %7 = arith.maximumf %5, %6 : vector<16x256xf32>
    %8 = arith.truncf %7 : vector<16x256xf32> to vector<16x256xbf16>
    %c0_6 = arith.constant 0 : index
    %c0_7 = arith.constant 0 : index
    %9 = vector.load %arg4[%c0_6, %c0_7] : memref<16x256xbf16, #tpu.memory_space<vmem>>, vector<16x256xbf16>
    tpu.vector_store %arg4[%c0_6, %c0_7], %8 {strides = array<i32>} : memref<16x256xbf16, #tpu.memory_space<vmem>>, vector<16x256xbf16>,
    return
  }
  func.func @transform_0(%arg0: i32) -> (i32, i32) {
    %c0_i32 = arith.constant 0 : i32
    %c0_i32_0 = arith.constant 0 : i32
    return %c0_i32, %arg0 : i32, i32
  }
  func.func @transform_1(%arg0: i32) -> (i32, i32) {
    %c0_i32 = arith.constant 0 : i32
    %c0_i32_0 = arith.constant 0 : i32
    %c0_i32_1 = arith.constant 0 : i32
    return %c0_i32, %c0_i32_0 : i32, i32
  }
  func.func @transform_2(%arg0: i32) -> (i32, i32) {
    %c0_i32 = arith.constant 0 : i32
    %c0_i32_0 = arith.constant 0 : i32
    %c0_i32_1 = arith.constant 0 : i32
    return %c0_i32, %c0_i32_0 : i32, i32
  }
  func.func @transform_3(%arg0: i32) -> (i32, i32) {
    %c0_i32 = arith.constant 0 : i32
    %c0_i32_0 = arith.constant 0 : i32
    return %c0_i32, %arg0 : i32, i32
  }
}

module attributes {stable_mosaic.version = 11 : i64} {
  func.func @_conv_mm_kernel(%arg0: i32, %arg1: memref<144x128xbf16, #tpu.memory_space<vmem>>, %arg2: memref<16x144xbf16, #tpu.memory_space<vmem>>, %arg3: memref<16x1xf32, #tpu.memory_space<vmem>>, %arg4: memref<16x128xbf16, #tpu.memory_space<vmem>>) attributes {dimension_semantics = [#tpu.dimension_semantics<parallel>], iteration_bounds = array<i64: 2>, scalar_prefetch = 0 : i64, scratch_operands = 0 : i64, tpu.core_type = #tpu.core_type<tc>, window_params = [{transform_indices = @transform_0, window_bounds = array<i64: 144, 128>}, {pipeline_mode = #tpu.pipeline_mode<synchronous>, transform_indices = @transform_1, window_bounds = array<i64: 16, 144>}, {pipeline_mode = #tpu.pipeline_mode<synchronous>, transform_indices = @transform_2, window_bounds = array<i64: 16, 1>}, {transform_indices = @transform_3, window_bounds = array<i64: 16, 128>}]} {
    %c0 = arith.constant 0 : index
    %c0_0 = arith.constant 0 : index
    %0 = vector.load %arg2[%c0, %c0_0] : memref<16x144xbf16, #tpu.memory_space<vmem>>, vector<16x144xbf16>
    %c0_1 = arith.constant 0 : index
    %c0_2 = arith.constant 0 : index
    %1 = vector.load %arg1[%c0_1, %c0_2] : memref<144x128xbf16, #tpu.memory_space<vmem>>, vector<144x128xbf16>
    %cst = arith.constant dense<0.000000e+00> : vector<16x128xf32>
    %2 = tpu.matmul %0, %1, %cst {dimension_numbers = #tpu.dot_dimension_numbers<[1], [0], [0], [1], [0, 0, 1, 1], [], []>} : vector<16x144xbf16>, vector<144x128xbf16>, vector<16x128xf32> -> vector<16x128xf32>
    %c0_3 = arith.constant 0 : index
    %c0_4 = arith.constant 0 : index
    %3 = vector.load %arg3[%c0_3, %c0_4] : memref<16x1xf32, #tpu.memory_space<vmem>>, vector<16x1xf32>
    %4 = vector.broadcast %3 : vector<16x1xf32> to vector<16x128xf32>
    %5 = arith.addf %2, %4 : vector<16x128xf32>
    %cst_5 = arith.constant 0.000000e+00 : f32
    %6 = vector.broadcast %cst_5 : f32 to vector<16x128xf32>
    %7 = arith.maximumf %5, %6 : vector<16x128xf32>
    %8 = arith.truncf %7 : vector<16x128xf32> to vector<16x128xbf16>
    %c0_6 = arith.constant 0 : index
    %c0_7 = arith.constant 0 : index
    %9 = vector.load %arg4[%c0_6, %c0_7] : memref<16x128xbf16, #tpu.memory_space<vmem>>, vector<16x128xbf16>
    tpu.vector_store %arg4[%c0_6, %c0_7], %8 {strides = array<i32>} : memref<16x128xbf16, #tpu.memory_space<vmem>>, vector<16x128xbf16>,
    return
  }
  func.func @transform_0(%arg0: i32) -> (i32, i32) {
    %c0_i32 = arith.constant 0 : i32
    %c0_i32_0 = arith.constant 0 : i32
    return %c0_i32, %arg0 : i32, i32
  }
  func.func @transform_1(%arg0: i32) -> (i32, i32) {
    %c0_i32 = arith.constant 0 : i32
    %c0_i32_0 = arith.constant 0 : i32
    %c0_i32_1 = arith.constant 0 : i32
    return %c0_i32, %c0_i32_0 : i32, i32
  }
  func.func @transform_2(%arg0: i32) -> (i32, i32) {
    %c0_i32 = arith.constant 0 : i32
    %c0_i32_0 = arith.constant 0 : i32
    %c0_i32_1 = arith.constant 0 : i32
    return %c0_i32, %c0_i32_0 : i32, i32
  }
  func.func @transform_3(%arg0: i32) -> (i32, i32) {
    %c0_i32 = arith.constant 0 : i32
    %c0_i32_0 = arith.constant 0 : i32
    return %c0_i32, %arg0 : i32, i32
  }
}

module attributes {stable_mosaic.version = 11 : i64} {
  func.func @_head_kernel(%arg0: memref<4x784xbf16, #tpu.memory_space<vmem>>, %arg1: memref<2x16xf32, #tpu.memory_space<vmem>>, %arg2: memref<784x128xbf16, #tpu.memory_space<vmem>>, %arg3: memref<16x128xbf16, #tpu.memory_space<vmem>>, %arg4: memref<1x128xf32, #tpu.memory_space<vmem>>, %arg5: memref<128x6xbf16, #tpu.memory_space<vmem>>, %arg6: memref<1x6xf32, #tpu.memory_space<vmem>>, %arg7: memref<2x6xf32, #tpu.memory_space<vmem>>) attributes {dimension_semantics = [], scalar_prefetch = 0 : i64, scratch_operands = 0 : i64, tpu.core_type = #tpu.core_type<tc>} {
    %c0 = arith.constant 0 : index
    %c0_0 = arith.constant 0 : index
    %0 = vector.load %arg0[%c0, %c0_0] : memref<4x784xbf16, #tpu.memory_space<vmem>>, vector<4x784xbf16>
    %1 = vector.extract_strided_slice %0 {offsets = [0, 0], sizes = [2, 784], strides = [1, 1]} : vector<4x784xbf16> to vector<2x784xbf16>
    %2 = arith.extf %1 : vector<2x784xbf16> to vector<2x784xf32>
    %3 = vector.extract_strided_slice %0 {offsets = [2, 0], sizes = [2, 784], strides = [1, 1]} : vector<4x784xbf16> to vector<2x784xbf16>
    %4 = arith.extf %3 : vector<2x784xbf16> to vector<2x784xf32>
    %5 = arith.subf %2, %4 : vector<2x784xf32>
    %6 = arith.truncf %5 : vector<2x784xf32> to vector<2x784xbf16>
    %c0_1 = arith.constant 0 : index
    %c0_2 = arith.constant 0 : index
    %7 = vector.load %arg2[%c0_1, %c0_2] : memref<784x128xbf16, #tpu.memory_space<vmem>>, vector<784x128xbf16>
    %cst = arith.constant dense<0.000000e+00> : vector<2x128xf32>
    %8 = tpu.matmul %6, %7, %cst {dimension_numbers = #tpu.dot_dimension_numbers<[1], [0], [0], [1], [0, 0, 1, 1], [], []>} : vector<2x784xbf16>, vector<784x128xbf16>, vector<2x128xf32> -> vector<2x128xf32>
    %c0_3 = arith.constant 0 : index
    %c0_4 = arith.constant 0 : index
    %9 = vector.load %arg1[%c0_3, %c0_4] : memref<2x16xf32, #tpu.memory_space<vmem>>, vector<2x16xf32>
    %10 = arith.truncf %9 : vector<2x16xf32> to vector<2x16xbf16>
    %c0_5 = arith.constant 0 : index
    %c0_6 = arith.constant 0 : index
    %11 = vector.load %arg3[%c0_5, %c0_6] : memref<16x128xbf16, #tpu.memory_space<vmem>>, vector<16x128xbf16>
    %cst_7 = arith.constant dense<0.000000e+00> : vector<2x128xf32>
    %12 = tpu.matmul %10, %11, %cst_7 {dimension_numbers = #tpu.dot_dimension_numbers<[1], [0], [0], [1], [0, 0, 1, 1], [], []>} : vector<2x16xbf16>, vector<16x128xbf16>, vector<2x128xf32> -> vector<2x128xf32>
    %13 = arith.addf %8, %12 : vector<2x128xf32>
    %c0_8 = arith.constant 0 : index
    %c0_9 = arith.constant 0 : index
    %14 = vector.load %arg4[%c0_8, %c0_9] : memref<1x128xf32, #tpu.memory_space<vmem>>, vector<1x128xf32>
    %15 = vector.broadcast %14 : vector<1x128xf32> to vector<2x128xf32>
    %16 = arith.addf %13, %15 : vector<2x128xf32>
    %cst_10 = arith.constant 0.000000e+00 : f32
    %17 = vector.broadcast %cst_10 : f32 to vector<2x128xf32>
    %18 = arith.maximumf %16, %17 : vector<2x128xf32>
    %19 = arith.truncf %18 : vector<2x128xf32> to vector<2x128xbf16>
    %c0_11 = arith.constant 0 : index
    %c0_12 = arith.constant 0 : index
    %20 = vector.load %arg5[%c0_11, %c0_12] : memref<128x6xbf16, #tpu.memory_space<vmem>>, vector<128x6xbf16>
    %cst_13 = arith.constant dense<0.000000e+00> : vector<2x6xf32>
    %21 = tpu.matmul %19, %20, %cst_13 {dimension_numbers = #tpu.dot_dimension_numbers<[1], [0], [0], [1], [0, 0, 1, 1], [], []>} : vector<2x128xbf16>, vector<128x6xbf16>, vector<2x6xf32> -> vector<2x6xf32>
    %c0_14 = arith.constant 0 : index
    %c0_15 = arith.constant 0 : index
    %22 = vector.load %arg6[%c0_14, %c0_15] : memref<1x6xf32, #tpu.memory_space<vmem>>, vector<1x6xf32>
    %23 = vector.broadcast %22 : vector<1x6xf32> to vector<2x6xf32>
    %24 = arith.addf %21, %23 : vector<2x6xf32>
    %c0_16 = arith.constant 0 : index
    %c0_17 = arith.constant 0 : index
    %25 = vector.load %arg7[%c0_16, %c0_17] : memref<2x6xf32, #tpu.memory_space<vmem>>, vector<2x6xf32>
    tpu.vector_store %arg7[%c0_16, %c0_17], %24 {strides = array<i32>} : memref<2x6xf32, #tpu.memory_space<vmem>>, vector<2x6xf32>,
    return
  }
}

</mosaic_0001>

<llo_original>
// kernel: eenetwork_forward.4
$region0: #{eenetwork_forward.4}
  #allocation0 [shape = 'u32[]', space=smem, size = 0x4, offset = 0x4, fixed_abs, tag = 'smem constant byte address 0x4 - core index']
  #allocation1 [shape = 'u32[144,128]{1,0:T(1,128)}', space=vmem, size = 0x12000, scoped, tag = 'internal scratch']
  %s0 = inlined_call_operand.vmem [shape: bf16[64,1600], index: 0, kind: input, shape index: {}]
  %s1 = inlined_call_operand.vmem [shape: bf16[16,64], index: 1, kind: input, shape index: {}]
  %s2 = inlined_call_operand.vmem [shape: f32[16,1], index: 2, kind: input, shape index: {}]
  %s3 = inlined_call_operand.vmem [shape: bf16[16,1600], index: 3, kind: output, shape index: {}]
  %s4 = sld [smem:[#allocation0]]
  $region173: #{eenetwork_forward.4} parent=0
    _
  %s6 = ssub.s32 1, %s4
  %s7 = scalar_select 0, %s6, %s4
  $region1: #{eenetwork_forward.4} parent=0
    #allocation2 [shape = 'u8[229376]{0}', space=vmem, size = 0x38000, scoped, tag = 'input window, operand 0']
    #allocation3 [shape = 'u8[57344]{0}', space=vmem, size = 0xe000, scoped, tag = 'output window, operand 0']
    loop: start=0, step=1, limit=4
    $region2: #{eenetwork_forward.4} parent=1 // loop_pre_header
      _
    $region3: #{eenetwork_forward.4} parent=1 // loop_header
      %s9 = sphi 0, %s13
      %p10 = scmp.ge.s32.totalorder %s9, 4
      %s19 = sphi 0, %s21
      %s22 = sphi 0, %s19
      %s23 = sphi 0, %s22
      %s39 = sphi 0, %s23
      %s43 = sphi 0, %s43
      %s45 = sphi 0, %s43
      %s46 = sphi 0, %s45
      %s60 = sphi 0, %s46
      %s64 = sphi 0, %s64
      %s66 = sphi 0, %s64
      %s67 = sphi 0, %s66
      %s81 = sphi 0, %s67
      %s87 = sphi 0, %s89
      %s90 = sphi 0, %s87
      %s91 = sphi 0, %s90
      %s107 = sphi 0, %s91
    $region4: #{eenetwork_forward.4} parent=1 // loop_header_branch
      %12 = sbr.rel (%p10) target = $region8
    $region5: #{eenetwork_forward.4} parent=1 // loop_body
      %s14 = ssub.s32 %s9, 1
      %s15 = ssub.s32 %s9, 2
      %s16 = sadd.s32 %s9, 1
      %s17 = ssub.s32 %s9, %s16
      %p18 = scmp.eq.s32.totalorder %s17, 0
      %s20 = sadd.s32 %s19, 1
      %s21 = scalar_select %p18, %s19, %s20
      %p24 = pneg %p18
      %p25 = scmp.eq.s32.totalorder %s9, 1
      %p26 = por %p24, %p25
      %p27 = scmp.ne.s32.totalorder %s19, %s22
      %p28 = scmp.eq.s32.totalorder %s9, 0
      %p29 = por %p27, %p28
      %p30 = scmp.ne.s32.totalorder %s19, %s22
      %p31 = scmp.eq.s32.totalorder %s14, 1
      %p32 = por %p30, %p31
      %p33 = scmp.ne.s32.totalorder %s22, %s23
      %p34 = scmp.eq.s32.totalorder %s14, 0
      %p35 = por %p33, %p34
      %p36 = scmp.ne.s32.totalorder %s22, %s23
      %p37 = scmp.eq.s32.totalorder %s15, 1
      %p38 = por %p36, %p37
      %p40 = scmp.ne.s32.totalorder %s23, %s39
      %p41 = scmp.eq.s32.totalorder %s15, 0
      %p42 = por %p40, %p41
      %s44 = sadd.s32 %s43, 1
      %p47 = scmp.eq.s32.totalorder %s9, 1
      %p48 = scmp.ne.s32.totalorder %s43, %s45
      %p49 = scmp.eq.s32.totalorder %s9, 0
      %p50 = por %p48, %p49
      %p51 = scmp.ne.s32.totalorder %s43, %s45
      %p52 = scmp.eq.s32.totalorder %s14, 1
      %p53 = por %p51, %p52
      %p54 = scmp.ne.s32.totalorder %s45, %s46
      %p55 = scmp.eq.s32.totalorder %s14, 0
      %p56 = por %p54, %p55
      %p57 = scmp.ne.s32.totalorder %s45, %s46
      %p58 = scmp.eq.s32.totalorder %s15, 1
      %p59 = por %p57, %p58
      %p61 = scmp.ne.s32.totalorder %s46, %s60
      %p62 = scmp.eq.s32.totalorder %s15, 0
      %p63 = por %p61, %p62
      %s65 = sadd.s32 %s64, 1
      %p68 = scmp.eq.s32.totalorder %s9, 1
      %p69 = scmp.ne.s32.totalorder %s64, %s66
      %p70 = scmp.eq.s32.totalorder %s9, 0
      %p71 = por %p69, %p70
      %p72 = scmp.ne.s32.totalorder %s64, %s66
      %p73 = scmp.eq.s32.totalorder %s14, 1
      %p74 = por %p72, %p73
      %p75 = scmp.ne.s32.totalorder %s66, %s67
      %p76 = scmp.eq.s32.totalorder %s14, 0
      %p77 = por %p75, %p76
      %p78 = scmp.ne.s32.totalorder %s66, %s67
      %p79 = scmp.eq.s32.totalorder %s15, 1
      %p80 = por %p78, %p79
      %p82 = scmp.ne.s32.totalorder %s67, %s81
      %p83 = scmp.eq.s32.totalorder %s15, 0
      %p84 = por %p82, %p83
      %s85 = ssub.s32 %s9, %s16
      %p86 = scmp.eq.s32.totalorder %s85, 0
      %s88 = sadd.s32 %s87, 1
      %s89 = scalar_select %p86, %s87, %s88
      %p92 = pneg %p86
      %p93 = scmp.eq.s32.totalorder %s9, 1
      %p94 = por %p92, %p93
      %p95 = scmp.ne.s32.totalorder %s87, %s90
      %p96 = scmp.eq.s32.totalorder %s9, 0
      %p97 = por %p95, %p96
      %p98 = scmp.ne.s32.totalorder %s87, %s90
      %p99 = scmp.eq.s32.totalorder %s14, 1
      %p100 = por %p98, %p99
      %p101 = scmp.ne.s32.totalorder %s90, %s91
      %p102 = scmp.eq.s32.totalorder %s14, 0
      %p103 = por %p101, %p102
      %p104 = scmp.ne.s32.totalorder %s90, %s91
      %p105 = scmp.eq.s32.totalorder %s15, 1
      %p106 = por %p104, %p105
      %p108 = scmp.ne.s32.totalorder %s91, %s107
      %p109 = scmp.eq.s32.totalorder %s15, 0
      %p110 = por %p108, %p109
      %p111 = scmp.le.s32.totalorder 1, %s9
      %p112 = scmp.lt.s32.totalorder %s9, 3
      %p113 = pnand %p111, %p112
      %p114 = pneg %p113
      // Predicated region
      $region9: #{eenetwork_forward.4} parent=5 // pred_check
        _
      $region10: #{eenetwork_forward.4} parent=5 // pred_check_branch
        %116 = sbr.rel (%p113) target = $region12
      $region11: #{eenetwork_forward.4} parent=5 // pred_region
        %s117 = ssub.s32 %s9, 1
        // Predicated region
        $region13: #{eenetwork_forward.4} parent=11 // pred_check
          %p118 = pneg %p56
        $region14: #{eenetwork_forward.4} parent=11 // pred_check_branch
          %120 = sbr.rel (%p118) target = $region16
        $region15: #{eenetwork_forward.4} parent=11 // pred_region
          _
        $region16: #{eenetwork_forward.4} parent=11 // pred_fallthru
          _
        // Predicated region
        $region17: #{eenetwork_forward.4} parent=11 // pred_check
          %p121 = pneg %p77
        $region18: #{eenetwork_forward.4} parent=11 // pred_check_branch
          %123 = sbr.rel (%p121) target = $region20
        $region19: #{eenetwork_forward.4} parent=11 // pred_region
          _
        $region20: #{eenetwork_forward.4} parent=11 // pred_fallthru
          _
      $region12: #{eenetwork_forward.4} parent=5 // pred_fallthru
        _
      %p124 = scmp.lt.s32.totalorder %s9, 2
      // Predicated region
      $region21: #{eenetwork_forward.4} parent=5 // pred_check
        %p125 = pneg %p124
      $region22: #{eenetwork_forward.4} parent=5 // pred_check_branch
        %127 = sbr.rel (%p125) target = $region24
      $region23: #{eenetwork_forward.4} parent=5 // pred_region
        // Predicated region
        $region25: #{eenetwork_forward.4} parent=23 // pred_check
          %p128 = pneg %p29
        $region26: #{eenetwork_forward.4} parent=23 // pred_check_branch
          %130 = sbr.rel (%p128) target = $region28
        $region27: #{eenetwork_forward.4} parent=23 // pred_region
          %s131 = sand.u32 %s19, 1
          %s132 = sand.u32 %s19, 1
          %s133 = smul.addr %s132, 224
          %s134 = scalar_lea.vmem [#allocation2], %s133
          %s135 = smul.u32 7, %s9
          %s136 = ssub.s32 13, %s135
          %p137 = scmp.lt.s32.totalorder %s136, 7
          %s138 = scalar_select %p137, %s136, 7
          %s139 = smul.u32 512, %s138
          %p140 = scmp.ne.s32.totalorder 0, %s139
          %s141 = smul.addr %s135, 4
          %s142 = scalar_lea.vmem %s0, %s141
          %s143 = smul.u32 %s138, 4
          // Predicated region
          $region29: #{eenetwork_forward.4} parent=27 // pred_check
            %p144 = pneg %p140
          $region30: #{eenetwork_forward.4} parent=27 // pred_check_branch
            %146 = sbr.rel (%p144) target = $region32
          $region31: #{eenetwork_forward.4} parent=27 // pred_region
            %p147 = scmp.lt.u32.totalorder %s143, 8
            %p148 = pneg %p147
            // Predicated region
            $region33: #{eenetwork_forward.4} parent=31 // pred_check
              _
            $region34: #{eenetwork_forward.4} parent=31 // pred_check_branch
              %150 = sbr.rel (%p147) target = $region36
            $region35: #{eenetwork_forward.4} parent=31 // pred_region
              %s179 = sand.u32 %s143, 7
              %p180 = scmp.eq.s32.totalorder %s179, 0
              // Predicated region
              $region48: #{eenetwork_forward.4} parent=35 // pred_check
                %p181 = pneg %p180
              $region49: #{eenetwork_forward.4} parent=35 // pred_check_branch
                %183 = sbr.rel (%p181) target = $region51
              $region50: #{eenetwork_forward.4} parent=35 // pred_region
                %s184 = sshrl.u32 %s143, 3
                %s185 = sshrl.u32 %s184, 3
                // While loop
                $region52: #{eenetwork_forward.4} parent=50 // loop_pre_header
                  _
                $region53: #{eenetwork_forward.4} parent=50 // loop_header
                  %s189 = sphi 0, %s191
                  %p190 = scmp.ge.s32.totalorder %s189, %s185
                  %s194 = sphi 0, %s327
                  %s195 = sphi %s142, %s330
                  %s196 = sphi %s134, %s331
                $region54: #{eenetwork_forward.4} parent=50 // loop_header_branch
                  %193 = sbr.rel (%p190) target = $region58
                $region55: #{eenetwork_forward.4} parent=50 // loop_body
                  %v197 = vld [vmem:[%s195] sm:$0xff]
                  %198 = vst [vmem:[%s196] sm:$0xff] %v197
                  %v199 = vld [vmem:[%s195 + $0x8] sm:$0xff]
                  %200 = vst [vmem:[%s196 + $0x8] sm:$0xff] %v199
                  %v201 = vld [vmem:[%s195 + $0x10] sm:$0xff]
                  %202 = vst [vmem:[%s196 + $0x10] sm:$0xff] %v201
                  %v203 = vld [vmem:[%s195 + $0x18] sm:$0xff]
                  %204 = vst [vmem:[%s196 + $0x18] sm:$0xff] %v203
                  %v205 = vld [vmem:[%s195 + $0x20] sm:$0xff]
                  %206 = vst [vmem:[%s196 + $0x20] sm:$0xff] %v205
                  %v207 = vld [vmem:[%s195 + $0x28] sm:$0xff]
                  %208 = vst [vmem:[%s196 + $0x28] sm:$0xff] %v207
                  %v209 = vld [vmem:[%s195 + $0x30] sm:$0xff]
                  %210 = vst [vmem:[%s196 + $0x30] sm:$0xff] %v209
                  %v211 = vld [vmem:[%s195 + $0x38] sm:$0xff]
                  %212 = vst [vmem:[%s196 + $0x38] sm:$0xff] %v211
                  %v213 = vld [vmem:[%s195 + $0x34] sm:$0xff]
                  %214 = vst [vmem:[%s196 + $0x1c] sm:$0xff] %v213
                  %v215 = vld [vmem:[%s195 + $0x3c] sm:$0xff]
                  %216 = vst [vmem:[%s196 + $0x24] sm:$0xff] %v215
                  %v217 = vld [vmem:[%s195 + $0x44] sm:$0xff]
                  %218 = vst [vmem:[%s196 + $0x2c] sm:$0xff] %v217
                  %v219 = vld [vmem:[%s195 + $0x4c] sm:$0xff]
                  %220 = vst [vmem:[%s196 + $0x34] sm:$0xff] %v219
                  %v221 = vld [vmem:[%s195 + $0x54] sm:$0xff]
                  %222 = vst [vmem:[%s196 + $0x3c] sm:$0xff] %v221
                  %v223 = vld [vmem:[%s195 + $0x5c] sm:$0xff]
                  %224 = vst [vmem:[%s196 + $0x44] sm:$0xff] %v223
                  %v225 = vld [vmem:[%s195 + $0x64] sm:$0xff]
                  %226 = vst [vmem:[%s196 + $0x4c] sm:$0xff] %v225
                  %v227 = vld [vmem:[%s195 + $0x6c] sm:$0xff]
                  %228 = vst [vmem:[%s196 + $0x54] sm:$0xff] %v227
                  %v229 = vld [vmem:[%s195 + $0x68] sm:$0xff]
                  %230 = vst [vmem:[%s196 + $0x38] sm:$0xff] %v229
                  %v231 = vld [vmem:[%s195 + $0x70] sm:$0xff]
                  %232 = vst [vmem:[%s196 + $0x40] sm:$0xff] %v231
                  %v233 = vld [vmem:[%s195 + $0x78] sm:$0xff]
                  %234 = vst [vmem:[%s196 + $0x48] sm:$0xff] %v233
                  %v235 = vld [vmem:[%s195 + $0x80] sm:$0xff]
                  %236 = vst [vmem:[%s196 + $0x50] sm:$0xff] %v235
                  %v237 = vld [vmem:[%s195 + $0x88] sm:$0xff]
                  %238 = vst [vmem:[%s196 + $0x58] sm:$0xff] %v237
                  %v239 = vld [vmem:[%s195 + $0x90] sm:$0xff]
                  %240 = vst [vmem:[%s196 + $0x60] sm:$0xff] %v239
                  %v241 = vld [vmem:[%s195 + $0x98] sm:$0xff]
                  %242 = vst [vmem:[%s196 + $0x68] sm:$0xff] %v241
                  %v243 = vld [vmem:[%s195 + $0xa0] sm:$0xff]
                  %244 = vst [vmem:[%s196 + $0x70] sm:$0xff] %v243
                  %v245 = vld [vmem:[%s195 + $0x9c] sm:$0xff]
                  %246 = vst [vmem:[%s196 + $0x54] sm:$0xff] %v245
                  %v247 = vld [vmem:[%s195 + $0xa4] sm:$0xff]
                  %248 = vst [vmem:[%s196 + $0x5c] sm:$0xff] %v247
                  %v249 = vld [vmem:[%s195 + $0xac] sm:$0xff]
                  %250 = vst [vmem:[%s196 + $0x64] sm:$0xff] %v249
                  %v251 = vld [vmem:[%s195 + $0xb4] sm:$0xff]
                  %252 = vst [vmem:[%s196 + $0x6c] sm:$0xff] %v251
                  %v253 = vld [vmem:[%s195 + $0xbc] sm:$0xff]
                  %254 = vst [vmem:[%s196 + $0x74] sm:$0xff] %v253
                  %v255 = vld [vmem:[%s195 + $0xc4] sm:$0xff]
                  %256 = vst [vmem:[%s196 + $0x7c] sm:$0xff] %v255
                  %v257 = vld [vmem:[%s195 + $0xcc] sm:$0xff]
                  %258 = vst [vmem:[%s196 + $0x84] sm:$0xff] %v257
                  %v259 = vld [vmem:[%s195 + $0xd4] sm:$0xff]
                  %260 = vst [vmem:[%s196 + $0x8c] sm:$0xff] %v259
                  %v261 = vld [vmem:[%s195 + $0xd0] sm:$0xff]
                  %262 = vst [vmem:[%s196 + $0x70] sm:$0xff] %v261
                  %v263 = vld [vmem:[%s195 + $0xd8] sm:$0xff]
                  %264 = vst [vmem:[%s196 + $0x78] sm:$0xff] %v263
                  %v265 = vld [vmem:[%s195 + $0xe0] sm:$0xff]
                  %266 = vst [vmem:[%s196 + $0x80] sm:$0xff] %v265
                  %v267 = vld [vmem:[%s195 + $0xe8] sm:$0xff]
                  %268 = vst [vmem:[%s196 + $0x88] sm:$0xff] %v267
                  %v269 = vld [vmem:[%s195 + $0xf0] sm:$0xff]
                  %270 = vst [vmem:[%s196 + $0x90] sm:$0xff] %v269
                  %v271 = vld [vmem:[%s195 + $0xf8] sm:$0xff]
                  %272 = vst [vmem:[%s196 + $0x98] sm:$0xff] %v271
                  %v273 = vld [vmem:[%s195 + $0x100] sm:$0xff]
                  %274 = vst [vmem:[%s196 + $0xa0] sm:$0xff] %v273
                  %v275 = vld [vmem:[%s195 + $0x108] sm:$0xff]
                  %276 = vst [vmem:[%s196 + $0xa8] sm:$0xff] %v275
                  %v277 = vld [vmem:[%s195 + $0x104] sm:$0xff]
                  %278 = vst [vmem:[%s196 + $0x8c] sm:$0xff] %v277
                  %v279 = vld [vmem:[%s195 + $0x10c] sm:$0xff]
                  %280 = vst [vmem:[%s196 + $0x94] sm:$0xff] %v279
                  %v281 = vld [vmem:[%s195 + $0x114] sm:$0xff]
                  %282 = vst [vmem:[%s196 + $0x9c] sm:$0xff] %v281
                  %v283 = vld [vmem:[%s195 + $0x11c] sm:$0xff]
                  %284 = vst [vmem:[%s196 + $0xa4] sm:$0xff] %v283
                  %v285 = vld [vmem:[%s195 + $0x124] sm:$0xff]
                  %286 = vst [vmem:[%s196 + $0xac] sm:$0xff] %v285
                  %v287 = vld [vmem:[%s195 + $0x12c] sm:$0xff]
                  %288 = vst [vmem:[%s196 + $0xb4] sm:$0xff] %v287
                  %v289 = vld [vmem:[%s195 + $0x134] sm:$0xff]
                  %290 = vst [vmem:[%s196 + $0xbc] sm:$0xff] %v289
                  %v291 = vld [vmem:[%s195 + $0x13c] sm:$0xff]
                  %292 = vst [vmem:[%s196 + $0xc4] sm:$0xff] %v291
                  %v293 = vld [vmem:[%s195 + $0x138] sm:$0xff]
                  %294 = vst [vmem:[%s196 + $0xa8] sm:$0xff] %v293
                  %v295 = vld [vmem:[%s195 + $0x140] sm:$0xff]
                  %296 = vst [vmem:[%s196 + $0xb0] sm:$0xff] %v295
                  %v297 = vld [vmem:[%s195 + $0x148] sm:$0xff]
                  %298 = vst [vmem:[%s196 + $0xb8] sm:$0xff] %v297
                  %v299 = vld [vmem:[%s195 + $0x150] sm:$0xff]
                  %300 = vst [vmem:[%s196 + $0xc0] sm:$0xff] %v299
                  %v301 = vld [vmem:[%s195 + $0x158] sm:$0xff]
                  %302 = vst [vmem:[%s196 + $0xc8] sm:$0xff] %v301
                  %v303 = vld [vmem:[%s195 + $0x160] sm:$0xff]
                  %304 = vst [vmem:[%s196 + $0xd0] sm:$0xff] %v303
                  %v305 = vld [vmem:[%s195 + $0x168] sm:$0xff]
                  %306 = vst [vmem:[%s196 + $0xd8] sm:$0xff] %v305
                  %v307 = vld [vmem:[%s195 + $0x170] sm:$0xff]
                  %308 = vst [vmem:[%s196 + $0xe0] sm:$0xff] %v307
                  %v309 = vld [vmem:[%s195 + $0x16c] sm:$0xff]
                  %310 = vst [vmem:[%s196 + $0xc4] sm:$0xff] %v309
                  %v311 = vld [vmem:[%s195 + $0x174] sm:$0xff]
                  %312 = vst [vmem:[%s196 + $0xcc] sm:$0xff] %v311
                  %v313 = vld [vmem:[%s195 + $0x17c] sm:$0xff]
                  %314 = vst [vmem:[%s196 + $0xd4] sm:$0xff] %v313
                  %v315 = vld [vmem:[%s195 + $0x184] sm:$0xff]
                  %316 = vst [vmem:[%s196 + $0xdc] sm:$0xff] %v315
                  %v317 = vld [vmem:[%s195 + $0x18c] sm:$0xff]
                  %318 = vst [vmem:[%s196 + $0xe4] sm:$0xff] %v317
                  %v319 = vld [vmem:[%s195 + $0x194] sm:$0xff]
                  %320 = vst [vmem:[%s196 + $0xec] sm:$0xff] %v319
                  %v321 = vld [vmem:[%s195 + $0x19c] sm:$0xff]
                  %322 = vst [vmem:[%s196 + $0xf4] sm:$0xff] %v321
                  %v323 = vld [vmem:[%s195 + $0x1a4] sm:$0xff]
                  %324 = vst [vmem:[%s196 + $0xfc] sm:$0xff] %v323
                  %s325 = sadd.s32 1, %s194
                  %p326 = scmp.ge.s32.totalorder %s325, %s185
                  %s327 = scalar_select %p326, 0, %s325
                  %s328 = smul.u32 %s327, 64
                  %s329 = smul.u32 %s327, 64
                  %s330 = scalar_lea.vmem %s142, %s328
                  %s331 = scalar_lea.vmem %s134, %s329 [#allocation2]
                $region56: #{eenetwork_forward.4} parent=50 // loop_footer
                  %s191 = sadd.s32 %s189, 1
                $region57: #{eenetwork_forward.4} parent=50 // loop_footer_branch
                  %188 = sbr.rel target = $region53
                $region58: #{eenetwork_forward.4} parent=50 // loop_exit
                  _
                %s332 = sshrl.u32 %s184, 3
                %s333 = sand.u32 %s184, 7
                %s334 = smul.u32 %s332, 8
                %s335 = smul.u32 128, %s334
                %s336 = sshra.s32 %s335, 4
                %s337 = scalar_lea.vmem %s142, %s336
                %s338 = smul.u32 128, %s334
                %s339 = sshra.s32 %s338, 4
                %s340 = scalar_lea.vmem %s134, %s339 [#allocation2]
                // While loop
                $region59: #{eenetwork_forward.4} parent=50 // loop_pre_header
                  _
                $region60: #{eenetwork_forward.4} parent=50 // loop_header
                  %s344 = sphi 0, %s346
                  %p345 = scmp.ge.s32.totalorder %s344, %s333
                  %s349 = sphi 0, %s370
                  %s350 = sphi %s337, %s373
                  %s351 = sphi %s340, %s374
                $region61: #{eenetwork_forward.4} parent=50 // loop_header_branch
                  %348 = sbr.rel (%p345) target = $region65
                $region62: #{eenetwork_forward.4} parent=50 // loop_body
                  %v352 = vld [vmem:[%s350] sm:$0xff]
                  %353 = vst [vmem:[%s351] sm:$0xff] %v352
                  %v354 = vld [vmem:[%s350 + $0x34] sm:$0xff]
                  %355 = vst [vmem:[%s351 + $0x1c] sm:$0xff] %v354
                  %v356 = vld [vmem:[%s350 + $0x68] sm:$0xff]
                  %357 = vst [vmem:[%s351 + $0x38] sm:$0xff] %v356
                  %v358 = vld [vmem:[%s350 + $0x9c] sm:$0xff]
                  %359 = vst [vmem:[%s351 + $0x54] sm:$0xff] %v358
                  %v360 = vld [vmem:[%s350 + $0xd0] sm:$0xff]
                  %361 = vst [vmem:[%s351 + $0x70] sm:$0xff] %v360
                  %v362 = vld [vmem:[%s350 + $0x104] sm:$0xff]
                  %363 = vst [vmem:[%s351 + $0x8c] sm:$0xff] %v362
                  %v364 = vld [vmem:[%s350 + $0x138] sm:$0xff]
                  %365 = vst [vmem:[%s351 + $0xa8] sm:$0xff] %v364
                  %v366 = vld [vmem:[%s350 + $0x16c] sm:$0xff]
                  %367 = vst [vmem:[%s351 + $0xc4] sm:$0xff] %v366
                  %s368 = sadd.s32 1, %s349
                  %p369 = scmp.ge.s32.totalorder %s368, %s333
                  %s370 = scalar_select %p369, 0, %s368
                  %s371 = smul.u32 %s370, 8
                  %s372 = smul.u32 %s370, 8
                  %s373 = scalar_lea.vmem %s337, %s371
                  %s374 = scalar_lea.vmem %s340, %s372 [#allocation2]
                $region63: #{eenetwork_forward.4} parent=50 // loop_footer
                  %s346 = sadd.s32 %s344, 1
                $region64: #{eenetwork_forward.4} parent=50 // loop_footer_branch
                  %343 = sbr.rel target = $region60
                $region65: #{eenetwork_forward.4} parent=50 // loop_exit
                  _
              $region51: #{eenetwork_forward.4} parent=35 // pred_fallthru
                _
              %p375 = pneg %p180
              // Predicated region
              $region66: #{eenetwork_forward.4} parent=35 // pred_check
                _
              $region67: #{eenetwork_forward.4} parent=35 // pred_check_branch
                %377 = sbr.rel (%p180) target = $region69
              $region68: #{eenetwork_forward.4} parent=35 // pred_region
                %s378 = sand.u32 %s143, 7
                %s379 = ssub.s32 %s143, %s378
                %s380 = scalar_lea.vmem %s142, %s379
                %s381 = ssub.s32 %s143, %s378
                %s382 = scalar_lea.vmem %s134, %s381 [#allocation2]
                %s383 = sshrl.u32 %s143, 3
                %s384 = sshrl.u32 %s383, 3
                // While loop
                $region70: #{eenetwork_forward.4} parent=68 // loop_pre_header
                  _
                $region71: #{eenetwork_forward.4} parent=68 // loop_header
                  %s388 = sphi 0, %s390
                  %p389 = scmp.ge.s32.totalorder %s388, %s384
                  %s393 = sphi 0, %s526
                  %s394 = sphi %s142, %s529
                  %s395 = sphi %s134, %s530
                $region72: #{eenetwork_forward.4} parent=68 // loop_header_branch
                  %392 = sbr.rel (%p389) target = $region76
                $region73: #{eenetwork_forward.4} parent=68 // loop_body
                  %v396 = vld [vmem:[%s394] sm:$0xff]
                  %397 = vst [vmem:[%s395] sm:$0xff] %v396
                  %v398 = vld [vmem:[%s394 + $0x8] sm:$0xff]
                  %399 = vst [vmem:[%s395 + $0x8] sm:$0xff] %v398
                  %v400 = vld [vmem:[%s394 + $0x10] sm:$0xff]
                  %401 = vst [vmem:[%s395 + $0x10] sm:$0xff] %v400
                  %v402 = vld [vmem:[%s394 + $0x18] sm:$0xff]
                  %403 = vst [vmem:[%s395 + $0x18] sm:$0xff] %v402
                  %v404 = vld [vmem:[%s394 + $0x20] sm:$0xff]
                  %405 = vst [vmem:[%s395 + $0x20] sm:$0xff] %v404
                  %v406 = vld [vmem:[%s394 + $0x28] sm:$0xff]
                  %407 = vst [vmem:[%s395 + $0x28] sm:$0xff] %v406
                  %v408 = vld [vmem:[%s394 + $0x30] sm:$0xff]
                  %409 = vst [vmem:[%s395 + $0x30] sm:$0xff] %v408
                  %v410 = vld [vmem:[%s394 + $0x38] sm:$0xff]
                  %411 = vst [vmem:[%s395 + $0x38] sm:$0xff] %v410
                  %v412 = vld [vmem:[%s394 + $0x34] sm:$0xff]
                  %413 = vst [vmem:[%s395 + $0x1c] sm:$0xff] %v412
                  %v414 = vld [vmem:[%s394 + $0x3c] sm:$0xff]
                  %415 = vst [vmem:[%s395 + $0x24] sm:$0xff] %v414
                  %v416 = vld [vmem:[%s394 + $0x44] sm:$0xff]
                  %417 = vst [vmem:[%s395 + $0x2c] sm:$0xff] %v416
                  %v418 = vld [vmem:[%s394 + $0x4c] sm:$0xff]
                  %419 = vst [vmem:[%s395 + $0x34] sm:$0xff] %v418
                  %v420 = vld [vmem:[%s394 + $0x54] sm:$0xff]
                  %421 = vst [vmem:[%s395 + $0x3c] sm:$0xff] %v420
                  %v422 = vld [vmem:[%s394 + $0x5c] sm:$0xff]
                  %423 = vst [vmem:[%s395 + $0x44] sm:$0xff] %v422
                  %v424 = vld [vmem:[%s394 + $0x64] sm:$0xff]
                  %425 = vst [vmem:[%s395 + $0x4c] sm:$0xff] %v424
                  %v426 = vld [vmem:[%s394 + $0x6c] sm:$0xff]
                  %427 = vst [vmem:[%s395 + $0x54] sm:$0xff] %v426
                  %v428 = vld [vmem:[%s394 + $0x68] sm:$0xff]
                  %429 = vst [vmem:[%s395 + $0x38] sm:$0xff] %v428
                  %v430 = vld [vmem:[%s394 + $0x70] sm:$0xff]
                  %431 = vst [vmem:[%s395 + $0x40] sm:$0xff] %v430
                  %v432 = vld [vmem:[%s394 + $0x78] sm:$0xff]
                  %433 = vst [vmem:[%s395 + $0x48] sm:$0xff] %v432
                  %v434 = vld [vmem:[%s394 + $0x80] sm:$0xff]
                  %435 = vst [vmem:[%s395 + $0x50] sm:$0xff] %v434
                  %v436 = vld [vmem:[%s394 + $0x88] sm:$0xff]
                  %437 = vst [vmem:[%s395 + $0x58] sm:$0xff] %v436
                  %v438 = vld [vmem:[%s394 + $0x90] sm:$0xff]
                  %439 = vst [vmem:[%s395 + $0x60] sm:$0xff] %v438
                  %v440 = vld [vmem:[%s394 + $0x98] sm:$0xff]
                  %441 = vst [vmem:[%s395 + $0x68] sm:$0xff] %v440
                  %v442 = vld [vmem:[%s394 + $0xa0] sm:$0xff]
                  %443 = vst [vmem:[%s395 + $0x70] sm:$0xff] %v442
                  %v444 = vld [vmem:[%s394 + $0x9c] sm:$0xff]
                  %445 = vst [vmem:[%s395 + $0x54] sm:$0xff] %v444
                  %v446 = vld [vmem:[%s394 + $0xa4] sm:$0xff]
                  %447 = vst [vmem:[%s395 + $0x5c] sm:$0xff] %v446
                  %v448 = vld [vmem:[%s394 + $0xac] sm:$0xff]
                  %449 = vst [vmem:[%s395 + $0x64] sm:$0xff] %v448
                  %v450 = vld [vmem:[%s394 + $0xb4] sm:$0xff]
                  %451 = vst [vmem:[%s395 + $0x6c] sm:$0xff] %v450
                  %v452 = vld [vmem:[%s394 + $0xbc] sm:$0xff]
                  %453 = vst [vmem:[%s395 + $0x74] sm:$0xff] %v452
                  %v454 = vld [vmem:[%s394 + $0xc4] sm:$0xff]
                  %455 = vst [vmem:[%s395 + $0x7c] sm:$0xff] %v454
                  %v456 = vld [vmem:[%s394 + $0xcc] sm:$0xff]
                  %457 = vst [vmem:[%s395 + $0x84] sm:$0xff] %v456
                  %v458 = vld [vmem:[%s394 + $0xd4] sm:$0xff]
                  %459 = vst [vmem:[%s395 + $0x8c] sm:$0xff] %v458
                  %v460 = vld [vmem:[%s394 + $0xd0] sm:$0xff]
                  %461 = vst [vmem:[%s395 + $0x70] sm:$0xff] %v460
                  %v462 = vld [vmem:[%s394 + $0xd8] sm:$0xff]
                  %463 = vst [vmem:[%s395 + $0x78] sm:$0xff] %v462
                  %v464 = vld [vmem:[%s394 + $0xe0] sm:$0xff]
                  %465 = vst [vmem:[%s395 + $0x80] sm:$0xff] %v464
                  %v466 = vld [vmem:[%s394 + $0xe8] sm:$0xff]
                  %467 = vst [vmem:[%s395 + $0x88] sm:$0xff] %v466
                  %v468 = vld [vmem:[%s394 + $0xf0] sm:$0xff]
                  %469 = vst [vmem:[%s395 + $0x90] sm:$0xff] %v468
                  %v470 = vld [vmem:[%s394 + $0xf8] sm:$0xff]
                  %471 = vst [vmem:[%s395 + $0x98] sm:$0xff] %v470
                  %v472 = vld [vmem:[%s394 + $0x100] sm:$0xff]
                  %473 = vst [vmem:[%s395 + $0xa0] sm:$0xff] %v472
                  %v474 = vld [vmem:[%s394 + $0x108] sm:$0xff]
                  %475 = vst [vmem:[%s395 + $0xa8] sm:$0xff] %v474
                  %v476 = vld [vmem:[%s394 + $0x104] sm:$0xff]
                  %477 = vst [vmem:[%s395 + $0x8c] sm:$0xff] %v476
                  %v478 = vld [vmem:[%s394 + $0x10c] sm:$0xff]
                  %479 = vst [vmem:[%s395 + $0x94] sm:$0xff] %v478
                  %v480 = vld [vmem:[%s394 + $0x114] sm:$0xff]
                  %481 = vst [vmem:[%s395 + $0x9c] sm:$0xff] %v480
                  %v482 = vld [vmem:[%s394 + $0x11c] sm:$0xff]
                  %483 = vst [vmem:[%s395 + $0xa4] sm:$0xff] %v482
                  %v484 = vld [vmem:[%s394 + $0x124] sm:$0xff]
                  %485 = vst [vmem:[%s395 + $0xac] sm:$0xff] %v484
                  %v486 = vld [vmem:[%s394 + $0x12c] sm:$0xff]
                  %487 = vst [vmem:[%s395 + $0xb4] sm:$0xff] %v486
                  %v488 = vld [vmem:[%s394 + $0x134] sm:$0xff]
                  %489 = vst [vmem:[%s395 + $0xbc] sm:$0xff] %v488
                  %v490 = vld [vmem:[%s394 + $0x13c] sm:$0xff]
                  %491 = vst [vmem:[%s395 + $0xc4] sm:$0xff] %v490
                  %v492 = vld [vmem:[%s394 + $0x138] sm:$0xff]
                  %493 = vst [vmem:[%s395 + $0xa8] sm:$0xff] %v492
                  %v494 = vld [vmem:[%s394 + $0x140] sm:$0xff]
                  %495 = vst [vmem:[%s395 + $0xb0] sm:$0xff] %v494
                  %v496 = vld [vmem:[%s394 + $0x148] sm:$0xff]
                  %497 = vst [vmem:[%s395 + $0xb8] sm:$0xff] %v496
                  %v498 = vld [vmem:[%s394 + $0x150] sm:$0xff]
                  %499 = vst [vmem:[%s395 + $0xc0] sm:$0xff] %v498
                  %v500 = vld [vmem:[%s394 + $0x158] sm:$0xff]
                  %501 = vst [vmem:[%s395 + $0xc8] sm:$0xff] %v500
                  %v502 = vld [vmem:[%s394 + $0x160] sm:$0xff]
                  %503 = vst [vmem:[%s395 + $0xd0] sm:$0xff] %v502
                  %v504 = vld [vmem:[%s394 + $0x168] sm:$0xff]
                  %505 = vst [vmem:[%s395 + $0xd8] sm:$0xff] %v504
                  %v506 = vld [vmem:[%s394 + $0x170] sm:$0xff]
                  %507 = vst [vmem:[%s395 + $0xe0] sm:$0xff] %v506
                  %v508 = vld [vmem:[%s394 + $0x16c] sm:$0xff]
                  %509 = vst [vmem:[%s395 + $0xc4] sm:$0xff] %v508
                  %v510 = vld [vmem:[%s394 + $0x174] sm:$0xff]
                  %511 = vst [vmem:[%s395 + $0xcc] sm:$0xff] %v510
                  %v512 = vld [vmem:[%s394 + $0x17c] sm:$0xff]
                  %513 = vst [vmem:[%s395 + $0xd4] sm:$0xff] %v512
                  %v514 = vld [vmem:[%s394 + $0x184] sm:$0xff]
                  %515 = vst [vmem:[%s395 + $0xdc] sm:$0xff] %v514
                  %v516 = vld [vmem:[%s394 + $0x18c] sm:$0xff]
                  %517 = vst [vmem:[%s395 + $0xe4] sm:$0xff] %v516
                  %v518 = vld [vmem:[%s394 + $0x194] sm:$0xff]
                  %519 = vst [vmem:[%s395 + $0xec] sm:$0xff] %v518
                  %v520 = vld [vmem:[%s394 + $0x19c] sm:$0xff]
                  %521 = vst [vmem:[%s395 + $0xf4] sm:$0xff] %v520
                  %v522 = vld [vmem:[%s394 + $0x1a4] sm:$0xff]
                  %523 = vst [vmem:[%s395 + $0xfc] sm:$0xff] %v522
                  %s524 = sadd.s32 1, %s393
                  %p525 = scmp.ge.s32.totalorder %s524, %s384
                  %s526 = scalar_select %p525, 0, %s524
                  %s527 = smul.u32 %s526, 64
                  %s528 = smul.u32 %s526, 64
                  %s529 = scalar_lea.vmem %s142, %s527
                  %s530 = scalar_lea.vmem %s134, %s528 [#allocation2]
                $region74: #{eenetwork_forward.4} parent=68 // loop_footer
                  %s390 = sadd.s32 %s388, 1
                $region75: #{eenetwork_forward.4} parent=68 // loop_footer_branch
                  %387 = sbr.rel target = $region71
                $region76: #{eenetwork_forward.4} parent=68 // loop_exit
                  _
                %s531 = sshrl.u32 %s383, 3
                %s532 = sand.u32 %s383, 7
                %s533 = smul.u32 %s531, 8
                %s534 = smul.u32 128, %s533
                %s535 = sshra.s32 %s534, 4
                %s536 = scalar_lea.vmem %s142, %s535
                %s537 = smul.u32 128, %s533
                %s538 = sshra.s32 %s537, 4
                %s539 = scalar_lea.vmem %s134, %s538 [#allocation2]
                // While loop
                $region77: #{eenetwork_forward.4} parent=68 // loop_pre_header
                  _
                $region78: #{eenetwork_forward.4} parent=68 // loop_header
                  %s543 = sphi 0, %s545
                  %p544 = scmp.ge.s32.totalorder %s543, %s532
                  %s548 = sphi 0, %s569
                  %s549 = sphi %s536, %s572
                  %s550 = sphi %s539, %s573
                $region79: #{eenetwork_forward.4} parent=68 // loop_header_branch
                  %547 = sbr.rel (%p544) target = $region83
                $region80: #{eenetwork_forward.4} parent=68 // loop_body
                  %v551 = vld [vmem:[%s549] sm:$0xff]
                  %552 = vst [vmem:[%s550] sm:$0xff] %v551
                  %v553 = vld [vmem:[%s549 + $0x34] sm:$0xff]
                  %554 = vst [vmem:[%s550 + $0x1c] sm:$0xff] %v553
                  %v555 = vld [vmem:[%s549 + $0x68] sm:$0xff]
                  %556 = vst [vmem:[%s550 + $0x38] sm:$0xff] %v555
                  %v557 = vld [vmem:[%s549 + $0x9c] sm:$0xff]
                  %558 = vst [vmem:[%s550 + $0x54] sm:$0xff] %v557
                  %v559 = vld [vmem:[%s549 + $0xd0] sm:$0xff]
                  %560 = vst [vmem:[%s550 + $0x70] sm:$0xff] %v559
                  %v561 = vld [vmem:[%s549 + $0x104] sm:$0xff]
                  %562 = vst [vmem:[%s550 + $0x8c] sm:$0xff] %v561
                  %v563 = vld [vmem:[%s549 + $0x138] sm:$0xff]
                  %564 = vst [vmem:[%s550 + $0xa8] sm:$0xff] %v563
                  %v565 = vld [vmem:[%s549 + $0x16c] sm:$0xff]
                  %566 = vst [vmem:[%s550 + $0xc4] sm:$0xff] %v565
                  %s567 = sadd.s32 1, %s548
                  %p568 = scmp.ge.s32.totalorder %s567, %s532
                  %s569 = scalar_select %p568, 0, %s567
                  %s570 = smul.u32 %s569, 8
                  %s571 = smul.u32 %s569, 8
                  %s572 = scalar_lea.vmem %s536, %s570
                  %s573 = scalar_lea.vmem %s539, %s571 [#allocation2]
                $region81: #{eenetwork_forward.4} parent=68 // loop_footer
                  %s545 = sadd.s32 %s543, 1
                $region82: #{eenetwork_forward.4} parent=68 // loop_footer_branch
                  %542 = sbr.rel target = $region78
                $region83: #{eenetwork_forward.4} parent=68 // loop_exit
                  _
                %s574 = sshllo.u32 0, %s378
                loop: start=0, step=1, limit=1
                $region84: #{eenetwork_forward.4} parent=68 // loop_pre_header
                  _
                $region85: #{eenetwork_forward.4} parent=68 // loop_header
                  %s576 = sphi 0, %s580
                  %p577 = scmp.ge.s32.totalorder %s576, 1
                  %s581 = sphi %s380, %s380
                  %s582 = sphi %s382, %s382
                $region86: #{eenetwork_forward.4} parent=68 // loop_header_branch
                  %579 = sbr.rel (%p577) target = $region90
                $region87: #{eenetwork_forward.4} parent=68 // loop_body
                  %v583 = vld [vmem:[%s581] sm:%s574]
                  %584 = vst [vmem:[%s582] sm:%s574] %v583
                  %v585 = vld [vmem:[%s581 + $0x34] sm:%s574]
                  %586 = vst [vmem:[%s582 + $0x1c] sm:%s574] %v585
                  %v587 = vld [vmem:[%s581 + $0x68] sm:%s574]
                  %588 = vst [vmem:[%s582 + $0x38] sm:%s574] %v587
                  %v589 = vld [vmem:[%s581 + $0x9c] sm:%s574]
                  %590 = vst [vmem:[%s582 + $0x54] sm:%s574] %v589
                  %v591 = vld [vmem:[%s581 + $0xd0] sm:%s574]
                  %592 = vst [vmem:[%s582 + $0x70] sm:%s574] %v591
                  %v593 = vld [vmem:[%s581 + $0x104] sm:%s574]
                  %594 = vst [vmem:[%s582 + $0x8c] sm:%s574] %v593
                  %v595 = vld [vmem:[%s581 + $0x138] sm:%s574]
                  %596 = vst [vmem:[%s582 + $0xa8] sm:%s574] %v595
                  %v597 = vld [vmem:[%s581 + $0x16c] sm:%s574]
                  %598 = vst [vmem:[%s582 + $0xc4] sm:%s574] %v597
                $region88: #{eenetwork_forward.4} parent=68 // loop_footer
                  %s580 = sadd.s32 1, %s576
                $region89: #{eenetwork_forward.4} parent=68 // loop_footer_branch
                  %575 = sbr.rel target = $region85
                $region90: #{eenetwork_forward.4} parent=68 // loop_exit
                  _
              $region69: #{eenetwork_forward.4} parent=35 // pred_fallthru
                _
            $region36: #{eenetwork_forward.4} parent=31 // pred_fallthru
              _
            // Predicated region
            $region37: #{eenetwork_forward.4} parent=31 // pred_check
              %p151 = pneg %p147
            $region38: #{eenetwork_forward.4} parent=31 // pred_check_branch
              %153 = sbr.rel (%p151) target = $region40
            $region39: #{eenetwork_forward.4} parent=31 // pred_region
              %s154 = sshllo.u32 0, %s143
              loop: start=0, step=1, limit=1
              $region41: #{eenetwork_forward.4} parent=39 // loop_pre_header
                _
              $region42: #{eenetwork_forward.4} parent=39 // loop_header
                %s156 = sphi 0, %s160
                %p157 = scmp.ge.s32.totalorder %s156, 1
                %s161 = sphi %s142, %s142
                %s162 = sphi %s134, %s134
              $region43: #{eenetwork_forward.4} parent=39 // loop_header_branch
                %159 = sbr.rel (%p157) target = $region47
              $region44: #{eenetwork_forward.4} parent=39 // loop_body
                %v163 = vld [vmem:[%s161] sm:%s154]
                %164 = vst [vmem:[%s162] sm:%s154] %v163
                %v165 = vld [vmem:[%s161 + $0x34] sm:%s154]
                %166 = vst [vmem:[%s162 + $0x1c] sm:%s154] %v165
                %v167 = vld [vmem:[%s161 + $0x68] sm:%s154]
                %168 = vst [vmem:[%s162 + $0x38] sm:%s154] %v167
                %v169 = vld [vmem:[%s161 + $0x9c] sm:%s154]
                %170 = vst [vmem:[%s162 + $0x54] sm:%s154] %v169
                %v171 = vld [vmem:[%s161 + $0xd0] sm:%s154]
                %172 = vst [vmem:[%s162 + $0x70] sm:%s154] %v171
                %v173 = vld [vmem:[%s161 + $0x104] sm:%s154]
                %174 = vst [vmem:[%s162 + $0x8c] sm:%s154] %v173
                %v175 = vld [vmem:[%s161 + $0x138] sm:%s154]
                %176 = vst [vmem:[%s162 + $0xa8] sm:%s154] %v175
                %v177 = vld [vmem:[%s161 + $0x16c] sm:%s154]
                %178 = vst [vmem:[%s162 + $0xc4] sm:%s154] %v177
              $region45: #{eenetwork_forward.4} parent=39 // loop_footer
                %s160 = sadd.s32 1, %s156
              $region46: #{eenetwork_forward.4} parent=39 // loop_footer_branch
                %155 = sbr.rel target = $region42
              $region47: #{eenetwork_forward.4} parent=39 // loop_exit
                _
            $region40: #{eenetwork_forward.4} parent=31 // pred_fallthru
              _
          $region32: #{eenetwork_forward.4} parent=27 // pred_fallthru
            _
          %599 = vnop
        $region28: #{eenetwork_forward.4} parent=23 // pred_fallthru
          _
      $region24: #{eenetwork_forward.4} parent=5 // pred_fallthru
        _
      %p600 = scmp.le.s32.totalorder 1, %s9
      %p601 = scmp.lt.s32.totalorder %s9, 3
      %p602 = pnand %p600, %p601
      %p603 = pneg %p602
      // Predicated region
      $region91: #{eenetwork_forward.4} parent=5 // pred_check
        _
      $region92: #{eenetwork_forward.4} parent=5 // pred_check_branch
        %605 = sbr.rel (%p602) target = $region94
      $region93: #{eenetwork_forward.4} parent=5 // pred_region
        %s606 = ssub.s32 %s9, 1
        %s607 = sand.u32 %s22, 1
        %s608 = sand.u32 %s22, 1
        %s609 = smul.addr %s608, 224
        %s610 = scalar_lea.vmem [#allocation2], %s609
        // Predicated region
        $region95: #{eenetwork_forward.4} parent=93 // pred_check
          %p611 = pneg %p35
        $region96: #{eenetwork_forward.4} parent=93 // pred_check_branch
          %613 = sbr.rel (%p611) target = $region98
        $region97: #{eenetwork_forward.4} parent=93 // pred_region
          _
        $region98: #{eenetwork_forward.4} parent=93 // pred_fallthru
          _
        %s614 = sand.u32 %s22, 1
        %s615 = sand.u32 %s22, 1
        %s616 = smul.addr %s615, 224
        %s617 = scalar_lea.vmem [#allocation2], %s616
        %p618 = pneg %p35
        %p619 = pneg %p32
        %p620 = pneg %p56
        %p621 = pneg %p53
        %p622 = pneg %p77
        %p623 = pneg %p74
        %p624 = pneg %p103
        %p625 = pneg %p100
        %s626 = sand.u32 %s90, 1
        %s627 = sand.u32 %s90, 1
        %s628 = smul.addr %s627, 56
        %s629 = scalar_lea.vmem [#allocation3], %s628
        %s630 = smul.u32 7, %s14
        %s631 = ssub.s32 13, %s630
        %p632 = scmp.lt.s32.totalorder %s631, 7
        %s633 = scalar_select %p632, %s631, 7
        %s634 = smul.u32 512, %s633
        %s635 = smul.u32 7, %s14
        %s636 = ssub.s32 13, %s635
        %p637 = scmp.lt.s32.totalorder %s636, 7
        %s638 = scalar_select %p637, %s636, 7
        %s639 = smul.u32 128, %s638
        %v641 = vld [vmem:[%s1] sm:$0xf]
        %v642 = vld [vmem:[%s1 + $0x4] sm:$0xf]
        %v643 = vld [vmem:[%s610] sm:$0xff]
        %v644 = vld [vmem:[%s610 + $0x8] sm:$0xff]
        %v645 = vld [vmem:[%s610 + $0x10] sm:$0xff]
        %v646 = vld [vmem:[%s610 + $0x18] sm:$0xf]
        %v647 = vld [vmem:[%s610 + $0x1c] sm:$0xff]
        %v648 = vld [vmem:[%s610 + $0x24] sm:$0xff]
        %v649 = vld [vmem:[%s610 + $0x2c] sm:$0xff]
        %v650 = vld [vmem:[%s610 + $0x34] sm:$0xf]
        %v651 = vld [vmem:[%s610 + $0x38] sm:$0xff]
        %v652 = vld [vmem:[%s610 + $0x40] sm:$0xff]
        %v653 = vld [vmem:[%s610 + $0x48] sm:$0xff]
        %v654 = vld [vmem:[%s610 + $0x50] sm:$0xf]
        %v655 = vld [vmem:[%s610 + $0x54] sm:$0xff]
        %v656 = vld [vmem:[%s610 + $0x5c] sm:$0xff]
        %v657 = vld [vmem:[%s610 + $0x64] sm:$0xff]
        %v658 = vld [vmem:[%s610 + $0x6c] sm:$0xf]
        %v659 = vld [vmem:[%s610 + $0x70] sm:$0xff]
        %v660 = vld [vmem:[%s610 + $0x78] sm:$0xff]
        %v661 = vld [vmem:[%s610 + $0x80] sm:$0xff]
        %v662 = vld [vmem:[%s610 + $0x88] sm:$0xf]
        %v663 = vld [vmem:[%s610 + $0x8c] sm:$0xff]
        %v664 = vld [vmem:[%s610 + $0x94] sm:$0xff]
        %v665 = vld [vmem:[%s610 + $0x9c] sm:$0xff]
        %v666 = vld [vmem:[%s610 + $0xa4] sm:$0xf]
        %v667 = vld [vmem:[%s610 + $0xa8] sm:$0xff]
        %v668 = vld [vmem:[%s610 + $0xb0] sm:$0xff]
        %v669 = vld [vmem:[%s610 + $0xb8] sm:$0xff]
        %v670 = vld [vmem:[%s610 + $0xc0] sm:$0xf]
        %v671 = vld [vmem:[%s610 + $0xc4] sm:$0xff]
        %v672 = vld [vmem:[%s610 + $0xcc] sm:$0xff]
        %v673 = vld [vmem:[%s610 + $0xd4] sm:$0xff]
        %v674 = vld [vmem:[%s610 + $0xdc] sm:$0xf]
        %v675 = vld [vmem:[%s2] sm:$0xff]
        %v676 = vld [vmem:[%s2 + $0x8] sm:$0xff]
        %678 = vset.pattern.permute.xlu0 0
        %679 = vperm.xlu0 %678, %v675
        %v680 = vpop.permute.xlu0 %679
        %683 = vset.pattern.permute.xlu0 0
        %684 = vperm.xlu0 %683, %v676
        %v685 = vpop.permute.xlu0 %684
        %v689 = vunpack.c.l.b16 %v641
        %v690 = vunpack.c.l.b16 %v642
        %v691 = vpack.c.b16 %v690, %v689
        %v724 = vunpack.c.l.b16 %v643
        %v725 = vunpack.c.h.b16 %v643
        %v726 = vunpack.c.l.b16 %v644
        %v727 = vunpack.c.h.b16 %v644
        %v728 = vunpack.c.l.b16 %v645
        %v729 = vunpack.c.h.b16 %v645
        %v730 = vunpack.c.l.b16 %v646
        %v731 = vunpack.c.l.b16 %v647
        %v732 = vunpack.c.h.b16 %v647
        %v733 = vunpack.c.l.b16 %v648
        %v734 = vunpack.c.h.b16 %v648
        %v735 = vunpack.c.l.b16 %v649
        %v736 = vunpack.c.h.b16 %v649
        %v737 = vunpack.c.l.b16 %v650
        %v738 = vunpack.c.l.b16 %v651
        %v739 = vunpack.c.h.b16 %v651
        %v740 = vunpack.c.l.b16 %v652
        %v741 = vunpack.c.h.b16 %v652
        %v742 = vunpack.c.l.b16 %v653
        %v743 = vunpack.c.h.b16 %v653
        %v744 = vunpack.c.l.b16 %v654
        %v745 = vunpack.c.l.b16 %v655
        %v746 = vunpack.c.h.b16 %v655
        %v747 = vunpack.c.l.b16 %v656
        %v748 = vunpack.c.h.b16 %v656
        %v749 = vunpack.c.l.b16 %v657
        %v750 = vunpack.c.h.b16 %v657
        %v751 = vunpack.c.l.b16 %v658
        %v752 = vunpack.c.l.b16 %v659
        %v753 = vunpack.c.h.b16 %v659
        %v754 = vunpack.c.l.b16 %v660
        %v755 = vunpack.c.h.b16 %v660
        %v756 = vunpack.c.l.b16 %v661
        %v757 = vunpack.c.h.b16 %v661
        %v758 = vunpack.c.l.b16 %v662
        %v759 = vunpack.c.l.b16 %v663
        %v760 = vunpack.c.h.b16 %v663
        %v761 = vunpack.c.l.b16 %v664
        %v762 = vunpack.c.h.b16 %v664
        %v763 = vunpack.c.l.b16 %v665
        %v764 = vunpack.c.h.b16 %v665
        %v765 = vunpack.c.l.b16 %v666
        %v766 = vunpack.c.l.b16 %v667
        %v767 = vunpack.c.h.b16 %v667
        %v768 = vunpack.c.l.b16 %v668
        %v769 = vunpack.c.h.b16 %v668
        %v770 = vunpack.c.l.b16 %v669
        %v771 = vunpack.c.h.b16 %v669
        %v772 = vunpack.c.l.b16 %v670
        %v773 = vunpack.c.l.b16 %v671
        %v774 = vunpack.c.h.b16 %v671
        %v775 = vunpack.c.l.b16 %v672
        %v776 = vunpack.c.h.b16 %v672
        %v777 = vunpack.c.l.b16 %v673
        %v778 = vunpack.c.h.b16 %v673
        %v779 = vunpack.c.l.b16 %v674
        %v780 = vpack.c.b16 %v731, %v724
        %v781 = vpack.c.b16 %v732, %v725
        %v782 = vpack.c.b16 %v733, %v726
        %v783 = vpack.c.b16 %v734, %v727
        %v784 = vpack.c.b16 %v735, %v728
        %v785 = vpack.c.b16 %v736, %v729
        %v786 = vpack.c.b16 %v737, %v730
        %v787 = vpack.c.b16 %v745, %v738
        %v788 = vpack.c.b16 %v746, %v739
        %v789 = vpack.c.b16 %v747, %v740
        %v790 = vpack.c.b16 %v748, %v741
        %v791 = vpack.c.b16 %v749, %v742
        %v792 = vpack.c.b16 %v750, %v743
        %v793 = vpack.c.b16 %v751, %v744
        %v794 = vpack.c.b16 %v759, %v752
        %v795 = vpack.c.b16 %v760, %v753
        %v796 = vpack.c.b16 %v761, %v754
        %v797 = vpack.c.b16 %v762, %v755
        %v798 = vpack.c.b16 %v763, %v756
        %v799 = vpack.c.b16 %v764, %v757
        %v800 = vpack.c.b16 %v765, %v758
        %v801 = vpack.c.b16 %v773, %v766
        %v802 = vpack.c.b16 %v774, %v767
        %v803 = vpack.c.b16 %v775, %v768
        %v804 = vpack.c.b16 %v776, %v769
        %v805 = vpack.c.b16 %v777, %v770
        %v806 = vpack.c.b16 %v778, %v771
        %v807 = vpack.c.b16 %v779, %v772
        %vm836 = vcmask 523264
        %v838 = vsel %vm836, %v691, 0
        %840 = vmatprep.subr.bf16.mxu0 %v781
        %841 = vmatpush1.bf16.msra.mxu0 %v780
        %842 = vmatprep.subr.bf16.mxu0 %v788
        %843 = vmatpush1.bf16.msra.mxu0 %v787
        %844 = vmatprep.subr.bf16.mxu0 %v795
        %845 = vmatpush1.bf16.msra.mxu0 %v794
        %846 = vmatprep.subr.bf16.mxu0 %v802
        %847 = vmatpush1.bf16.msra.mxu0 %v801
        %848 = vmatprep.subr.bf16.mxu0 0
        %849 = vmatpush1.bf16.msra.mxu0 0
        %850 = vmatprep.subr.bf16.mxu0 0
        %851 = vmatpush1.bf16.msra.mxu0 0
        %852 = vmatprep.subr.bf16.mxu0 0
        %853 = vmatpush1.bf16.msra.mxu0 0
        %854 = vmatprep.subr.bf16.mxu0 0
        %855 = vmatpush1.bf16.msra.mxu0 0
        %856 = vmatprep.subr.bf16.mxu0 0
        %857 = vmatpush1.bf16.msra.mxu0 0
        %858 = vmatprep.subr.bf16.mxu0 0
        %859 = vmatpush1.bf16.msra.mxu0 0
        %860 = vmatprep.subr.bf16.mxu0 0
        %861 = vmatpush1.bf16.msra.mxu0 0
        %862 = vmatprep.subr.bf16.mxu0 0
        %863 = vmatpush1.bf16.msra.mxu0 0
        %864 = vmatprep.subr.bf16.mxu0 0
        %865 = vmatpush1.bf16.msra.mxu0 0
        %866 = vmatprep.subr.bf16.mxu0 0
        %867 = vmatpush1.bf16.msra.mxu0 0
        %868 = vmatprep.subr.bf16.mxu0 0
        %869 = vmatpush1.bf16.msra.mxu0 0
        %870 = vmatprep.subr.bf16.mxu0 0
        %871 = vmatpush1.bf16.msra.mxu0 0
        %872 = vmatprep.mubr.bf16.mxu0 0
        %873 = vmatmul.mubr.bf16.gmra.mrb[0].mxu0 %v838
        %v874 = vpop.f32.mrb[0].mxu0
        %v875 = vadd.f32 %v680, %v874
        %v876 = vpop.f32.mrb[0].mxu0
        %v877 = vadd.f32 %v680, %v876
        %v878 = vpop.f32.mrb[0].mxu0
        %v879 = vadd.f32 %v685, %v878
        %v880 = vpop.f32.mrb[0].mxu0
        %v881 = vadd.f32 %v685, %v880
        %882 = vdwg.mxu0
        %883 = vmatprep.subr.bf16.mxu0 %v783
        %884 = vmatpush1.bf16.msra.mxu0 %v782
        %885 = vmatprep.subr.bf16.mxu0 %v790
        %886 = vmatpush1.bf16.msra.mxu0 %v789
        %887 = vmatprep.subr.bf16.mxu0 %v797
        %888 = vmatpush1.bf16.msra.mxu0 %v796
        %889 = vmatprep.subr.bf16.mxu0 %v804
        %890 = vmatpush1.bf16.msra.mxu0 %v803
        %891 = vmatprep.subr.bf16.mxu0 0
        %892 = vmatpush1.bf16.msra.mxu0 0
        %893 = vmatprep.subr.bf16.mxu0 0
        %894 = vmatpush1.bf16.msra.mxu0 0
        %895 = vmatprep.subr.bf16.mxu0 0
        %896 = vmatpush1.bf16.msra.mxu0 0
        %897 = vmatprep.subr.bf16.mxu0 0
        %898 = vmatpush1.bf16.msra.mxu0 0
        %899 = vmatprep.subr.bf16.mxu0 0
        %900 = vmatpush1.bf16.msra.mxu0 0
        %901 = vmatprep.subr.bf16.mxu0 0
        %902 = vmatpush1.bf16.msra.mxu0 0
        %903 = vmatprep.subr.bf16.mxu0 0
        %904 = vmatpush1.bf16.msra.mxu0 0
        %905 = vmatprep.subr.bf16.mxu0 0
        %906 = vmatpush1.bf16.msra.mxu0 0
        %907 = vmatprep.subr.bf16.mxu0 0
        %908 = vmatpush1.bf16.msra.mxu0 0
        %909 = vmatprep.subr.bf16.mxu0 0
        %910 = vmatpush1.bf16.msra.mxu0 0
        %911 = vmatprep.subr.bf16.mxu0 0
        %912 = vmatpush1.bf16.msra.mxu0 0
        %913 = vmatprep.subr.bf16.mxu0 0
        %914 = vmatpush1.bf16.msra.mxu0 0
        %915 = vmatprep.mubr.bf16.mxu0 0
        %916 = vmatmul.mubr.bf16.gmra.mrb[0].mxu0 %v838
        %v917 = vpop.f32.mrb[0].mxu0
        %v918 = vadd.f32 %v680, %v917
        %v919 = vpop.f32.mrb[0].mxu0
        %v920 = vadd.f32 %v680, %v919
        %v921 = vpop.f32.mrb[0].mxu0
        %v922 = vadd.f32 %v685, %v921
        %v923 = vpop.f32.mrb[0].mxu0
        %v924 = vadd.f32 %v685, %v923
        %925 = vdwg.mxu0
        %926 = vmatprep.subr.bf16.mxu0 %v785
        %927 = vmatpush1.bf16.msra.mxu0 %v784
        %928 = vmatprep.subr.bf16.mxu0 %v792
        %929 = vmatpush1.bf16.msra.mxu0 %v791
        %930 = vmatprep.subr.bf16.mxu0 %v799
        %931 = vmatpush1.bf16.msra.mxu0 %v798
        %932 = vmatprep.subr.bf16.mxu0 %v806
        %933 = vmatpush1.bf16.msra.mxu0 %v805
        %934 = vmatprep.subr.bf16.mxu0 0
        %935 = vmatpush1.bf16.msra.mxu0 0
        %936 = vmatprep.subr.bf16.mxu0 0
        %937 = vmatpush1.bf16.msra.mxu0 0
        %938 = vmatprep.subr.bf16.mxu0 0
        %939 = vmatpush1.bf16.msra.mxu0 0
        %940 = vmatprep.subr.bf16.mxu0 0
        %941 = vmatpush1.bf16.msra.mxu0 0
        %942 = vmatprep.subr.bf16.mxu0 0
        %943 = vmatpush1.bf16.msra.mxu0 0
        %944 = vmatprep.subr.bf16.mxu0 0
        %945 = vmatpush1.bf16.msra.mxu0 0
        %946 = vmatprep.subr.bf16.mxu0 0
        %947 = vmatpush1.bf16.msra.mxu0 0
        %948 = vmatprep.subr.bf16.mxu0 0
        %949 = vmatpush1.bf16.msra.mxu0 0
        %950 = vmatprep.subr.bf16.mxu0 0
        %951 = vmatpush1.bf16.msra.mxu0 0
        %952 = vmatprep.subr.bf16.mxu0 0
        %953 = vmatpush1.bf16.msra.mxu0 0
        %954 = vmatprep.subr.bf16.mxu0 0
        %955 = vmatpush1.bf16.msra.mxu0 0
        %956 = vmatprep.subr.bf16.mxu0 0
        %957 = vmatpush1.bf16.msra.mxu0 0
        %958 = vmatprep.mubr.bf16.mxu0 0
        %959 = vmatmul.mubr.bf16.gmra.mrb[0].mxu0 %v838
        %v960 = vpop.f32.mrb[0].mxu0
        %v961 = vadd.f32 %v680, %v960
        %v962 = vpop.f32.mrb[0].mxu0
        %v963 = vadd.f32 %v680, %v962
        %v964 = vpop.f32.mrb[0].mxu0
        %v965 = vadd.f32 %v685, %v964
        %v966 = vpop.f32.mrb[0].mxu0
        %v967 = vadd.f32 %v685, %v966
        %968 = vdwg.mxu0
        %969 = vmatprep.subr.bf16.mxu0 0
        %970 = vmatpush1.bf16.msra.mxu0 %v786
        %971 = vmatprep.subr.bf16.mxu0 0
        %972 = vmatpush1.bf16.msra.mxu0 %v793
        %973 = vmatprep.subr.bf16.mxu0 0
        %974 = vmatpush1.bf16.msra.mxu0 %v800
        %975 = vmatprep.subr.bf16.mxu0 0
        %976 = vmatpush1.bf16.msra.mxu0 %v807
        %977 = vmatprep.subr.bf16.mxu0 0
        %978 = vmatpush1.bf16.msra.mxu0 0
        %979 = vmatprep.subr.bf16.mxu0 0
        %980 = vmatpush1.bf16.msra.mxu0 0
        %981 = vmatprep.subr.bf16.mxu0 0
        %982 = vmatpush1.bf16.msra.mxu0 0
        %983 = vmatprep.subr.bf16.mxu0 0
        %984 = vmatpush1.bf16.msra.mxu0 0
        %985 = vmatprep.subr.bf16.mxu0 0
        %986 = vmatpush1.bf16.msra.mxu0 0
        %987 = vmatprep.subr.bf16.mxu0 0
        %988 = vmatpush1.bf16.msra.mxu0 0
        %989 = vmatprep.subr.bf16.mxu0 0
        %990 = vmatpush1.bf16.msra.mxu0 0
        %991 = vmatprep.subr.bf16.mxu0 0
        %992 = vmatpush1.bf16.msra.mxu0 0
        %993 = vmatprep.subr.bf16.mxu0 0
        %994 = vmatpush1.bf16.msra.mxu0 0
        %995 = vmatprep.subr.bf16.mxu0 0
        %996 = vmatpush1.bf16.msra.mxu0 0
        %997 = vmatprep.subr.bf16.mxu0 0
        %998 = vmatpush1.bf16.msra.mxu0 0
        %999 = vmatprep.subr.bf16.mxu0 0
        %1000 = vmatpush1.bf16.msra.mxu0 0
        %1001 = vmatprep.mubr.bf16.mxu0 0
        %1002 = vmatmul.mubr.bf16.gmra.mrb[0].mxu0 %v838
        %v1003 = vpop.f32.mrb[0].mxu0
        %v1004 = vadd.f32 %v680, %v1003
        %v1005 = vpop.f32.mrb[0].mxu0
        %v1006 = vpop.f32.mrb[0].mxu0
        %v1007 = vadd.f32 %v685, %v1006
        %v1008 = vpop.f32.mrb[0].mxu0
        %1009 = vdwg.mxu0
        %v1010 = vmax.f32 %v875, 0.0
        %v1011 = vmax.f32 %v877, 0.0
        %v1012 = vmax.f32 %v918, 0.0
        %v1013 = vmax.f32 %v920, 0.0
        %v1014 = vmax.f32 %v961, 0.0
        %v1015 = vmax.f32 %v963, 0.0
        %v1016 = vmax.f32 %v1004, 0.0
        %v1017 = vmax.f32 %v879, 0.0
        %v1018 = vmax.f32 %v881, 0.0
        %v1019 = vmax.f32 %v922, 0.0
        %v1020 = vmax.f32 %v924, 0.0
        %v1021 = vmax.f32 %v965, 0.0
        %v1022 = vmax.f32 %v967, 0.0
        %v1023 = vmax.f32 %v1007, 0.0
        %v1024 = vpack.c.bf16 %v1017, %v1010
        %v1025 = vpack.c.bf16 %v1018, %v1011
        %v1026 = vpack.c.bf16 %v1019, %v1012
        %v1027 = vpack.c.bf16 %v1020, %v1013
        %v1028 = vpack.c.bf16 %v1021, %v1014
        %v1029 = vpack.c.bf16 %v1022, %v1015
        %v1030 = vpack.c.bf16 %v1023, %v1016
        %v1038 = vunpack.c.l.b16 %v1024
        %v1039 = vunpack.c.l.b16 %v1025
        %v1040 = vunpack.c.l.b16 %v1026
        %v1041 = vunpack.c.l.b16 %v1027
        %v1042 = vunpack.c.l.b16 %v1028
        %v1043 = vunpack.c.l.b16 %v1029
        %v1044 = vunpack.c.l.b16 %v1030
        %v1045 = vunpack.c.h.b16 %v1024
        %v1046 = vunpack.c.h.b16 %v1025
        %v1047 = vunpack.c.h.b16 %v1026
        %v1048 = vunpack.c.h.b16 %v1027
        %v1049 = vunpack.c.h.b16 %v1028
        %v1050 = vunpack.c.h.b16 %v1029
        %v1051 = vunpack.c.h.b16 %v1030
        %v1052 = vpack.c.b16 %v1039, %v1038
        %v1053 = vpack.c.b16 %v1041, %v1040
        %v1054 = vpack.c.b16 %v1043, %v1042
        %v1055 = vpack.c.b16 %v1044, %v1044
        %v1056 = vpack.c.b16 %v1046, %v1045
        %v1057 = vpack.c.b16 %v1048, %v1047
        %v1058 = vpack.c.b16 %v1050, %v1049
        %v1059 = vpack.c.b16 %v1051, %v1051
        %1068 = vst [vmem:[%s629] sm:$0xff] %v1052
        %1069 = vst [vmem:[%s629 + $0x8] sm:$0xff] %v1053
        %1070 = vst [vmem:[%s629 + $0x10] sm:$0xff] %v1054
        %1071 = vst [vmem:[%s629 + $0x18] sm:$0xf] %v1055
        %1072 = vst [vmem:[%s629 + $0x1c] sm:$0xff] %v1056
        %1073 = vst [vmem:[%s629 + $0x24] sm:$0xff] %v1057
        %1074 = vst [vmem:[%s629 + $0x2c] sm:$0xff] %v1058
        %1075 = vst [vmem:[%s629 + $0x34] sm:$0xf] %v1059
        %s1076 = sand.u32 %s90, 1
        %s1077 = sand.u32 %s90, 1
        %s1078 = smul.addr %s1077, 56
        %s1079 = scalar_lea.vmem [#allocation3], %s1078
        // Predicated region
        $region99: #{eenetwork_forward.4} parent=93 // pred_check
          %p1080 = pneg %p100
        $region100: #{eenetwork_forward.4} parent=93 // pred_check_branch
          %1082 = sbr.rel (%p1080) target = $region102
        $region101: #{eenetwork_forward.4} parent=93 // pred_region
          %s1083 = smul.u32 7, %s14
          %s1084 = ssub.s32 13, %s1083
          %p1085 = scmp.lt.s32.totalorder %s1084, 7
          %s1086 = scalar_select %p1085, %s1084, 7
          %s1087 = smul.u32 128, %s1086
          %p1088 = scmp.ne.s32.totalorder 0, %s1087
          %s1089 = smul.addr %s1083, 4
          %s1090 = scalar_lea.vmem %s3, %s1089
          %s1091 = smul.u32 %s1086, 4
          // Predicated region
          $region103: #{eenetwork_forward.4} parent=101 // pred_check
            %p1092 = pneg %p1088
          $region104: #{eenetwork_forward.4} parent=101 // pred_check_branch
            %1094 = sbr.rel (%p1092) target = $region106
          $region105: #{eenetwork_forward.4} parent=101 // pred_region
            %p1095 = scmp.lt.u32.totalorder %s1091, 8
            %p1096 = pneg %p1095
            // Predicated region
            $region107: #{eenetwork_forward.4} parent=105 // pred_check
              _
            $region108: #{eenetwork_forward.4} parent=105 // pred_check_branch
              %1098 = sbr.rel (%p1095) target = $region110
            $region109: #{eenetwork_forward.4} parent=105 // pred_region
              %s1115 = sand.u32 %s1091, 7
              %p1116 = scmp.eq.s32.totalorder %s1115, 0
              // Predicated region
              $region122: #{eenetwork_forward.4} parent=109 // pred_check
                %p1117 = pneg %p1116
              $region123: #{eenetwork_forward.4} parent=109 // pred_check_branch
                %1119 = sbr.rel (%p1117) target = $region125
              $region124: #{eenetwork_forward.4} parent=109 // pred_region
                %s1120 = sshrl.u32 %s1091, 3
                %s1121 = sshrl.u32 %s1120, 5
                // While loop
                $region126: #{eenetwork_forward.4} parent=124 // loop_pre_header
                  _
                $region127: #{eenetwork_forward.4} parent=124 // loop_header
                  %s1125 = sphi 0, %s1127
                  %p1126 = scmp.ge.s32.totalorder %s1125, %s1121
                  %s1130 = sphi 0, %s1263
                  %s1131 = sphi %s1079, %s1266
                  %s1132 = sphi %s1090, %s1267
                $region128: #{eenetwork_forward.4} parent=124 // loop_header_branch
                  %1129 = sbr.rel (%p1126) target = $region132
                $region129: #{eenetwork_forward.4} parent=124 // loop_body
                  %v1133 = vld [vmem:[%s1131] sm:$0xff]
                  %1134 = vst [vmem:[%s1132] sm:$0xff] %v1133
                  %v1135 = vld [vmem:[%s1131 + $0x8] sm:$0xff]
                  %1136 = vst [vmem:[%s1132 + $0x8] sm:$0xff] %v1135
                  %v1137 = vld [vmem:[%s1131 + $0x10] sm:$0xff]
                  %1138 = vst [vmem:[%s1132 + $0x10] sm:$0xff] %v1137
                  %v1139 = vld [vmem:[%s1131 + $0x18] sm:$0xff]
                  %1140 = vst [vmem:[%s1132 + $0x18] sm:$0xff] %v1139
                  %v1141 = vld [vmem:[%s1131 + $0x20] sm:$0xff]
                  %1142 = vst [vmem:[%s1132 + $0x20] sm:$0xff] %v1141
                  %v1143 = vld [vmem:[%s1131 + $0x28] sm:$0xff]
                  %1144 = vst [vmem:[%s1132 + $0x28] sm:$0xff] %v1143
                  %v1145 = vld [vmem:[%s1131 + $0x30] sm:$0xff]
                  %1146 = vst [vmem:[%s1132 + $0x30] sm:$0xff] %v1145
                  %v1147 = vld [vmem:[%s1131 + $0x38] sm:$0xff]
                  %1148 = vst [vmem:[%s1132 + $0x38] sm:$0xff] %v1147
                  %v1149 = vld [vmem:[%s1131 + $0x40] sm:$0xff]
                  %1150 = vst [vmem:[%s1132 + $0x40] sm:$0xff] %v1149
                  %v1151 = vld [vmem:[%s1131 + $0x48] sm:$0xff]
                  %1152 = vst [vmem:[%s1132 + $0x48] sm:$0xff] %v1151
                  %v1153 = vld [vmem:[%s1131 + $0x50] sm:$0xff]
                  %1154 = vst [vmem:[%s1132 + $0x50] sm:$0xff] %v1153
                  %v1155 = vld [vmem:[%s1131 + $0x58] sm:$0xff]
                  %1156 = vst [vmem:[%s1132 + $0x58] sm:$0xff] %v1155
                  %v1157 = vld [vmem:[%s1131 + $0x60] sm:$0xff]
                  %1158 = vst [vmem:[%s1132 + $0x60] sm:$0xff] %v1157
                  %v1159 = vld [vmem:[%s1131 + $0x68] sm:$0xff]
                  %1160 = vst [vmem:[%s1132 + $0x68] sm:$0xff] %v1159
                  %v1161 = vld [vmem:[%s1131 + $0x70] sm:$0xff]
                  %1162 = vst [vmem:[%s1132 + $0x70] sm:$0xff] %v1161
                  %v1163 = vld [vmem:[%s1131 + $0x78] sm:$0xff]
                  %1164 = vst [vmem:[%s1132 + $0x78] sm:$0xff] %v1163
                  %v1165 = vld [vmem:[%s1131 + $0x80] sm:$0xff]
                  %1166 = vst [vmem:[%s1132 + $0x80] sm:$0xff] %v1165
                  %v1167 = vld [vmem:[%s1131 + $0x88] sm:$0xff]
                  %1168 = vst [vmem:[%s1132 + $0x88] sm:$0xff] %v1167
                  %v1169 = vld [vmem:[%s1131 + $0x90] sm:$0xff]
                  %1170 = vst [vmem:[%s1132 + $0x90] sm:$0xff] %v1169
                  %v1171 = vld [vmem:[%s1131 + $0x98] sm:$0xff]
                  %1172 = vst [vmem:[%s1132 + $0x98] sm:$0xff] %v1171
                  %v1173 = vld [vmem:[%s1131 + $0xa0] sm:$0xff]
                  %1174 = vst [vmem:[%s1132 + $0xa0] sm:$0xff] %v1173
                  %v1175 = vld [vmem:[%s1131 + $0xa8] sm:$0xff]
                  %1176 = vst [vmem:[%s1132 + $0xa8] sm:$0xff] %v1175
                  %v1177 = vld [vmem:[%s1131 + $0xb0] sm:$0xff]
                  %1178 = vst [vmem:[%s1132 + $0xb0] sm:$0xff] %v1177
                  %v1179 = vld [vmem:[%s1131 + $0xb8] sm:$0xff]
                  %1180 = vst [vmem:[%s1132 + $0xb8] sm:$0xff] %v1179
                  %v1181 = vld [vmem:[%s1131 + $0xc0] sm:$0xff]
                  %1182 = vst [vmem:[%s1132 + $0xc0] sm:$0xff] %v1181
                  %v1183 = vld [vmem:[%s1131 + $0xc8] sm:$0xff]
                  %1184 = vst [vmem:[%s1132 + $0xc8] sm:$0xff] %v1183
                  %v1185 = vld [vmem:[%s1131 + $0xd0] sm:$0xff]
                  %1186 = vst [vmem:[%s1132 + $0xd0] sm:$0xff] %v1185
                  %v1187 = vld [vmem:[%s1131 + $0xd8] sm:$0xff]
                  %1188 = vst [vmem:[%s1132 + $0xd8] sm:$0xff] %v1187
                  %v1189 = vld [vmem:[%s1131 + $0xe0] sm:$0xff]
                  %1190 = vst [vmem:[%s1132 + $0xe0] sm:$0xff] %v1189
                  %v1191 = vld [vmem:[%s1131 + $0xe8] sm:$0xff]
                  %1192 = vst [vmem:[%s1132 + $0xe8] sm:$0xff] %v1191
                  %v1193 = vld [vmem:[%s1131 + $0xf0] sm:$0xff]
                  %1194 = vst [vmem:[%s1132 + $0xf0] sm:$0xff] %v1193
                  %v1195 = vld [vmem:[%s1131 + $0xf8] sm:$0xff]
                  %1196 = vst [vmem:[%s1132 + $0xf8] sm:$0xff] %v1195
                  %v1197 = vld [vmem:[%s1131 + $0x1c] sm:$0xff]
                  %1198 = vst [vmem:[%s1132 + $0x34] sm:$0xff] %v1197
                  %v1199 = vld [vmem:[%s1131 + $0x24] sm:$0xff]
                  %1200 = vst [vmem:[%s1132 + $0x3c] sm:$0xff] %v1199
                  %v1201 = vld [vmem:[%s1131 + $0x2c] sm:$0xff]
                  %1202 = vst [vmem:[%s1132 + $0x44] sm:$0xff] %v1201
                  %v1203 = vld [vmem:[%s1131 + $0x34] sm:$0xff]
                  %1204 = vst [vmem:[%s1132 + $0x4c] sm:$0xff] %v1203
                  %v1205 = vld [vmem:[%s1131 + $0x3c] sm:$0xff]
                  %1206 = vst [vmem:[%s1132 + $0x54] sm:$0xff] %v1205
                  %v1207 = vld [vmem:[%s1131 + $0x44] sm:$0xff]
                  %1208 = vst [vmem:[%s1132 + $0x5c] sm:$0xff] %v1207
                  %v1209 = vld [vmem:[%s1131 + $0x4c] sm:$0xff]
                  %1210 = vst [vmem:[%s1132 + $0x64] sm:$0xff] %v1209
                  %v1211 = vld [vmem:[%s1131 + $0x54] sm:$0xff]
                  %1212 = vst [vmem:[%s1132 + $0x6c] sm:$0xff] %v1211
                  %v1213 = vld [vmem:[%s1131 + $0x5c] sm:$0xff]
                  %1214 = vst [vmem:[%s1132 + $0x74] sm:$0xff] %v1213
                  %v1215 = vld [vmem:[%s1131 + $0x64] sm:$0xff]
                  %1216 = vst [vmem:[%s1132 + $0x7c] sm:$0xff] %v1215
                  %v1217 = vld [vmem:[%s1131 + $0x6c] sm:$0xff]
                  %1218 = vst [vmem:[%s1132 + $0x84] sm:$0xff] %v1217
                  %v1219 = vld [vmem:[%s1131 + $0x74] sm:$0xff]
                  %1220 = vst [vmem:[%s1132 + $0x8c] sm:$0xff] %v1219
                  %v1221 = vld [vmem:[%s1131 + $0x7c] sm:$0xff]
                  %1222 = vst [vmem:[%s1132 + $0x94] sm:$0xff] %v1221
                  %v1223 = vld [vmem:[%s1131 + $0x84] sm:$0xff]
                  %1224 = vst [vmem:[%s1132 + $0x9c] sm:$0xff] %v1223
                  %v1225 = vld [vmem:[%s1131 + $0x8c] sm:$0xff]
                  %1226 = vst [vmem:[%s1132 + $0xa4] sm:$0xff] %v1225
                  %v1227 = vld [vmem:[%s1131 + $0x94] sm:$0xff]
                  %1228 = vst [vmem:[%s1132 + $0xac] sm:$0xff] %v1227
                  %v1229 = vld [vmem:[%s1131 + $0x9c] sm:$0xff]
                  %1230 = vst [vmem:[%s1132 + $0xb4] sm:$0xff] %v1229
                  %v1231 = vld [vmem:[%s1131 + $0xa4] sm:$0xff]
                  %1232 = vst [vmem:[%s1132 + $0xbc] sm:$0xff] %v1231
                  %v1233 = vld [vmem:[%s1131 + $0xac] sm:$0xff]
                  %1234 = vst [vmem:[%s1132 + $0xc4] sm:$0xff] %v1233
                  %v1235 = vld [vmem:[%s1131 + $0xb4] sm:$0xff]
                  %1236 = vst [vmem:[%s1132 + $0xcc] sm:$0xff] %v1235
                  %v1237 = vld [vmem:[%s1131 + $0xbc] sm:$0xff]
                  %1238 = vst [vmem:[%s1132 + $0xd4] sm:$0xff] %v1237
                  %v1239 = vld [vmem:[%s1131 + $0xc4] sm:$0xff]
                  %1240 = vst [vmem:[%s1132 + $0xdc] sm:$0xff] %v1239
                  %v1241 = vld [vmem:[%s1131 + $0xcc] sm:$0xff]
                  %1242 = vst [vmem:[%s1132 + $0xe4] sm:$0xff] %v1241
                  %v1243 = vld [vmem:[%s1131 + $0xd4] sm:$0xff]
                  %1244 = vst [vmem:[%s1132 + $0xec] sm:$0xff] %v1243
                  %v1245 = vld [vmem:[%s1131 + $0xdc] sm:$0xff]
                  %1246 = vst [vmem:[%s1132 + $0xf4] sm:$0xff] %v1245
                  %v1247 = vld [vmem:[%s1131 + $0xe4] sm:$0xff]
                  %1248 = vst [vmem:[%s1132 + $0xfc] sm:$0xff] %v1247
                  %v1249 = vld [vmem:[%s1131 + $0xec] sm:$0xff]
                  %1250 = vst [vmem:[%s1132 + $0x104] sm:$0xff] %v1249
                  %v1251 = vld [vmem:[%s1131 + $0xf4] sm:$0xff]
                  %1252 = vst [vmem:[%s1132 + $0x10c] sm:$0xff] %v1251
                  %v1253 = vld [vmem:[%s1131 + $0xfc] sm:$0xff]
                  %1254 = vst [vmem:[%s1132 + $0x114] sm:$0xff] %v1253
                  %v1255 = vld [vmem:[%s1131 + $0x104] sm:$0xff]
                  %1256 = vst [vmem:[%s1132 + $0x11c] sm:$0xff] %v1255
                  %v1257 = vld [vmem:[%s1131 + $0x10c] sm:$0xff]
                  %1258 = vst [vmem:[%s1132 + $0x124] sm:$0xff] %v1257
                  %v1259 = vld [vmem:[%s1131 + $0x114] sm:$0xff]
                  %1260 = vst [vmem:[%s1132 + $0x12c] sm:$0xff] %v1259
                  %s1261 = sadd.s32 1, %s1130
                  %p1262 = scmp.ge.s32.totalorder %s1261, %s1121
                  %s1263 = scalar_select %p1262, 0, %s1261
                  %s1264 = smul.u32 %s1263, 256
                  %s1265 = smul.u32 %s1263, 256
                  %s1266 = scalar_lea.vmem %s1079, %s1264 [#allocation3]
                  %s1267 = scalar_lea.vmem %s1090, %s1265
                $region130: #{eenetwork_forward.4} parent=124 // loop_footer
                  %s1127 = sadd.s32 %s1125, 1
                $region131: #{eenetwork_forward.4} parent=124 // loop_footer_branch
                  %1124 = sbr.rel target = $region127
                $region132: #{eenetwork_forward.4} parent=124 // loop_exit
                  _
                %s1268 = sshrl.u32 %s1120, 5
                %s1269 = sand.u32 %s1120, 31
                %s1270 = smul.u32 %s1268, 32
                %s1271 = smul.u32 128, %s1270
                %s1272 = sshra.s32 %s1271, 4
                %s1273 = scalar_lea.vmem %s1079, %s1272 [#allocation3]
                %s1274 = smul.u32 128, %s1270
                %s1275 = sshra.s32 %s1274, 4
                %s1276 = scalar_lea.vmem %s1090, %s1275
                // While loop
                $region133: #{eenetwork_forward.4} parent=124 // loop_pre_header
                  _
                $region134: #{eenetwork_forward.4} parent=124 // loop_header
                  %s1280 = sphi 0, %s1282
                  %p1281 = scmp.ge.s32.totalorder %s1280, %s1269
                  %s1285 = sphi 0, %s1294
                  %s1286 = sphi %s1273, %s1297
                  %s1287 = sphi %s1276, %s1298
                $region135: #{eenetwork_forward.4} parent=124 // loop_header_branch
                  %1284 = sbr.rel (%p1281) target = $region139
                $region136: #{eenetwork_forward.4} parent=124 // loop_body
                  %v1288 = vld [vmem:[%s1286] sm:$0xff]
                  %1289 = vst [vmem:[%s1287] sm:$0xff] %v1288
                  %v1290 = vld [vmem:[%s1286 + $0x1c] sm:$0xff]
                  %1291 = vst [vmem:[%s1287 + $0x34] sm:$0xff] %v1290
                  %s1292 = sadd.s32 1, %s1285
                  %p1293 = scmp.ge.s32.totalorder %s1292, %s1269
                  %s1294 = scalar_select %p1293, 0, %s1292
                  %s1295 = smul.u32 %s1294, 8
                  %s1296 = smul.u32 %s1294, 8
                  %s1297 = scalar_lea.vmem %s1273, %s1295 [#allocation3]
                  %s1298 = scalar_lea.vmem %s1276, %s1296
                $region137: #{eenetwork_forward.4} parent=124 // loop_footer
                  %s1282 = sadd.s32 %s1280, 1
                $region138: #{eenetwork_forward.4} parent=124 // loop_footer_branch
                  %1279 = sbr.rel target = $region134
                $region139: #{eenetwork_forward.4} parent=124 // loop_exit
                  _
              $region125: #{eenetwork_forward.4} parent=109 // pred_fallthru
                _
              %p1299 = pneg %p1116
              // Predicated region
              $region140: #{eenetwork_forward.4} parent=109 // pred_check
                _
              $region141: #{eenetwork_forward.4} parent=109 // pred_check_branch
                %1301 = sbr.rel (%p1116) target = $region143
              $region142: #{eenetwork_forward.4} parent=109 // pred_region
                %s1302 = sand.u32 %s1091, 7
                %s1303 = ssub.s32 %s1091, %s1302
                %s1304 = scalar_lea.vmem %s1079, %s1303 [#allocation3]
                %s1305 = ssub.s32 %s1091, %s1302
                %s1306 = scalar_lea.vmem %s1090, %s1305
                %s1307 = sshrl.u32 %s1091, 3
                %s1308 = sshrl.u32 %s1307, 5
                // While loop
                $region144: #{eenetwork_forward.4} parent=142 // loop_pre_header
                  _
                $region145: #{eenetwork_forward.4} parent=142 // loop_header
                  %s1312 = sphi 0, %s1314
                  %p1313 = scmp.ge.s32.totalorder %s1312, %s1308
                  %s1317 = sphi 0, %s1450
                  %s1318 = sphi %s1079, %s1453
                  %s1319 = sphi %s1090, %s1454
                $region146: #{eenetwork_forward.4} parent=142 // loop_header_branch
                  %1316 = sbr.rel (%p1313) target = $region150
                $region147: #{eenetwork_forward.4} parent=142 // loop_body
                  %v1320 = vld [vmem:[%s1318] sm:$0xff]
                  %1321 = vst [vmem:[%s1319] sm:$0xff] %v1320
                  %v1322 = vld [vmem:[%s1318 + $0x8] sm:$0xff]
                  %1323 = vst [vmem:[%s1319 + $0x8] sm:$0xff] %v1322
                  %v1324 = vld [vmem:[%s1318 + $0x10] sm:$0xff]
                  %1325 = vst [vmem:[%s1319 + $0x10] sm:$0xff] %v1324
                  %v1326 = vld [vmem:[%s1318 + $0x18] sm:$0xff]
                  %1327 = vst [vmem:[%s1319 + $0x18] sm:$0xff] %v1326
                  %v1328 = vld [vmem:[%s1318 + $0x20] sm:$0xff]
                  %1329 = vst [vmem:[%s1319 + $0x20] sm:$0xff] %v1328
                  %v1330 = vld [vmem:[%s1318 + $0x28] sm:$0xff]
                  %1331 = vst [vmem:[%s1319 + $0x28] sm:$0xff] %v1330
                  %v1332 = vld [vmem:[%s1318 + $0x30] sm:$0xff]
                  %1333 = vst [vmem:[%s1319 + $0x30] sm:$0xff] %v1332
                  %v1334 = vld [vmem:[%s1318 + $0x38] sm:$0xff]
                  %1335 = vst [vmem:[%s1319 + $0x38] sm:$0xff] %v1334
                  %v1336 = vld [vmem:[%s1318 + $0x40] sm:$0xff]
                  %1337 = vst [vmem:[%s1319 + $0x40] sm:$0xff] %v1336
                  %v1338 = vld [vmem:[%s1318 + $0x48] sm:$0xff]
                  %1339 = vst [vmem:[%s1319 + $0x48] sm:$0xff] %v1338
                  %v1340 = vld [vmem:[%s1318 + $0x50] sm:$0xff]
                  %1341 = vst [vmem:[%s1319 + $0x50] sm:$0xff] %v1340
                  %v1342 = vld [vmem:[%s1318 + $0x58] sm:$0xff]
                  %1343 = vst [vmem:[%s1319 + $0x58] sm:$0xff] %v1342
                  %v1344 = vld [vmem:[%s1318 + $0x60] sm:$0xff]
                  %1345 = vst [vmem:[%s1319 + $0x60] sm:$0xff] %v1344
                  %v1346 = vld [vmem:[%s1318 + $0x68] sm:$0xff]
                  %1347 = vst [vmem:[%s1319 + $0x68] sm:$0xff] %v1346
                  %v1348 = vld [vmem:[%s1318 + $0x70] sm:$0xff]
                  %1349 = vst [vmem:[%s1319 + $0x70] sm:$0xff] %v1348
                  %v1350 = vld [vmem:[%s1318 + $0x78] sm:$0xff]
                  %1351 = vst [vmem:[%s1319 + $0x78] sm:$0xff] %v1350
                  %v1352 = vld [vmem:[%s1318 + $0x80] sm:$0xff]
                  %1353 = vst [vmem:[%s1319 + $0x80] sm:$0xff] %v1352
                  %v1354 = vld [vmem:[%s1318 + $0x88] sm:$0xff]
                  %1355 = vst [vmem:[%s1319 + $0x88] sm:$0xff] %v1354
                  %v1356 = vld [vmem:[%s1318 + $0x90] sm:$0xff]
                  %1357 = vst [vmem:[%s1319 + $0x90] sm:$0xff] %v1356
                  %v1358 = vld [vmem:[%s1318 + $0x98] sm:$0xff]
                  %1359 = vst [vmem:[%s1319 + $0x98] sm:$0xff] %v1358
                  %v1360 = vld [vmem:[%s1318 + $0xa0] sm:$0xff]
                  %1361 = vst [vmem:[%s1319 + $0xa0] sm:$0xff] %v1360
                  %v1362 = vld [vmem:[%s1318 + $0xa8] sm:$0xff]
                  %1363 = vst [vmem:[%s1319 + $0xa8] sm:$0xff] %v1362
                  %v1364 = vld [vmem:[%s1318 + $0xb0] sm:$0xff]
                  %1365 = vst [vmem:[%s1319 + $0xb0] sm:$0xff] %v1364
                  %v1366 = vld [vmem:[%s1318 + $0xb8] sm:$0xff]
                  %1367 = vst [vmem:[%s1319 + $0xb8] sm:$0xff] %v1366
                  %v1368 = vld [vmem:[%s1318 + $0xc0] sm:$0xff]
                  %1369 = vst [vmem:[%s1319 + $0xc0] sm:$0xff] %v1368
                  %v1370 = vld [vmem:[%s1318 + $0xc8] sm:$0xff]
                  %1371 = vst [vmem:[%s1319 + $0xc8] sm:$0xff] %v1370
                  %v1372 = vld [vmem:[%s1318 + $0xd0] sm:$0xff]
                  %1373 = vst [vmem:[%s1319 + $0xd0] sm:$0xff] %v1372
                  %v1374 = vld [vmem:[%s1318 + $0xd8] sm:$0xff]
                  %1375 = vst [vmem:[%s1319 + $0xd8] sm:$0xff] %v1374
                  %v1376 = vld [vmem:[%s1318 + $0xe0] sm:$0xff]
                  %1377 = vst [vmem:[%s1319 + $0xe0] sm:$0xff] %v1376
                  %v1378 = vld [vmem:[%s1318 + $0xe8] sm:$0xff]
                  %1379 = vst [vmem:[%s1319 + $0xe8] sm:$0xff] %v1378
                  %v1380 = vld [vmem:[%s1318 + $0xf0] sm:$0xff]
                  %1381 = vst [vmem:[%s1319 + $0xf0] sm:$0xff] %v1380
                  %v1382 = vld [vmem:[%s1318 + $0xf8] sm:$0xff]
                  %1383 = vst [vmem:[%s1319 + $0xf8] sm:$0xff] %v1382
                  %v1384 = vld [vmem:[%s1318 + $0x1c] sm:$0xff]
                  %1385 = vst [vmem:[%s1319 + $0x34] sm:$0xff] %v1384
                  %v1386 = vld [vmem:[%s1318 + $0x24] sm:$0xff]
                  %1387 = vst [vmem:[%s1319 + $0x3c] sm:$0xff] %v1386
                  %v1388 = vld [vmem:[%s1318 + $0x2c] sm:$0xff]
                  %1389 = vst [vmem:[%s1319 + $0x44] sm:$0xff] %v1388
                  %v1390 = vld [vmem:[%s1318 + $0x34] sm:$0xff]
                  %1391 = vst [vmem:[%s1319 + $0x4c] sm:$0xff] %v1390
                  %v1392 = vld [vmem:[%s1318 + $0x3c] sm:$0xff]
                  %1393 = vst [vmem:[%s1319 + $0x54] sm:$0xff] %v1392
                  %v1394 = vld [vmem:[%s1318 + $0x44] sm:$0xff]
                  %1395 = vst [vmem:[%s1319 + $0x5c] sm:$0xff] %v1394
                  %v1396 = vld [vmem:[%s1318 + $0x4c] sm:$0xff]
                  %1397 = vst [vmem:[%s1319 + $0x64] sm:$0xff] %v1396
                  %v1398 = vld [vmem:[%s1318 + $0x54] sm:$0xff]
                  %1399 = vst [vmem:[%s1319 + $0x6c] sm:$0xff] %v1398
                  %v1400 = vld [vmem:[%s1318 + $0x5c] sm:$0xff]
                  %1401 = vst [vmem:[%s1319 + $0x74] sm:$0xff] %v1400
                  %v1402 = vld [vmem:[%s1318 + $0x64] sm:$0xff]
                  %1403 = vst [vmem:[%s1319 + $0x7c] sm:$0xff] %v1402
                  %v1404 = vld [vmem:[%s1318 + $0x6c] sm:$0xff]
                  %1405 = vst [vmem:[%s1319 + $0x84] sm:$0xff] %v1404
                  %v1406 = vld [vmem:[%s1318 + $0x74] sm:$0xff]
                  %1407 = vst [vmem:[%s1319 + $0x8c] sm:$0xff] %v1406
                  %v1408 = vld [vmem:[%s1318 + $0x7c] sm:$0xff]
                  %1409 = vst [vmem:[%s1319 + $0x94] sm:$0xff] %v1408
                  %v1410 = vld [vmem:[%s1318 + $0x84] sm:$0xff]
                  %1411 = vst [vmem:[%s1319 + $0x9c] sm:$0xff] %v1410
                  %v1412 = vld [vmem:[%s1318 + $0x8c] sm:$0xff]
                  %1413 = vst [vmem:[%s1319 + $0xa4] sm:$0xff] %v1412
                  %v1414 = vld [vmem:[%s1318 + $0x94] sm:$0xff]
                  %1415 = vst [vmem:[%s1319 + $0xac] sm:$0xff] %v1414
                  %v1416 = vld [vmem:[%s1318 + $0x9c] sm:$0xff]
                  %1417 = vst [vmem:[%s1319 + $0xb4] sm:$0xff] %v1416
                  %v1418 = vld [vmem:[%s1318 + $0xa4] sm:$0xff]
                  %1419 = vst [vmem:[%s1319 + $0xbc] sm:$0xff] %v1418
                  %v1420 = vld [vmem:[%s1318 + $0xac] sm:$0xff]
                  %1421 = vst [vmem:[%s1319 + $0xc4] sm:$0xff] %v1420
                  %v1422 = vld [vmem:[%s1318 + $0xb4] sm:$0xff]
                  %1423 = vst [vmem:[%s1319 + $0xcc] sm:$0xff] %v1422
                  %v1424 = vld [vmem:[%s1318 + $0xbc] sm:$0xff]
                  %1425 = vst [vmem:[%s1319 + $0xd4] sm:$0xff] %v1424
                  %v1426 = vld [vmem:[%s1318 + $0xc4] sm:$0xff]
                  %1427 = vst [vmem:[%s1319 + $0xdc] sm:$0xff] %v1426
                  %v1428 = vld [vmem:[%s1318 + $0xcc] sm:$0xff]
                  %1429 = vst [vmem:[%s1319 + $0xe4] sm:$0xff] %v1428
                  %v1430 = vld [vmem:[%s1318 + $0xd4] sm:$0xff]
                  %1431 = vst [vmem:[%s1319 + $0xec] sm:$0xff] %v1430
                  %v1432 = vld [vmem:[%s1318 + $0xdc] sm:$0xff]
                  %1433 = vst [vmem:[%s1319 + $0xf4] sm:$0xff] %v1432
                  %v1434 = vld [vmem:[%s1318 + $0xe4] sm:$0xff]
                  %1435 = vst [vmem:[%s1319 + $0xfc] sm:$0xff] %v1434
                  %v1436 = vld [vmem:[%s1318 + $0xec] sm:$0xff]
                  %1437 = vst [vmem:[%s1319 + $0x104] sm:$0xff] %v1436
                  %v1438 = vld [vmem:[%s1318 + $0xf4] sm:$0xff]
                  %1439 = vst [vmem:[%s1319 + $0x10c] sm:$0xff] %v1438
                  %v1440 = vld [vmem:[%s1318 + $0xfc] sm:$0xff]
                  %1441 = vst [vmem:[%s1319 + $0x114] sm:$0xff] %v1440
                  %v1442 = vld [vmem:[%s1318 + $0x104] sm:$0xff]
                  %1443 = vst [vmem:[%s1319 + $0x11c] sm:$0xff] %v1442
                  %v1444 = vld [vmem:[%s1318 + $0x10c] sm:$0xff]
                  %1445 = vst [vmem:[%s1319 + $0x124] sm:$0xff] %v1444
                  %v1446 = vld [vmem:[%s1318 + $0x114] sm:$0xff]
                  %1447 = vst [vmem:[%s1319 + $0x12c] sm:$0xff] %v1446
                  %s1448 = sadd.s32 1, %s1317
                  %p1449 = scmp.ge.s32.totalorder %s1448, %s1308
                  %s1450 = scalar_select %p1449, 0, %s1448
                  %s1451 = smul.u32 %s1450, 256
                  %s1452 = smul.u32 %s1450, 256
                  %s1453 = scalar_lea.vmem %s1079, %s1451 [#allocation3]
                  %s1454 = scalar_lea.vmem %s1090, %s1452
                $region148: #{eenetwork_forward.4} parent=142 // loop_footer
                  %s1314 = sadd.s32 %s1312, 1
                $region149: #{eenetwork_forward.4} parent=142 // loop_footer_branch
                  %1311 = sbr.rel target = $region145
                $region150: #{eenetwork_forward.4} parent=142 // loop_exit
                  _
                %s1455 = sshrl.u32 %s1307, 5
                %s1456 = sand.u32 %s1307, 31
                %s1457 = smul.u32 %s1455, 32
                %s1458 = smul.u32 128, %s1457
                %s1459 = sshra.s32 %s1458, 4
                %s1460 = scalar_lea.vmem %s1079, %s1459 [#allocation3]
                %s1461 = smul.u32 128, %s1457
                %s1462 = sshra.s32 %s1461, 4
                %s1463 = scalar_lea.vmem %s1090, %s1462
                // While loop
                $region151: #{eenetwork_forward.4} parent=142 // loop_pre_header
                  _
                $region152: #{eenetwork_forward.4} parent=142 // loop_header
                  %s1467 = sphi 0, %s1469
                  %p1468 = scmp.ge.s32.totalorder %s1467, %s1456
                  %s1472 = sphi 0, %s1481
                  %s1473 = sphi %s1460, %s1484
                  %s1474 = sphi %s1463, %s1485
                $region153: #{eenetwork_forward.4} parent=142 // loop_header_branch
                  %1471 = sbr.rel (%p1468) target = $region157
                $region154: #{eenetwork_forward.4} parent=142 // loop_body
                  %v1475 = vld [vmem:[%s1473] sm:$0xff]
                  %1476 = vst [vmem:[%s1474] sm:$0xff] %v1475
                  %v1477 = vld [vmem:[%s1473 + $0x1c] sm:$0xff]
                  %1478 = vst [vmem:[%s1474 + $0x34] sm:$0xff] %v1477
                  %s1479 = sadd.s32 1, %s1472
                  %p1480 = scmp.ge.s32.totalorder %s1479, %s1456
                  %s1481 = scalar_select %p1480, 0, %s1479
                  %s1482 = smul.u32 %s1481, 8
                  %s1483 = smul.u32 %s1481, 8
                  %s1484 = scalar_lea.vmem %s1460, %s1482 [#allocation3]
                  %s1485 = scalar_lea.vmem %s1463, %s1483
                $region155: #{eenetwork_forward.4} parent=142 // loop_footer
                  %s1469 = sadd.s32 %s1467, 1
                $region156: #{eenetwork_forward.4} parent=142 // loop_footer_branch
                  %1466 = sbr.rel target = $region152
                $region157: #{eenetwork_forward.4} parent=142 // loop_exit
                  _
                %s1486 = sshllo.u32 0, %s1302
                loop: start=0, step=1, limit=1
                $region158: #{eenetwork_forward.4} parent=142 // loop_pre_header
                  _
                $region159: #{eenetwork_forward.4} parent=142 // loop_header
                  %s1488 = sphi 0, %s1492
                  %p1489 = scmp.ge.s32.totalorder %s1488, 1
                  %s1493 = sphi %s1304, %s1304
                  %s1494 = sphi %s1306, %s1306
                $region160: #{eenetwork_forward.4} parent=142 // loop_header_branch
                  %1491 = sbr.rel (%p1489) target = $region164
                $region161: #{eenetwork_forward.4} parent=142 // loop_body
                  %v1495 = vld [vmem:[%s1493] sm:%s1486]
                  %1496 = vst [vmem:[%s1494] sm:%s1486] %v1495
                  %v1497 = vld [vmem:[%s1493 + $0x1c] sm:%s1486]
                  %1498 = vst [vmem:[%s1494 + $0x34] sm:%s1486] %v1497
                $region162: #{eenetwork_forward.4} parent=142 // loop_footer
                  %s1492 = sadd.s32 1, %s1488
                $region163: #{eenetwork_forward.4} parent=142 // loop_footer_branch
                  %1487 = sbr.rel target = $region159
                $region164: #{eenetwork_forward.4} parent=142 // loop_exit
                  _
              $region143: #{eenetwork_forward.4} parent=109 // pred_fallthru
                _
            $region110: #{eenetwork_forward.4} parent=105 // pred_fallthru
              _
            // Predicated region
            $region111: #{eenetwork_forward.4} parent=105 // pred_check
              %p1099 = pneg %p1095
            $region112: #{eenetwork_forward.4} parent=105 // pred_check_branch
              %1101 = sbr.rel (%p1099) target = $region114
            $region113: #{eenetwork_forward.4} parent=105 // pred_region
              %s1102 = sshllo.u32 0, %s1091
              loop: start=0, step=1, limit=1
              $region115: #{eenetwork_forward.4} parent=113 // loop_pre_header
                _
              $region116: #{eenetwork_forward.4} parent=113 // loop_header
                %s1104 = sphi 0, %s1108
                %p1105 = scmp.ge.s32.totalorder %s1104, 1
                %s1109 = sphi %s1079, %s1079
                %s1110 = sphi %s1090, %s1090
              $region117: #{eenetwork_forward.4} parent=113 // loop_header_branch
                %1107 = sbr.rel (%p1105) target = $region121
              $region118: #{eenetwork_forward.4} parent=113 // loop_body
                %v1111 = vld [vmem:[%s1109] sm:%s1102]
                %1112 = vst [vmem:[%s1110] sm:%s1102] %v1111
                %v1113 = vld [vmem:[%s1109 + $0x1c] sm:%s1102]
                %1114 = vst [vmem:[%s1110 + $0x34] sm:%s1102] %v1113
              $region119: #{eenetwork_forward.4} parent=113 // loop_footer
                %s1108 = sadd.s32 1, %s1104
              $region120: #{eenetwork_forward.4} parent=113 // loop_footer_branch
                %1103 = sbr.rel target = $region116
              $region121: #{eenetwork_forward.4} parent=113 // loop_exit
                _
            $region114: #{eenetwork_forward.4} parent=105 // pred_fallthru
              _
          $region106: #{eenetwork_forward.4} parent=101 // pred_fallthru
            _
          %1499 = vnop
        $region102: #{eenetwork_forward.4} parent=93 // pred_fallthru
          _
      $region94: #{eenetwork_forward.4} parent=5 // pred_fallthru
        _
      %p1500 = scmp.le.s32.totalorder 2, %s9
      // Predicated region
      $region165: #{eenetwork_forward.4} parent=5 // pred_check
        %p1501 = pneg %p1500
      $region166: #{eenetwork_forward.4} parent=5 // pred_check_branch
        %1503 = sbr.rel (%p1501) target = $region168
      $region167: #{eenetwork_forward.4} parent=5 // pred_region
        %s1504 = ssub.s32 %s9, 2
        // Predicated region
        $region169: #{eenetwork_forward.4} parent=167 // pred_check
          %p1505 = pneg %p106
        $region170: #{eenetwork_forward.4} parent=167 // pred_check_branch
          %1507 = sbr.rel (%p1505) target = $region172
        $region171: #{eenetwork_forward.4} parent=167 // pred_region
          %s1508 = sand.u32 %s91, 1
          %s1509 = sand.u32 %s91, 1
          %s1510 = smul.addr %s1509, 56
          %s1511 = scalar_lea.vmem [#allocation3], %s1510
        $region172: #{eenetwork_forward.4} parent=167 // pred_fallthru
          _
      $region168: #{eenetwork_forward.4} parent=5 // pred_fallthru
        _
    $region6: #{eenetwork_forward.4} parent=1 // loop_footer
      %s13 = sadd.s32 1, %s9
    $region7: #{eenetwork_forward.4} parent=1 // loop_footer_branch
      %8 = sbr.rel target = $region3
    $region8: #{eenetwork_forward.4} parent=1 // loop_exit
      _

// kernel: eenetwork_forward.5
$region0: #{eenetwork_forward.5}
  #allocation0 [shape = 'u32[]', space=smem, size = 0x4, offset = 0x4, fixed_abs, tag = 'smem constant byte address 0x4 - core index']
  #allocation1 [shape = 'u32[144,128]{1,0:T(1,128)}', space=vmem, size = 0x12000, scoped, tag = 'internal scratch']
  %s0 = inlined_call_operand.vmem [shape: bf16[256,324], index: 0, kind: input, shape index: {}]
  %s1 = inlined_call_operand.vmem [shape: bf16[16,256], index: 1, kind: input, shape index: {}]
  %s2 = inlined_call_operand.vmem [shape: f32[16,1], index: 2, kind: input, shape index: {}]
  %s3 = inlined_call_operand.vmem [shape: bf16[16,324], index: 3, kind: output, shape index: {}]
  %s4 = sld [smem:[#allocation0]]
  $region173: #{eenetwork_forward.5} parent=0
    _
  %s6 = ssub.s32 1, %s4
  %s7 = scalar_select 0, %s6, %s4
  $region1: #{eenetwork_forward.5} parent=0
    #allocation2 [shape = 'u8[262144]{0}', space=vmem, size = 0x40000, scoped, tag = 'input window, operand 0']
    #allocation3 [shape = 'u8[16384]{0}', space=vmem, size = 0x4000, scoped, tag = 'output window, operand 0']
    loop: start=0, step=1, limit=4
    $region2: #{eenetwork_forward.5} parent=1 // loop_pre_header
      _
    $region3: #{eenetwork_forward.5} parent=1 // loop_header
      %s9 = sphi 0, %s13
      %p10 = scmp.ge.s32.totalorder %s9, 4
      %s19 = sphi 0, %s21
      %s22 = sphi 0, %s19
      %s23 = sphi 0, %s22
      %s39 = sphi 0, %s23
      %s43 = sphi 0, %s43
      %s45 = sphi 0, %s43
      %s46 = sphi 0, %s45
      %s60 = sphi 0, %s46
      %s64 = sphi 0, %s64
      %s66 = sphi 0, %s64
      %s67 = sphi 0, %s66
      %s81 = sphi 0, %s67
      %s87 = sphi 0, %s89
      %s90 = sphi 0, %s87
      %s91 = sphi 0, %s90
      %s107 = sphi 0, %s91
    $region4: #{eenetwork_forward.5} parent=1 // loop_header_branch
      %12 = sbr.rel (%p10) target = $region8
    $region5: #{eenetwork_forward.5} parent=1 // loop_body
      %s14 = ssub.s32 %s9, 1
      %s15 = ssub.s32 %s9, 2
      %s16 = sadd.s32 %s9, 1
      %s17 = ssub.s32 %s9, %s16
      %p18 = scmp.eq.s32.totalorder %s17, 0
      %s20 = sadd.s32 %s19, 1
      %s21 = scalar_select %p18, %s19, %s20
      %p24 = pneg %p18
      %p25 = scmp.eq.s32.totalorder %s9, 1
      %p26 = por %p24, %p25
      %p27 = scmp.ne.s32.totalorder %s19, %s22
      %p28 = scmp.eq.s32.totalorder %s9, 0
      %p29 = por %p27, %p28
      %p30 = scmp.ne.s32.totalorder %s19, %s22
      %p31 = scmp.eq.s32.totalorder %s14, 1
      %p32 = por %p30, %p31
      %p33 = scmp.ne.s32.totalorder %s22, %s23
      %p34 = scmp.eq.s32.totalorder %s14, 0
      %p35 = por %p33, %p34
      %p36 = scmp.ne.s32.totalorder %s22, %s23
      %p37 = scmp.eq.s32.totalorder %s15, 1
      %p38 = por %p36, %p37
      %p40 = scmp.ne.s32.totalorder %s23, %s39
      %p41 = scmp.eq.s32.totalorder %s15, 0
      %p42 = por %p40, %p41
      %s44 = sadd.s32 %s43, 1
      %p47 = scmp.eq.s32.totalorder %s9, 1
      %p48 = scmp.ne.s32.totalorder %s43, %s45
      %p49 = scmp.eq.s32.totalorder %s9, 0
      %p50 = por %p48, %p49
      %p51 = scmp.ne.s32.totalorder %s43, %s45
      %p52 = scmp.eq.s32.totalorder %s14, 1
      %p53 = por %p51, %p52
      %p54 = scmp.ne.s32.totalorder %s45, %s46
      %p55 = scmp.eq.s32.totalorder %s14, 0
      %p56 = por %p54, %p55
      %p57 = scmp.ne.s32.totalorder %s45, %s46
      %p58 = scmp.eq.s32.totalorder %s15, 1
      %p59 = por %p57, %p58
      %p61 = scmp.ne.s32.totalorder %s46, %s60
      %p62 = scmp.eq.s32.totalorder %s15, 0
      %p63 = por %p61, %p62
      %s65 = sadd.s32 %s64, 1
      %p68 = scmp.eq.s32.totalorder %s9, 1
      %p69 = scmp.ne.s32.totalorder %s64, %s66
      %p70 = scmp.eq.s32.totalorder %s9, 0
      %p71 = por %p69, %p70
      %p72 = scmp.ne.s32.totalorder %s64, %s66
      %p73 = scmp.eq.s32.totalorder %s14, 1
      %p74 = por %p72, %p73
      %p75 = scmp.ne.s32.totalorder %s66, %s67
      %p76 = scmp.eq.s32.totalorder %s14, 0
      %p77 = por %p75, %p76
      %p78 = scmp.ne.s32.totalorder %s66, %s67
      %p79 = scmp.eq.s32.totalorder %s15, 1
      %p80 = por %p78, %p79
      %p82 = scmp.ne.s32.totalorder %s67, %s81
      %p83 = scmp.eq.s32.totalorder %s15, 0
      %p84 = por %p82, %p83
      %s85 = ssub.s32 %s9, %s16
      %p86 = scmp.eq.s32.totalorder %s85, 0
      %s88 = sadd.s32 %s87, 1
      %s89 = scalar_select %p86, %s87, %s88
      %p92 = pneg %p86
      %p93 = scmp.eq.s32.totalorder %s9, 1
      %p94 = por %p92, %p93
      %p95 = scmp.ne.s32.totalorder %s87, %s90
      %p96 = scmp.eq.s32.totalorder %s9, 0
      %p97 = por %p95, %p96
      %p98 = scmp.ne.s32.totalorder %s87, %s90
      %p99 = scmp.eq.s32.totalorder %s14, 1
      %p100 = por %p98, %p99
      %p101 = scmp.ne.s32.totalorder %s90, %s91
      %p102 = scmp.eq.s32.totalorder %s14, 0
      %p103 = por %p101, %p102
      %p104 = scmp.ne.s32.totalorder %s90, %s91
      %p105 = scmp.eq.s32.totalorder %s15, 1
      %p106 = por %p104, %p105
      %p108 = scmp.ne.s32.totalorder %s91, %s107
      %p109 = scmp.eq.s32.totalorder %s15, 0
      %p110 = por %p108, %p109
      %p111 = scmp.le.s32.totalorder 1, %s9
      %p112 = scmp.lt.s32.totalorder %s9, 3
      %p113 = pnand %p111, %p112
      %p114 = pneg %p113
      // Predicated region
      $region9: #{eenetwork_forward.5} parent=5 // pred_check
        _
      $region10: #{eenetwork_forward.5} parent=5 // pred_check_branch
        %116 = sbr.rel (%p113) target = $region12
      $region11: #{eenetwork_forward.5} parent=5 // pred_region
        %s117 = ssub.s32 %s9, 1
        // Predicated region
        $region13: #{eenetwork_forward.5} parent=11 // pred_check
          %p118 = pneg %p56
        $region14: #{eenetwork_forward.5} parent=11 // pred_check_branch
          %120 = sbr.rel (%p118) target = $region16
        $region15: #{eenetwork_forward.5} parent=11 // pred_region
          _
        $region16: #{eenetwork_forward.5} parent=11 // pred_fallthru
          _
        // Predicated region
        $region17: #{eenetwork_forward.5} parent=11 // pred_check
          %p121 = pneg %p77
        $region18: #{eenetwork_forward.5} parent=11 // pred_check_branch
          %123 = sbr.rel (%p121) target = $region20
        $region19: #{eenetwork_forward.5} parent=11 // pred_region
          _
        $region20: #{eenetwork_forward.5} parent=11 // pred_fallthru
          _
      $region12: #{eenetwork_forward.5} parent=5 // pred_fallthru
        _
      %p124 = scmp.lt.s32.totalorder %s9, 2
      // Predicated region
      $region21: #{eenetwork_forward.5} parent=5 // pred_check
        %p125 = pneg %p124
      $region22: #{eenetwork_forward.5} parent=5 // pred_check_branch
        %127 = sbr.rel (%p125) target = $region24
      $region23: #{eenetwork_forward.5} parent=5 // pred_region
        // Predicated region
        $region25: #{eenetwork_forward.5} parent=23 // pred_check
          %p128 = pneg %p29
        $region26: #{eenetwork_forward.5} parent=23 // pred_check_branch
          %130 = sbr.rel (%p128) target = $region28
        $region27: #{eenetwork_forward.5} parent=23 // pred_region
          %s131 = sand.u32 %s19, 1
          %s132 = sand.u32 %s19, 1
          %s133 = smul.addr %s132, 256
          %s134 = scalar_lea.vmem [#allocation2], %s133
          %s135 = smul.u32 2, %s9
          %s136 = ssub.s32 3, %s135
          %p137 = scmp.lt.s32.totalorder %s136, 2
          %s138 = scalar_select %p137, %s136, 2
          %s139 = smul.u32 2048, %s138
          %p140 = scmp.ne.s32.totalorder 0, %s139
          %s141 = smul.addr %s135, 4
          %s142 = scalar_lea.vmem %s0, %s141
          %s143 = smul.u32 %s138, 4
          // Predicated region
          $region29: #{eenetwork_forward.5} parent=27 // pred_check
            %p144 = pneg %p140
          $region30: #{eenetwork_forward.5} parent=27 // pred_check_branch
            %146 = sbr.rel (%p144) target = $region32
          $region31: #{eenetwork_forward.5} parent=27 // pred_region
            %p147 = scmp.lt.u32.totalorder %s143, 8
            %p148 = pneg %p147
            // Predicated region
            $region33: #{eenetwork_forward.5} parent=31 // pred_check
              _
            $region34: #{eenetwork_forward.5} parent=31 // pred_check_branch
              %150 = sbr.rel (%p147) target = $region36
            $region35: #{eenetwork_forward.5} parent=31 // pred_region
              %s227 = sand.u32 %s143, 7
              %p228 = scmp.eq.s32.totalorder %s227, 0
              // Predicated region
              $region48: #{eenetwork_forward.5} parent=35 // pred_check
                %p229 = pneg %p228
              $region49: #{eenetwork_forward.5} parent=35 // pred_check_branch
                %231 = sbr.rel (%p229) target = $region51
              $region50: #{eenetwork_forward.5} parent=35 // pred_region
                %s232 = sshrl.u32 %s143, 3
                %s233 = sshrl.u32 %s232, 1
                // While loop
                $region52: #{eenetwork_forward.5} parent=50 // loop_pre_header
                  _
                $region53: #{eenetwork_forward.5} parent=50 // loop_header
                  %s237 = sphi 0, %s239
                  %p238 = scmp.ge.s32.totalorder %s237, %s233
                  %s242 = sphi 0, %s375
                  %s243 = sphi %s142, %s378
                  %s244 = sphi %s134, %s379
                $region54: #{eenetwork_forward.5} parent=50 // loop_header_branch
                  %241 = sbr.rel (%p238) target = $region58
                $region55: #{eenetwork_forward.5} parent=50 // loop_body
                  %v245 = vld [vmem:[%s243] sm:$0xff]
                  %246 = vst [vmem:[%s244] sm:$0xff] %v245
                  %v247 = vld [vmem:[%s243 + $0x8] sm:$0xff]
                  %248 = vst [vmem:[%s244 + $0x8] sm:$0xff] %v247
                  %v249 = vld [vmem:[%s243 + $0xc] sm:$0xff]
                  %250 = vst [vmem:[%s244 + $0x8] sm:$0xff] %v249
                  %v251 = vld [vmem:[%s243 + $0x14] sm:$0xff]
                  %252 = vst [vmem:[%s244 + $0x10] sm:$0xff] %v251
                  %v253 = vld [vmem:[%s243 + $0x18] sm:$0xff]
                  %254 = vst [vmem:[%s244 + $0x10] sm:$0xff] %v253
                  %v255 = vld [vmem:[%s243 + $0x20] sm:$0xff]
                  %256 = vst [vmem:[%s244 + $0x18] sm:$0xff] %v255
                  %v257 = vld [vmem:[%s243 + $0x24] sm:$0xff]
                  %258 = vst [vmem:[%s244 + $0x18] sm:$0xff] %v257
                  %v259 = vld [vmem:[%s243 + $0x2c] sm:$0xff]
                  %260 = vst [vmem:[%s244 + $0x20] sm:$0xff] %v259
                  %v261 = vld [vmem:[%s243 + $0x30] sm:$0xff]
                  %262 = vst [vmem:[%s244 + $0x20] sm:$0xff] %v261
                  %v263 = vld [vmem:[%s243 + $0x38] sm:$0xff]
                  %264 = vst [vmem:[%s244 + $0x28] sm:$0xff] %v263
                  %v265 = vld [vmem:[%s243 + $0x3c] sm:$0xff]
                  %266 = vst [vmem:[%s244 + $0x28] sm:$0xff] %v265
                  %v267 = vld [vmem:[%s243 + $0x44] sm:$0xff]
                  %268 = vst [vmem:[%s244 + $0x30] sm:$0xff] %v267
                  %v269 = vld [vmem:[%s243 + $0x48] sm:$0xff]
                  %270 = vst [vmem:[%s244 + $0x30] sm:$0xff] %v269
                  %v271 = vld [vmem:[%s243 + $0x50] sm:$0xff]
                  %272 = vst [vmem:[%s244 + $0x38] sm:$0xff] %v271
                  %v273 = vld [vmem:[%s243 + $0x54] sm:$0xff]
                  %274 = vst [vmem:[%s244 + $0x38] sm:$0xff] %v273
                  %v275 = vld [vmem:[%s243 + $0x5c] sm:$0xff]
                  %276 = vst [vmem:[%s244 + $0x40] sm:$0xff] %v275
                  %v277 = vld [vmem:[%s243 + $0x60] sm:$0xff]
                  %278 = vst [vmem:[%s244 + $0x40] sm:$0xff] %v277
                  %v279 = vld [vmem:[%s243 + $0x68] sm:$0xff]
                  %280 = vst [vmem:[%s244 + $0x48] sm:$0xff] %v279
                  %v281 = vld [vmem:[%s243 + $0x6c] sm:$0xff]
                  %282 = vst [vmem:[%s244 + $0x48] sm:$0xff] %v281
                  %v283 = vld [vmem:[%s243 + $0x74] sm:$0xff]
                  %284 = vst [vmem:[%s244 + $0x50] sm:$0xff] %v283
                  %v285 = vld [vmem:[%s243 + $0x78] sm:$0xff]
                  %286 = vst [vmem:[%s244 + $0x50] sm:$0xff] %v285
                  %v287 = vld [vmem:[%s243 + $0x80] sm:$0xff]
                  %288 = vst [vmem:[%s244 + $0x58] sm:$0xff] %v287
                  %v289 = vld [vmem:[%s243 + $0x84] sm:$0xff]
                  %290 = vst [vmem:[%s244 + $0x58] sm:$0xff] %v289
                  %v291 = vld [vmem:[%s243 + $0x8c] sm:$0xff]
                  %292 = vst [vmem:[%s244 + $0x60] sm:$0xff] %v291
                  %v293 = vld [vmem:[%s243 + $0x90] sm:$0xff]
                  %294 = vst [vmem:[%s244 + $0x60] sm:$0xff] %v293
                  %v295 = vld [vmem:[%s243 + $0x98] sm:$0xff]
                  %296 = vst [vmem:[%s244 + $0x68] sm:$0xff] %v295
                  %v297 = vld [vmem:[%s243 + $0x9c] sm:$0xff]
                  %298 = vst [vmem:[%s244 + $0x68] sm:$0xff] %v297
                  %v299 = vld [vmem:[%s243 + $0xa4] sm:$0xff]
                  %300 = vst [vmem:[%s244 + $0x70] sm:$0xff] %v299
                  %v301 = vld [vmem:[%s243 + $0xa8] sm:$0xff]
                  %302 = vst [vmem:[%s244 + $0x70] sm:$0xff] %v301
                  %v303 = vld [vmem:[%s243 + $0xb0] sm:$0xff]
                  %304 = vst [vmem:[%s244 + $0x78] sm:$0xff] %v303
                  %v305 = vld [vmem:[%s243 + $0xb4] sm:$0xff]
                  %306 = vst [vmem:[%s244 + $0x78] sm:$0xff] %v305
                  %v307 = vld [vmem:[%s243 + $0xbc] sm:$0xff]
                  %308 = vst [vmem:[%s244 + $0x80] sm:$0xff] %v307
                  %v309 = vld [vmem:[%s243 + $0xc0] sm:$0xff]
                  %310 = vst [vmem:[%s244 + $0x80] sm:$0xff] %v309
                  %v311 = vld [vmem:[%s243 + $0xc8] sm:$0xff]
                  %312 = vst [vmem:[%s244 + $0x88] sm:$0xff] %v311
                  %v313 = vld [vmem:[%s243 + $0xcc] sm:$0xff]
                  %314 = vst [vmem:[%s244 + $0x88] sm:$0xff] %v313
                  %v315 = vld [vmem:[%s243 + $0xd4] sm:$0xff]
                  %316 = vst [vmem:[%s244 + $0x90] sm:$0xff] %v315
                  %v317 = vld [vmem:[%s243 + $0xd8] sm:$0xff]
                  %318 = vst [vmem:[%s244 + $0x90] sm:$0xff] %v317
                  %v319 = vld [vmem:[%s243 + $0xe0] sm:$0xff]
                  %320 = vst [vmem:[%s244 + $0x98] sm:$0xff] %v319
                  %v321 = vld [vmem:[%s243 + $0xe4] sm:$0xff]
                  %322 = vst [vmem:[%s244 + $0x98] sm:$0xff] %v321
                  %v323 = vld [vmem:[%s243 + $0xec] sm:$0xff]
                  %324 = vst [vmem:[%s244 + $0xa0] sm:$0xff] %v323
                  %v325 = vld [vmem:[%s243 + $0xf0] sm:$0xff]
                  %326 = vst [vmem:[%s244 + $0xa0] sm:$0xff] %v325
                  %v327 = vld [vmem:[%s243 + $0xf8] sm:$0xff]
                  %328 = vst [vmem:[%s244 + $0xa8] sm:$0xff] %v327
                  %v329 = vld [vmem:[%s243 + $0xfc] sm:$0xff]
                  %330 = vst [vmem:[%s244 + $0xa8] sm:$0xff] %v329
                  %v331 = vld [vmem:[%s243 + $0x104] sm:$0xff]
                  %332 = vst [vmem:[%s244 + $0xb0] sm:$0xff] %v331
                  %v333 = vld [vmem:[%s243 + $0x108] sm:$0xff]
                  %334 = vst [vmem:[%s244 + $0xb0] sm:$0xff] %v333
                  %v335 = vld [vmem:[%s243 + $0x110] sm:$0xff]
                  %336 = vst [vmem:[%s244 + $0xb8] sm:$0xff] %v335
                  %v337 = vld [vmem:[%s243 + $0x114] sm:$0xff]
                  %338 = vst [vmem:[%s244 + $0xb8] sm:$0xff] %v337
                  %v339 = vld [vmem:[%s243 + $0x11c] sm:$0xff]
                  %340 = vst [vmem:[%s244 + $0xc0] sm:$0xff] %v339
                  %v341 = vld [vmem:[%s243 + $0x120] sm:$0xff]
                  %342 = vst [vmem:[%s244 + $0xc0] sm:$0xff] %v341
                  %v343 = vld [vmem:[%s243 + $0x128] sm:$0xff]
                  %344 = vst [vmem:[%s244 + $0xc8] sm:$0xff] %v343
                  %v345 = vld [vmem:[%s243 + $0x12c] sm:$0xff]
                  %346 = vst [vmem:[%s244 + $0xc8] sm:$0xff] %v345
                  %v347 = vld [vmem:[%s243 + $0x134] sm:$0xff]
                  %348 = vst [vmem:[%s244 + $0xd0] sm:$0xff] %v347
                  %v349 = vld [vmem:[%s243 + $0x138] sm:$0xff]
                  %350 = vst [vmem:[%s244 + $0xd0] sm:$0xff] %v349
                  %v351 = vld [vmem:[%s243 + $0x140] sm:$0xff]
                  %352 = vst [vmem:[%s244 + $0xd8] sm:$0xff] %v351
                  %v353 = vld [vmem:[%s243 + $0x144] sm:$0xff]
                  %354 = vst [vmem:[%s244 + $0xd8] sm:$0xff] %v353
                  %v355 = vld [vmem:[%s243 + $0x14c] sm:$0xff]
                  %356 = vst [vmem:[%s244 + $0xe0] sm:$0xff] %v355
                  %v357 = vld [vmem:[%s243 + $0x150] sm:$0xff]
                  %358 = vst [vmem:[%s244 + $0xe0] sm:$0xff] %v357
                  %v359 = vld [vmem:[%s243 + $0x158] sm:$0xff]
                  %360 = vst [vmem:[%s244 + $0xe8] sm:$0xff] %v359
                  %v361 = vld [vmem:[%s243 + $0x15c] sm:$0xff]
                  %362 = vst [vmem:[%s244 + $0xe8] sm:$0xff] %v361
                  %v363 = vld [vmem:[%s243 + $0x164] sm:$0xff]
                  %364 = vst [vmem:[%s244 + $0xf0] sm:$0xff] %v363
                  %v365 = vld [vmem:[%s243 + $0x168] sm:$0xff]
                  %366 = vst [vmem:[%s244 + $0xf0] sm:$0xff] %v365
                  %v367 = vld [vmem:[%s243 + $0x170] sm:$0xff]
                  %368 = vst [vmem:[%s244 + $0xf8] sm:$0xff] %v367
                  %v369 = vld [vmem:[%s243 + $0x174] sm:$0xff]
                  %370 = vst [vmem:[%s244 + $0xf8] sm:$0xff] %v369
                  %v371 = vld [vmem:[%s243 + $0x17c] sm:$0xff]
                  %372 = vst [vmem:[%s244 + $0x100] sm:$0xff] %v371
                  %s373 = sadd.s32 1, %s242
                  %p374 = scmp.ge.s32.totalorder %s373, %s233
                  %s375 = scalar_select %p374, 0, %s373
                  %s376 = smul.u32 %s375, 16
                  %s377 = smul.u32 %s375, 16
                  %s378 = scalar_lea.vmem %s142, %s376
                  %s379 = scalar_lea.vmem %s134, %s377 [#allocation2]
                $region56: #{eenetwork_forward.5} parent=50 // loop_footer
                  %s239 = sadd.s32 %s237, 1
                $region57: #{eenetwork_forward.5} parent=50 // loop_footer_branch
                  %236 = sbr.rel target = $region53
                $region58: #{eenetwork_forward.5} parent=50 // loop_exit
                  _
                %s380 = sshrl.u32 %s232, 1
                %s381 = sand.u32 %s232, 1
                %s382 = smul.u32 %s380, 2
                %s383 = smul.u32 128, %s382
                %s384 = sshra.s32 %s383, 4
                %s385 = scalar_lea.vmem %s142, %s384
                %s386 = smul.u32 128, %s382
                %s387 = sshra.s32 %s386, 4
                %s388 = scalar_lea.vmem %s134, %s387 [#allocation2]
                // While loop
                $region59: #{eenetwork_forward.5} parent=50 // loop_pre_header
                  _
                $region60: #{eenetwork_forward.5} parent=50 // loop_header
                  %s392 = sphi 0, %s394
                  %p393 = scmp.ge.s32.totalorder %s392, %s381
                  %s397 = sphi 0, %s466
                  %s398 = sphi %s385, %s469
                  %s399 = sphi %s388, %s470
                $region61: #{eenetwork_forward.5} parent=50 // loop_header_branch
                  %396 = sbr.rel (%p393) target = $region65
                $region62: #{eenetwork_forward.5} parent=50 // loop_body
                  %v400 = vld [vmem:[%s398] sm:$0xff]
                  %401 = vst [vmem:[%s399] sm:$0xff] %v400
                  %v402 = vld [vmem:[%s398 + $0xc] sm:$0xff]
                  %403 = vst [vmem:[%s399 + $0x8] sm:$0xff] %v402
                  %v404 = vld [vmem:[%s398 + $0x18] sm:$0xff]
                  %405 = vst [vmem:[%s399 + $0x10] sm:$0xff] %v404
                  %v406 = vld [vmem:[%s398 + $0x24] sm:$0xff]
                  %407 = vst [vmem:[%s399 + $0x18] sm:$0xff] %v406
                  %v408 = vld [vmem:[%s398 + $0x30] sm:$0xff]
                  %409 = vst [vmem:[%s399 + $0x20] sm:$0xff] %v408
                  %v410 = vld [vmem:[%s398 + $0x3c] sm:$0xff]
                  %411 = vst [vmem:[%s399 + $0x28] sm:$0xff] %v410
                  %v412 = vld [vmem:[%s398 + $0x48] sm:$0xff]
                  %413 = vst [vmem:[%s399 + $0x30] sm:$0xff] %v412
                  %v414 = vld [vmem:[%s398 + $0x54] sm:$0xff]
                  %415 = vst [vmem:[%s399 + $0x38] sm:$0xff] %v414
                  %v416 = vld [vmem:[%s398 + $0x60] sm:$0xff]
                  %417 = vst [vmem:[%s399 + $0x40] sm:$0xff] %v416
                  %v418 = vld [vmem:[%s398 + $0x6c] sm:$0xff]
                  %419 = vst [vmem:[%s399 + $0x48] sm:$0xff] %v418
                  %v420 = vld [vmem:[%s398 + $0x78] sm:$0xff]
                  %421 = vst [vmem:[%s399 + $0x50] sm:$0xff] %v420
                  %v422 = vld [vmem:[%s398 + $0x84] sm:$0xff]
                  %423 = vst [vmem:[%s399 + $0x58] sm:$0xff] %v422
                  %v424 = vld [vmem:[%s398 + $0x90] sm:$0xff]
                  %425 = vst [vmem:[%s399 + $0x60] sm:$0xff] %v424
                  %v426 = vld [vmem:[%s398 + $0x9c] sm:$0xff]
                  %427 = vst [vmem:[%s399 + $0x68] sm:$0xff] %v426
                  %v428 = vld [vmem:[%s398 + $0xa8] sm:$0xff]
                  %429 = vst [vmem:[%s399 + $0x70] sm:$0xff] %v428
                  %v430 = vld [vmem:[%s398 + $0xb4] sm:$0xff]
                  %431 = vst [vmem:[%s399 + $0x78] sm:$0xff] %v430
                  %v432 = vld [vmem:[%s398 + $0xc0] sm:$0xff]
                  %433 = vst [vmem:[%s399 + $0x80] sm:$0xff] %v432
                  %v434 = vld [vmem:[%s398 + $0xcc] sm:$0xff]
                  %435 = vst [vmem:[%s399 + $0x88] sm:$0xff] %v434
                  %v436 = vld [vmem:[%s398 + $0xd8] sm:$0xff]
                  %437 = vst [vmem:[%s399 + $0x90] sm:$0xff] %v436
                  %v438 = vld [vmem:[%s398 + $0xe4] sm:$0xff]
                  %439 = vst [vmem:[%s399 + $0x98] sm:$0xff] %v438
                  %v440 = vld [vmem:[%s398 + $0xf0] sm:$0xff]
                  %441 = vst [vmem:[%s399 + $0xa0] sm:$0xff] %v440
                  %v442 = vld [vmem:[%s398 + $0xfc] sm:$0xff]
                  %443 = vst [vmem:[%s399 + $0xa8] sm:$0xff] %v442
                  %v444 = vld [vmem:[%s398 + $0x108] sm:$0xff]
                  %445 = vst [vmem:[%s399 + $0xb0] sm:$0xff] %v444
                  %v446 = vld [vmem:[%s398 + $0x114] sm:$0xff]
                  %447 = vst [vmem:[%s399 + $0xb8] sm:$0xff] %v446
                  %v448 = vld [vmem:[%s398 + $0x120] sm:$0xff]
                  %449 = vst [vmem:[%s399 + $0xc0] sm:$0xff] %v448
                  %v450 = vld [vmem:[%s398 + $0x12c] sm:$0xff]
                  %451 = vst [vmem:[%s399 + $0xc8] sm:$0xff] %v450
                  %v452 = vld [vmem:[%s398 + $0x138] sm:$0xff]
                  %453 = vst [vmem:[%s399 + $0xd0] sm:$0xff] %v452
                  %v454 = vld [vmem:[%s398 + $0x144] sm:$0xff]
                  %455 = vst [vmem:[%s399 + $0xd8] sm:$0xff] %v454
                  %v456 = vld [vmem:[%s398 + $0x150] sm:$0xff]
                  %457 = vst [vmem:[%s399 + $0xe0] sm:$0xff] %v456
                  %v458 = vld [vmem:[%s398 + $0x15c] sm:$0xff]
                  %459 = vst [vmem:[%s399 + $0xe8] sm:$0xff] %v458
                  %v460 = vld [vmem:[%s398 + $0x168] sm:$0xff]
                  %461 = vst [vmem:[%s399 + $0xf0] sm:$0xff] %v460
                  %v462 = vld [vmem:[%s398 + $0x174] sm:$0xff]
                  %463 = vst [vmem:[%s399 + $0xf8] sm:$0xff] %v462
                  %s464 = sadd.s32 1, %s397
                  %p465 = scmp.ge.s32.totalorder %s464, %s381
                  %s466 = scalar_select %p465, 0, %s464
                  %s467 = smul.u32 %s466, 8
                  %s468 = smul.u32 %s466, 8
                  %s469 = scalar_lea.vmem %s385, %s467
                  %s470 = scalar_lea.vmem %s388, %s468 [#allocation2]
                $region63: #{eenetwork_forward.5} parent=50 // loop_footer
                  %s394 = sadd.s32 %s392, 1
                $region64: #{eenetwork_forward.5} parent=50 // loop_footer_branch
                  %391 = sbr.rel target = $region60
                $region65: #{eenetwork_forward.5} parent=50 // loop_exit
                  _
              $region51: #{eenetwork_forward.5} parent=35 // pred_fallthru
                _
              %p471 = pneg %p228
              // Predicated region
              $region66: #{eenetwork_forward.5} parent=35 // pred_check
                _
              $region67: #{eenetwork_forward.5} parent=35 // pred_check_branch
                %473 = sbr.rel (%p228) target = $region69
              $region68: #{eenetwork_forward.5} parent=35 // pred_region
                %s474 = sand.u32 %s143, 7
                %s475 = ssub.s32 %s143, %s474
                %s476 = scalar_lea.vmem %s142, %s475
                %s477 = ssub.s32 %s143, %s474
                %s478 = scalar_lea.vmem %s134, %s477 [#allocation2]
                %s479 = sshrl.u32 %s143, 3
                %s480 = sshrl.u32 %s479, 1
                // While loop
                $region70: #{eenetwork_forward.5} parent=68 // loop_pre_header
                  _
                $region71: #{eenetwork_forward.5} parent=68 // loop_header
                  %s484 = sphi 0, %s486
                  %p485 = scmp.ge.s32.totalorder %s484, %s480
                  %s489 = sphi 0, %s622
                  %s490 = sphi %s142, %s625
                  %s491 = sphi %s134, %s626
                $region72: #{eenetwork_forward.5} parent=68 // loop_header_branch
                  %488 = sbr.rel (%p485) target = $region76
                $region73: #{eenetwork_forward.5} parent=68 // loop_body
                  %v492 = vld [vmem:[%s490] sm:$0xff]
                  %493 = vst [vmem:[%s491] sm:$0xff] %v492
                  %v494 = vld [vmem:[%s490 + $0x8] sm:$0xff]
                  %495 = vst [vmem:[%s491 + $0x8] sm:$0xff] %v494
                  %v496 = vld [vmem:[%s490 + $0xc] sm:$0xff]
                  %497 = vst [vmem:[%s491 + $0x8] sm:$0xff] %v496
                  %v498 = vld [vmem:[%s490 + $0x14] sm:$0xff]
                  %499 = vst [vmem:[%s491 + $0x10] sm:$0xff] %v498
                  %v500 = vld [vmem:[%s490 + $0x18] sm:$0xff]
                  %501 = vst [vmem:[%s491 + $0x10] sm:$0xff] %v500
                  %v502 = vld [vmem:[%s490 + $0x20] sm:$0xff]
                  %503 = vst [vmem:[%s491 + $0x18] sm:$0xff] %v502
                  %v504 = vld [vmem:[%s490 + $0x24] sm:$0xff]
                  %505 = vst [vmem:[%s491 + $0x18] sm:$0xff] %v504
                  %v506 = vld [vmem:[%s490 + $0x2c] sm:$0xff]
                  %507 = vst [vmem:[%s491 + $0x20] sm:$0xff] %v506
                  %v508 = vld [vmem:[%s490 + $0x30] sm:$0xff]
                  %509 = vst [vmem:[%s491 + $0x20] sm:$0xff] %v508
                  %v510 = vld [vmem:[%s490 + $0x38] sm:$0xff]
                  %511 = vst [vmem:[%s491 + $0x28] sm:$0xff] %v510
                  %v512 = vld [vmem:[%s490 + $0x3c] sm:$0xff]
                  %513 = vst [vmem:[%s491 + $0x28] sm:$0xff] %v512
                  %v514 = vld [vmem:[%s490 + $0x44] sm:$0xff]
                  %515 = vst [vmem:[%s491 + $0x30] sm:$0xff] %v514
                  %v516 = vld [vmem:[%s490 + $0x48] sm:$0xff]
                  %517 = vst [vmem:[%s491 + $0x30] sm:$0xff] %v516
                  %v518 = vld [vmem:[%s490 + $0x50] sm:$0xff]
                  %519 = vst [vmem:[%s491 + $0x38] sm:$0xff] %v518
                  %v520 = vld [vmem:[%s490 + $0x54] sm:$0xff]
                  %521 = vst [vmem:[%s491 + $0x38] sm:$0xff] %v520
                  %v522 = vld [vmem:[%s490 + $0x5c] sm:$0xff]
                  %523 = vst [vmem:[%s491 + $0x40] sm:$0xff] %v522
                  %v524 = vld [vmem:[%s490 + $0x60] sm:$0xff]
                  %525 = vst [vmem:[%s491 + $0x40] sm:$0xff] %v524
                  %v526 = vld [vmem:[%s490 + $0x68] sm:$0xff]
                  %527 = vst [vmem:[%s491 + $0x48] sm:$0xff] %v526
                  %v528 = vld [vmem:[%s490 + $0x6c] sm:$0xff]
                  %529 = vst [vmem:[%s491 + $0x48] sm:$0xff] %v528
                  %v530 = vld [vmem:[%s490 + $0x74] sm:$0xff]
                  %531 = vst [vmem:[%s491 + $0x50] sm:$0xff] %v530
                  %v532 = vld [vmem:[%s490 + $0x78] sm:$0xff]
                  %533 = vst [vmem:[%s491 + $0x50] sm:$0xff] %v532
                  %v534 = vld [vmem:[%s490 + $0x80] sm:$0xff]
                  %535 = vst [vmem:[%s491 + $0x58] sm:$0xff] %v534
                  %v536 = vld [vmem:[%s490 + $0x84] sm:$0xff]
                  %537 = vst [vmem:[%s491 + $0x58] sm:$0xff] %v536
                  %v538 = vld [vmem:[%s490 + $0x8c] sm:$0xff]
                  %539 = vst [vmem:[%s491 + $0x60] sm:$0xff] %v538
                  %v540 = vld [vmem:[%s490 + $0x90] sm:$0xff]
                  %541 = vst [vmem:[%s491 + $0x60] sm:$0xff] %v540
                  %v542 = vld [vmem:[%s490 + $0x98] sm:$0xff]
                  %543 = vst [vmem:[%s491 + $0x68] sm:$0xff] %v542
                  %v544 = vld [vmem:[%s490 + $0x9c] sm:$0xff]
                  %545 = vst [vmem:[%s491 + $0x68] sm:$0xff] %v544
                  %v546 = vld [vmem:[%s490 + $0xa4] sm:$0xff]
                  %547 = vst [vmem:[%s491 + $0x70] sm:$0xff] %v546
                  %v548 = vld [vmem:[%s490 + $0xa8] sm:$0xff]
                  %549 = vst [vmem:[%s491 + $0x70] sm:$0xff] %v548
                  %v550 = vld [vmem:[%s490 + $0xb0] sm:$0xff]
                  %551 = vst [vmem:[%s491 + $0x78] sm:$0xff] %v550
                  %v552 = vld [vmem:[%s490 + $0xb4] sm:$0xff]
                  %553 = vst [vmem:[%s491 + $0x78] sm:$0xff] %v552
                  %v554 = vld [vmem:[%s490 + $0xbc] sm:$0xff]
                  %555 = vst [vmem:[%s491 + $0x80] sm:$0xff] %v554
                  %v556 = vld [vmem:[%s490 + $0xc0] sm:$0xff]
                  %557 = vst [vmem:[%s491 + $0x80] sm:$0xff] %v556
                  %v558 = vld [vmem:[%s490 + $0xc8] sm:$0xff]
                  %559 = vst [vmem:[%s491 + $0x88] sm:$0xff] %v558
                  %v560 = vld [vmem:[%s490 + $0xcc] sm:$0xff]
                  %561 = vst [vmem:[%s491 + $0x88] sm:$0xff] %v560
                  %v562 = vld [vmem:[%s490 + $0xd4] sm:$0xff]
                  %563 = vst [vmem:[%s491 + $0x90] sm:$0xff] %v562
                  %v564 = vld [vmem:[%s490 + $0xd8] sm:$0xff]
                  %565 = vst [vmem:[%s491 + $0x90] sm:$0xff] %v564
                  %v566 = vld [vmem:[%s490 + $0xe0] sm:$0xff]
                  %567 = vst [vmem:[%s491 + $0x98] sm:$0xff] %v566
                  %v568 = vld [vmem:[%s490 + $0xe4] sm:$0xff]
                  %569 = vst [vmem:[%s491 + $0x98] sm:$0xff] %v568
                  %v570 = vld [vmem:[%s490 + $0xec] sm:$0xff]
                  %571 = vst [vmem:[%s491 + $0xa0] sm:$0xff] %v570
                  %v572 = vld [vmem:[%s490 + $0xf0] sm:$0xff]
                  %573 = vst [vmem:[%s491 + $0xa0] sm:$0xff] %v572
                  %v574 = vld [vmem:[%s490 + $0xf8] sm:$0xff]
                  %575 = vst [vmem:[%s491 + $0xa8] sm:$0xff] %v574
                  %v576 = vld [vmem:[%s490 + $0xfc] sm:$0xff]
                  %577 = vst [vmem:[%s491 + $0xa8] sm:$0xff] %v576
                  %v578 = vld [vmem:[%s490 + $0x104] sm:$0xff]
                  %579 = vst [vmem:[%s491 + $0xb0] sm:$0xff] %v578
                  %v580 = vld [vmem:[%s490 + $0x108] sm:$0xff]
                  %581 = vst [vmem:[%s491 + $0xb0] sm:$0xff] %v580
                  %v582 = vld [vmem:[%s490 + $0x110] sm:$0xff]
                  %583 = vst [vmem:[%s491 + $0xb8] sm:$0xff] %v582
                  %v584 = vld [vmem:[%s490 + $0x114] sm:$0xff]
                  %585 = vst [vmem:[%s491 + $0xb8] sm:$0xff] %v584
                  %v586 = vld [vmem:[%s490 + $0x11c] sm:$0xff]
                  %587 = vst [vmem:[%s491 + $0xc0] sm:$0xff] %v586
                  %v588 = vld [vmem:[%s490 + $0x120] sm:$0xff]
                  %589 = vst [vmem:[%s491 + $0xc0] sm:$0xff] %v588
                  %v590 = vld [vmem:[%s490 + $0x128] sm:$0xff]
                  %591 = vst [vmem:[%s491 + $0xc8] sm:$0xff] %v590
                  %v592 = vld [vmem:[%s490 + $0x12c] sm:$0xff]
                  %593 = vst [vmem:[%s491 + $0xc8] sm:$0xff] %v592
                  %v594 = vld [vmem:[%s490 + $0x134] sm:$0xff]
                  %595 = vst [vmem:[%s491 + $0xd0] sm:$0xff] %v594
                  %v596 = vld [vmem:[%s490 + $0x138] sm:$0xff]
                  %597 = vst [vmem:[%s491 + $0xd0] sm:$0xff] %v596
                  %v598 = vld [vmem:[%s490 + $0x140] sm:$0xff]
                  %599 = vst [vmem:[%s491 + $0xd8] sm:$0xff] %v598
                  %v600 = vld [vmem:[%s490 + $0x144] sm:$0xff]
                  %601 = vst [vmem:[%s491 + $0xd8] sm:$0xff] %v600
                  %v602 = vld [vmem:[%s490 + $0x14c] sm:$0xff]
                  %603 = vst [vmem:[%s491 + $0xe0] sm:$0xff] %v602
                  %v604 = vld [vmem:[%s490 + $0x150] sm:$0xff]
                  %605 = vst [vmem:[%s491 + $0xe0] sm:$0xff] %v604
                  %v606 = vld [vmem:[%s490 + $0x158] sm:$0xff]
                  %607 = vst [vmem:[%s491 + $0xe8] sm:$0xff] %v606
                  %v608 = vld [vmem:[%s490 + $0x15c] sm:$0xff]
                  %609 = vst [vmem:[%s491 + $0xe8] sm:$0xff] %v608
                  %v610 = vld [vmem:[%s490 + $0x164] sm:$0xff]
                  %611 = vst [vmem:[%s491 + $0xf0] sm:$0xff] %v610
                  %v612 = vld [vmem:[%s490 + $0x168] sm:$0xff]
                  %613 = vst [vmem:[%s491 + $0xf0] sm:$0xff] %v612
                  %v614 = vld [vmem:[%s490 + $0x170] sm:$0xff]
                  %615 = vst [vmem:[%s491 + $0xf8] sm:$0xff] %v614
                  %v616 = vld [vmem:[%s490 + $0x174] sm:$0xff]
                  %617 = vst [vmem:[%s491 + $0xf8] sm:$0xff] %v616
                  %v618 = vld [vmem:[%s490 + $0x17c] sm:$0xff]
                  %619 = vst [vmem:[%s491 + $0x100] sm:$0xff] %v618
                  %s620 = sadd.s32 1, %s489
                  %p621 = scmp.ge.s32.totalorder %s620, %s480
                  %s622 = scalar_select %p621, 0, %s620
                  %s623 = smul.u32 %s622, 16
                  %s624 = smul.u32 %s622, 16
                  %s625 = scalar_lea.vmem %s142, %s623
                  %s626 = scalar_lea.vmem %s134, %s624 [#allocation2]
                $region74: #{eenetwork_forward.5} parent=68 // loop_footer
                  %s486 = sadd.s32 %s484, 1
                $region75: #{eenetwork_forward.5} parent=68 // loop_footer_branch
                  %483 = sbr.rel target = $region71
                $region76: #{eenetwork_forward.5} parent=68 // loop_exit
                  _
                %s627 = sshrl.u32 %s479, 1
                %s628 = sand.u32 %s479, 1
                %s629 = smul.u32 %s627, 2
                %s630 = smul.u32 128, %s629
                %s631 = sshra.s32 %s630, 4
                %s632 = scalar_lea.vmem %s142, %s631
                %s633 = smul.u32 128, %s629
                %s634 = sshra.s32 %s633, 4
                %s635 = scalar_lea.vmem %s134, %s634 [#allocation2]
                // While loop
                $region77: #{eenetwork_forward.5} parent=68 // loop_pre_header
                  _
                $region78: #{eenetwork_forward.5} parent=68 // loop_header
                  %s639 = sphi 0, %s641
                  %p640 = scmp.ge.s32.totalorder %s639, %s628
                  %s644 = sphi 0, %s713
                  %s645 = sphi %s632, %s716
                  %s646 = sphi %s635, %s717
                $region79: #{eenetwork_forward.5} parent=68 // loop_header_branch
                  %643 = sbr.rel (%p640) target = $region83
                $region80: #{eenetwork_forward.5} parent=68 // loop_body
                  %v647 = vld [vmem:[%s645] sm:$0xff]
                  %648 = vst [vmem:[%s646] sm:$0xff] %v647
                  %v649 = vld [vmem:[%s645 + $0xc] sm:$0xff]
                  %650 = vst [vmem:[%s646 + $0x8] sm:$0xff] %v649
                  %v651 = vld [vmem:[%s645 + $0x18] sm:$0xff]
                  %652 = vst [vmem:[%s646 + $0x10] sm:$0xff] %v651
                  %v653 = vld [vmem:[%s645 + $0x24] sm:$0xff]
                  %654 = vst [vmem:[%s646 + $0x18] sm:$0xff] %v653
                  %v655 = vld [vmem:[%s645 + $0x30] sm:$0xff]
                  %656 = vst [vmem:[%s646 + $0x20] sm:$0xff] %v655
                  %v657 = vld [vmem:[%s645 + $0x3c] sm:$0xff]
                  %658 = vst [vmem:[%s646 + $0x28] sm:$0xff] %v657
                  %v659 = vld [vmem:[%s645 + $0x48] sm:$0xff]
                  %660 = vst [vmem:[%s646 + $0x30] sm:$0xff] %v659
                  %v661 = vld [vmem:[%s645 + $0x54] sm:$0xff]
                  %662 = vst [vmem:[%s646 + $0x38] sm:$0xff] %v661
                  %v663 = vld [vmem:[%s645 + $0x60] sm:$0xff]
                  %664 = vst [vmem:[%s646 + $0x40] sm:$0xff] %v663
                  %v665 = vld [vmem:[%s645 + $0x6c] sm:$0xff]
                  %666 = vst [vmem:[%s646 + $0x48] sm:$0xff] %v665
                  %v667 = vld [vmem:[%s645 + $0x78] sm:$0xff]
                  %668 = vst [vmem:[%s646 + $0x50] sm:$0xff] %v667
                  %v669 = vld [vmem:[%s645 + $0x84] sm:$0xff]
                  %670 = vst [vmem:[%s646 + $0x58] sm:$0xff] %v669
                  %v671 = vld [vmem:[%s645 + $0x90] sm:$0xff]
                  %672 = vst [vmem:[%s646 + $0x60] sm:$0xff] %v671
                  %v673 = vld [vmem:[%s645 + $0x9c] sm:$0xff]
                  %674 = vst [vmem:[%s646 + $0x68] sm:$0xff] %v673
                  %v675 = vld [vmem:[%s645 + $0xa8] sm:$0xff]
                  %676 = vst [vmem:[%s646 + $0x70] sm:$0xff] %v675
                  %v677 = vld [vmem:[%s645 + $0xb4] sm:$0xff]
                  %678 = vst [vmem:[%s646 + $0x78] sm:$0xff] %v677
                  %v679 = vld [vmem:[%s645 + $0xc0] sm:$0xff]
                  %680 = vst [vmem:[%s646 + $0x80] sm:$0xff] %v679
                  %v681 = vld [vmem:[%s645 + $0xcc] sm:$0xff]
                  %682 = vst [vmem:[%s646 + $0x88] sm:$0xff] %v681
                  %v683 = vld [vmem:[%s645 + $0xd8] sm:$0xff]
                  %684 = vst [vmem:[%s646 + $0x90] sm:$0xff] %v683
                  %v685 = vld [vmem:[%s645 + $0xe4] sm:$0xff]
                  %686 = vst [vmem:[%s646 + $0x98] sm:$0xff] %v685
                  %v687 = vld [vmem:[%s645 + $0xf0] sm:$0xff]
                  %688 = vst [vmem:[%s646 + $0xa0] sm:$0xff] %v687
                  %v689 = vld [vmem:[%s645 + $0xfc] sm:$0xff]
                  %690 = vst [vmem:[%s646 + $0xa8] sm:$0xff] %v689
                  %v691 = vld [vmem:[%s645 + $0x108] sm:$0xff]
                  %692 = vst [vmem:[%s646 + $0xb0] sm:$0xff] %v691
                  %v693 = vld [vmem:[%s645 + $0x114] sm:$0xff]
                  %694 = vst [vmem:[%s646 + $0xb8] sm:$0xff] %v693
                  %v695 = vld [vmem:[%s645 + $0x120] sm:$0xff]
                  %696 = vst [vmem:[%s646 + $0xc0] sm:$0xff] %v695
                  %v697 = vld [vmem:[%s645 + $0x12c] sm:$0xff]
                  %698 = vst [vmem:[%s646 + $0xc8] sm:$0xff] %v697
                  %v699 = vld [vmem:[%s645 + $0x138] sm:$0xff]
                  %700 = vst [vmem:[%s646 + $0xd0] sm:$0xff] %v699
                  %v701 = vld [vmem:[%s645 + $0x144] sm:$0xff]
                  %702 = vst [vmem:[%s646 + $0xd8] sm:$0xff] %v701
                  %v703 = vld [vmem:[%s645 + $0x150] sm:$0xff]
                  %704 = vst [vmem:[%s646 + $0xe0] sm:$0xff] %v703
                  %v705 = vld [vmem:[%s645 + $0x15c] sm:$0xff]
                  %706 = vst [vmem:[%s646 + $0xe8] sm:$0xff] %v705
                  %v707 = vld [vmem:[%s645 + $0x168] sm:$0xff]
                  %708 = vst [vmem:[%s646 + $0xf0] sm:$0xff] %v707
                  %v709 = vld [vmem:[%s645 + $0x174] sm:$0xff]
                  %710 = vst [vmem:[%s646 + $0xf8] sm:$0xff] %v709
                  %s711 = sadd.s32 1, %s644
                  %p712 = scmp.ge.s32.totalorder %s711, %s628
                  %s713 = scalar_select %p712, 0, %s711
                  %s714 = smul.u32 %s713, 8
                  %s715 = smul.u32 %s713, 8
                  %s716 = scalar_lea.vmem %s632, %s714
                  %s717 = scalar_lea.vmem %s635, %s715 [#allocation2]
                $region81: #{eenetwork_forward.5} parent=68 // loop_footer
                  %s641 = sadd.s32 %s639, 1
                $region82: #{eenetwork_forward.5} parent=68 // loop_footer_branch
                  %638 = sbr.rel target = $region78
                $region83: #{eenetwork_forward.5} parent=68 // loop_exit
                  _
                %s718 = sshllo.u32 0, %s474
                loop: start=0, step=1, limit=1
                $region84: #{eenetwork_forward.5} parent=68 // loop_pre_header
                  _
                $region85: #{eenetwork_forward.5} parent=68 // loop_header
                  %s720 = sphi 0, %s724
                  %p721 = scmp.ge.s32.totalorder %s720, 1
                  %s725 = sphi %s476, %s476
                  %s726 = sphi %s478, %s478
                $region86: #{eenetwork_forward.5} parent=68 // loop_header_branch
                  %723 = sbr.rel (%p721) target = $region90
                $region87: #{eenetwork_forward.5} parent=68 // loop_body
                  %v727 = vld [vmem:[%s725] sm:%s718]
                  %728 = vst [vmem:[%s726] sm:%s718] %v727
                  %v729 = vld [vmem:[%s725 + $0xc] sm:%s718]
                  %730 = vst [vmem:[%s726 + $0x8] sm:%s718] %v729
                  %v731 = vld [vmem:[%s725 + $0x18] sm:%s718]
                  %732 = vst [vmem:[%s726 + $0x10] sm:%s718] %v731
                  %v733 = vld [vmem:[%s725 + $0x24] sm:%s718]
                  %734 = vst [vmem:[%s726 + $0x18] sm:%s718] %v733
                  %v735 = vld [vmem:[%s725 + $0x30] sm:%s718]
                  %736 = vst [vmem:[%s726 + $0x20] sm:%s718] %v735
                  %v737 = vld [vmem:[%s725 + $0x3c] sm:%s718]
                  %738 = vst [vmem:[%s726 + $0x28] sm:%s718] %v737
                  %v739 = vld [vmem:[%s725 + $0x48] sm:%s718]
                  %740 = vst [vmem:[%s726 + $0x30] sm:%s718] %v739
                  %v741 = vld [vmem:[%s725 + $0x54] sm:%s718]
                  %742 = vst [vmem:[%s726 + $0x38] sm:%s718] %v741
                  %v743 = vld [vmem:[%s725 + $0x60] sm:%s718]
                  %744 = vst [vmem:[%s726 + $0x40] sm:%s718] %v743
                  %v745 = vld [vmem:[%s725 + $0x6c] sm:%s718]
                  %746 = vst [vmem:[%s726 + $0x48] sm:%s718] %v745
                  %v747 = vld [vmem:[%s725 + $0x78] sm:%s718]
                  %748 = vst [vmem:[%s726 + $0x50] sm:%s718] %v747
                  %v749 = vld [vmem:[%s725 + $0x84] sm:%s718]
                  %750 = vst [vmem:[%s726 + $0x58] sm:%s718] %v749
                  %v751 = vld [vmem:[%s725 + $0x90] sm:%s718]
                  %752 = vst [vmem:[%s726 + $0x60] sm:%s718] %v751
                  %v753 = vld [vmem:[%s725 + $0x9c] sm:%s718]
                  %754 = vst [vmem:[%s726 + $0x68] sm:%s718] %v753
                  %v755 = vld [vmem:[%s725 + $0xa8] sm:%s718]
                  %756 = vst [vmem:[%s726 + $0x70] sm:%s718] %v755
                  %v757 = vld [vmem:[%s725 + $0xb4] sm:%s718]
                  %758 = vst [vmem:[%s726 + $0x78] sm:%s718] %v757
                  %v759 = vld [vmem:[%s725 + $0xc0] sm:%s718]
                  %760 = vst [vmem:[%s726 + $0x80] sm:%s718] %v759
                  %v761 = vld [vmem:[%s725 + $0xcc] sm:%s718]
                  %762 = vst [vmem:[%s726 + $0x88] sm:%s718] %v761
                  %v763 = vld [vmem:[%s725 + $0xd8] sm:%s718]
                  %764 = vst [vmem:[%s726 + $0x90] sm:%s718] %v763
                  %v765 = vld [vmem:[%s725 + $0xe4] sm:%s718]
                  %766 = vst [vmem:[%s726 + $0x98] sm:%s718] %v765
                  %v767 = vld [vmem:[%s725 + $0xf0] sm:%s718]
                  %768 = vst [vmem:[%s726 + $0xa0] sm:%s718] %v767
                  %v769 = vld [vmem:[%s725 + $0xfc] sm:%s718]
                  %770 = vst [vmem:[%s726 + $0xa8] sm:%s718] %v769
                  %v771 = vld [vmem:[%s725 + $0x108] sm:%s718]
                  %772 = vst [vmem:[%s726 + $0xb0] sm:%s718] %v771
                  %v773 = vld [vmem:[%s725 + $0x114] sm:%s718]
                  %774 = vst [vmem:[%s726 + $0xb8] sm:%s718] %v773
                  %v775 = vld [vmem:[%s725 + $0x120] sm:%s718]
                  %776 = vst [vmem:[%s726 + $0xc0] sm:%s718] %v775
                  %v777 = vld [vmem:[%s725 + $0x12c] sm:%s718]
                  %778 = vst [vmem:[%s726 + $0xc8] sm:%s718] %v777
                  %v779 = vld [vmem:[%s725 + $0x138] sm:%s718]
                  %780 = vst [vmem:[%s726 + $0xd0] sm:%s718] %v779
                  %v781 = vld [vmem:[%s725 + $0x144] sm:%s718]
                  %782 = vst [vmem:[%s726 + $0xd8] sm:%s718] %v781
                  %v783 = vld [vmem:[%s725 + $0x150] sm:%s718]
                  %784 = vst [vmem:[%s726 + $0xe0] sm:%s718] %v783
                  %v785 = vld [vmem:[%s725 + $0x15c] sm:%s718]
                  %786 = vst [vmem:[%s726 + $0xe8] sm:%s718] %v785
                  %v787 = vld [vmem:[%s725 + $0x168] sm:%s718]
                  %788 = vst [vmem:[%s726 + $0xf0] sm:%s718] %v787
                  %v789 = vld [vmem:[%s725 + $0x174] sm:%s718]
                  %790 = vst [vmem:[%s726 + $0xf8] sm:%s718] %v789
                $region88: #{eenetwork_forward.5} parent=68 // loop_footer
                  %s724 = sadd.s32 1, %s720
                $region89: #{eenetwork_forward.5} parent=68 // loop_footer_branch
                  %719 = sbr.rel target = $region85
                $region90: #{eenetwork_forward.5} parent=68 // loop_exit
                  _
              $region69: #{eenetwork_forward.5} parent=35 // pred_fallthru
                _
            $region36: #{eenetwork_forward.5} parent=31 // pred_fallthru
              _
            // Predicated region
            $region37: #{eenetwork_forward.5} parent=31 // pred_check
              %p151 = pneg %p147
            $region38: #{eenetwork_forward.5} parent=31 // pred_check_branch
              %153 = sbr.rel (%p151) target = $region40
            $region39: #{eenetwork_forward.5} parent=31 // pred_region
              %s154 = sshllo.u32 0, %s143
              loop: start=0, step=1, limit=1
              $region41: #{eenetwork_forward.5} parent=39 // loop_pre_header
                _
              $region42: #{eenetwork_forward.5} parent=39 // loop_header
                %s156 = sphi 0, %s160
                %p157 = scmp.ge.s32.totalorder %s156, 1
                %s161 = sphi %s142, %s142
                %s162 = sphi %s134, %s134
              $region43: #{eenetwork_forward.5} parent=39 // loop_header_branch
                %159 = sbr.rel (%p157) target = $region47
              $region44: #{eenetwork_forward.5} parent=39 // loop_body
                %v163 = vld [vmem:[%s161] sm:%s154]
                %164 = vst [vmem:[%s162] sm:%s154] %v163
                %v165 = vld [vmem:[%s161 + $0xc] sm:%s154]
                %166 = vst [vmem:[%s162 + $0x8] sm:%s154] %v165
                %v167 = vld [vmem:[%s161 + $0x18] sm:%s154]
                %168 = vst [vmem:[%s162 + $0x10] sm:%s154] %v167
                %v169 = vld [vmem:[%s161 + $0x24] sm:%s154]
                %170 = vst [vmem:[%s162 + $0x18] sm:%s154] %v169
                %v171 = vld [vmem:[%s161 + $0x30] sm:%s154]
                %172 = vst [vmem:[%s162 + $0x20] sm:%s154] %v171
                %v173 = vld [vmem:[%s161 + $0x3c] sm:%s154]
                %174 = vst [vmem:[%s162 + $0x28] sm:%s154] %v173
                %v175 = vld [vmem:[%s161 + $0x48] sm:%s154]
                %176 = vst [vmem:[%s162 + $0x30] sm:%s154] %v175
                %v177 = vld [vmem:[%s161 + $0x54] sm:%s154]
                %178 = vst [vmem:[%s162 + $0x38] sm:%s154] %v177
                %v179 = vld [vmem:[%s161 + $0x60] sm:%s154]
                %180 = vst [vmem:[%s162 + $0x40] sm:%s154] %v179
                %v181 = vld [vmem:[%s161 + $0x6c] sm:%s154]
                %182 = vst [vmem:[%s162 + $0x48] sm:%s154] %v181
                %v183 = vld [vmem:[%s161 + $0x78] sm:%s154]
                %184 = vst [vmem:[%s162 + $0x50] sm:%s154] %v183
                %v185 = vld [vmem:[%s161 + $0x84] sm:%s154]
                %186 = vst [vmem:[%s162 + $0x58] sm:%s154] %v185
                %v187 = vld [vmem:[%s161 + $0x90] sm:%s154]
                %188 = vst [vmem:[%s162 + $0x60] sm:%s154] %v187
                %v189 = vld [vmem:[%s161 + $0x9c] sm:%s154]
                %190 = vst [vmem:[%s162 + $0x68] sm:%s154] %v189
                %v191 = vld [vmem:[%s161 + $0xa8] sm:%s154]
                %192 = vst [vmem:[%s162 + $0x70] sm:%s154] %v191
                %v193 = vld [vmem:[%s161 + $0xb4] sm:%s154]
                %194 = vst [vmem:[%s162 + $0x78] sm:%s154] %v193
                %v195 = vld [vmem:[%s161 + $0xc0] sm:%s154]
                %196 = vst [vmem:[%s162 + $0x80] sm:%s154] %v195
                %v197 = vld [vmem:[%s161 + $0xcc] sm:%s154]
                %198 = vst [vmem:[%s162 + $0x88] sm:%s154] %v197
                %v199 = vld [vmem:[%s161 + $0xd8] sm:%s154]
                %200 = vst [vmem:[%s162 + $0x90] sm:%s154] %v199
                %v201 = vld [vmem:[%s161 + $0xe4] sm:%s154]
                %202 = vst [vmem:[%s162 + $0x98] sm:%s154] %v201
                %v203 = vld [vmem:[%s161 + $0xf0] sm:%s154]
                %204 = vst [vmem:[%s162 + $0xa0] sm:%s154] %v203
                %v205 = vld [vmem:[%s161 + $0xfc] sm:%s154]
                %206 = vst [vmem:[%s162 + $0xa8] sm:%s154] %v205
                %v207 = vld [vmem:[%s161 + $0x108] sm:%s154]
                %208 = vst [vmem:[%s162 + $0xb0] sm:%s154] %v207
                %v209 = vld [vmem:[%s161 + $0x114] sm:%s154]
                %210 = vst [vmem:[%s162 + $0xb8] sm:%s154] %v209
                %v211 = vld [vmem:[%s161 + $0x120] sm:%s154]
                %212 = vst [vmem:[%s162 + $0xc0] sm:%s154] %v211
                %v213 = vld [vmem:[%s161 + $0x12c] sm:%s154]
                %214 = vst [vmem:[%s162 + $0xc8] sm:%s154] %v213
                %v215 = vld [vmem:[%s161 + $0x138] sm:%s154]
                %216 = vst [vmem:[%s162 + $0xd0] sm:%s154] %v215
                %v217 = vld [vmem:[%s161 + $0x144] sm:%s154]
                %218 = vst [vmem:[%s162 + $0xd8] sm:%s154] %v217
                %v219 = vld [vmem:[%s161 + $0x150] sm:%s154]
                %220 = vst [vmem:[%s162 + $0xe0] sm:%s154] %v219
                %v221 = vld [vmem:[%s161 + $0x15c] sm:%s154]
                %222 = vst [vmem:[%s162 + $0xe8] sm:%s154] %v221
                %v223 = vld [vmem:[%s161 + $0x168] sm:%s154]
                %224 = vst [vmem:[%s162 + $0xf0] sm:%s154] %v223
                %v225 = vld [vmem:[%s161 + $0x174] sm:%s154]
                %226 = vst [vmem:[%s162 + $0xf8] sm:%s154] %v225
              $region45: #{eenetwork_forward.5} parent=39 // loop_footer
                %s160 = sadd.s32 1, %s156
              $region46: #{eenetwork_forward.5} parent=39 // loop_footer_branch
                %155 = sbr.rel target = $region42
              $region47: #{eenetwork_forward.5} parent=39 // loop_exit
                _
            $region40: #{eenetwork_forward.5} parent=31 // pred_fallthru
              _
          $region32: #{eenetwork_forward.5} parent=27 // pred_fallthru
            _
          %791 = vnop
        $region28: #{eenetwork_forward.5} parent=23 // pred_fallthru
          _
      $region24: #{eenetwork_forward.5} parent=5 // pred_fallthru
        _
      %p792 = scmp.le.s32.totalorder 1, %s9
      %p793 = scmp.lt.s32.totalorder %s9, 3
      %p794 = pnand %p792, %p793
      %p795 = pneg %p794
      // Predicated region
      $region91: #{eenetwork_forward.5} parent=5 // pred_check
        _
      $region92: #{eenetwork_forward.5} parent=5 // pred_check_branch
        %797 = sbr.rel (%p794) target = $region94
      $region93: #{eenetwork_forward.5} parent=5 // pred_region
        %s798 = ssub.s32 %s9, 1
        %s799 = sand.u32 %s22, 1
        %s800 = sand.u32 %s22, 1
        %s801 = smul.addr %s800, 256
        %s802 = scalar_lea.vmem [#allocation2], %s801
        // Predicated region
        $region95: #{eenetwork_forward.5} parent=93 // pred_check
          %p803 = pneg %p35
        $region96: #{eenetwork_forward.5} parent=93 // pred_check_branch
          %805 = sbr.rel (%p803) target = $region98
        $region97: #{eenetwork_forward.5} parent=93 // pred_region
          _
        $region98: #{eenetwork_forward.5} parent=93 // pred_fallthru
          _
        %s806 = sand.u32 %s22, 1
        %s807 = sand.u32 %s22, 1
        %s808 = smul.addr %s807, 256
        %s809 = scalar_lea.vmem [#allocation2], %s808
        %p810 = pneg %p35
        %p811 = pneg %p32
        %p812 = pneg %p56
        %p813 = pneg %p53
        %p814 = pneg %p77
        %p815 = pneg %p74
        %p816 = pneg %p103
        %p817 = pneg %p100
        %s818 = sand.u32 %s90, 1
        %s819 = sand.u32 %s90, 1
        %s820 = smul.addr %s819, 16
        %s821 = scalar_lea.vmem [#allocation3], %s820
        %s822 = smul.u32 2, %s14
        %s823 = ssub.s32 3, %s822
        %p824 = scmp.lt.s32.totalorder %s823, 2
        %s825 = scalar_select %p824, %s823, 2
        %s826 = smul.u32 2048, %s825
        %s827 = smul.u32 2, %s14
        %s828 = ssub.s32 3, %s827
        %p829 = scmp.lt.s32.totalorder %s828, 2
        %s830 = scalar_select %p829, %s828, 2
        %s831 = smul.u32 128, %s830
        %v832 = vld [vmem:[%s1] sm:$0xff]
        %v833 = vld [vmem:[%s1 + $0x8] sm:$0xff]
        %v834 = vld [vmem:[%s802] sm:$0xff]
        %v835 = vld [vmem:[%s802 + $0x8] sm:$0xff]
        %v836 = vld [vmem:[%s802 + $0x10] sm:$0xff]
        %v837 = vld [vmem:[%s802 + $0x18] sm:$0xff]
        %v838 = vld [vmem:[%s802 + $0x20] sm:$0xff]
        %v839 = vld [vmem:[%s802 + $0x28] sm:$0xff]
        %v840 = vld [vmem:[%s802 + $0x30] sm:$0xff]
        %v841 = vld [vmem:[%s802 + $0x38] sm:$0xff]
        %v842 = vld [vmem:[%s802 + $0x40] sm:$0xff]
        %v843 = vld [vmem:[%s802 + $0x48] sm:$0xff]
        %v844 = vld [vmem:[%s802 + $0x50] sm:$0xff]
        %v845 = vld [vmem:[%s802 + $0x58] sm:$0xff]
        %v846 = vld [vmem:[%s802 + $0x60] sm:$0xff]
        %v847 = vld [vmem:[%s802 + $0x68] sm:$0xff]
        %v848 = vld [vmem:[%s802 + $0x70] sm:$0xff]
        %v849 = vld [vmem:[%s802 + $0x78] sm:$0xff]
        %v850 = vld [vmem:[%s802 + $0x80] sm:$0xff]
        %v851 = vld [vmem:[%s802 + $0x88] sm:$0xff]
        %v852 = vld [vmem:[%s802 + $0x90] sm:$0xff]
        %v853 = vld [vmem:[%s802 + $0x98] sm:$0xff]
        %v854 = vld [vmem:[%s802 + $0xa0] sm:$0xff]
        %v855 = vld [vmem:[%s802 + $0xa8] sm:$0xff]
        %v856 = vld [vmem:[%s802 + $0xb0] sm:$0xff]
        %v857 = vld [vmem:[%s802 + $0xb8] sm:$0xff]
        %v858 = vld [vmem:[%s802 + $0xc0] sm:$0xff]
        %v859 = vld [vmem:[%s802 + $0xc8] sm:$0xff]
        %v860 = vld [vmem:[%s802 + $0xd0] sm:$0xff]
        %v861 = vld [vmem:[%s802 + $0xd8] sm:$0xff]
        %v862 = vld [vmem:[%s802 + $0xe0] sm:$0xff]
        %v863 = vld [vmem:[%s802 + $0xe8] sm:$0xff]
        %v864 = vld [vmem:[%s802 + $0xf0] sm:$0xff]
        %v865 = vld [vmem:[%s802 + $0xf8] sm:$0xff]
        %v866 = vld [vmem:[%s2] sm:$0xff]
        %v867 = vld [vmem:[%s2 + $0x8] sm:$0xff]
        %869 = vset.pattern.permute.xlu0 0
        %870 = vperm.xlu0 %869, %v866
        %v871 = vpop.permute.xlu0 %870
        %874 = vset.pattern.permute.xlu0 0
        %875 = vperm.xlu0 %874, %v867
        %v876 = vpop.permute.xlu0 %875
        %v880 = vunpack.c.l.b16 %v832
        %v881 = vunpack.c.h.b16 %v832
        %v882 = vunpack.c.l.b16 %v833
        %v883 = vunpack.c.h.b16 %v833
        %v884 = vpack.c.b16 %v882, %v880
        %v885 = vpack.c.b16 %v883, %v881
        %v920 = vunpack.c.l.b16 %v834
        %v921 = vunpack.c.h.b16 %v834
        %v922 = vunpack.c.l.b16 %v835
        %v923 = vunpack.c.h.b16 %v835
        %v924 = vunpack.c.l.b16 %v836
        %v925 = vunpack.c.h.b16 %v836
        %v926 = vunpack.c.l.b16 %v837
        %v927 = vunpack.c.h.b16 %v837
        %v928 = vunpack.c.l.b16 %v838
        %v929 = vunpack.c.h.b16 %v838
        %v930 = vunpack.c.l.b16 %v839
        %v931 = vunpack.c.h.b16 %v839
        %v932 = vunpack.c.l.b16 %v840
        %v933 = vunpack.c.h.b16 %v840
        %v934 = vunpack.c.l.b16 %v841
        %v935 = vunpack.c.h.b16 %v841
        %v936 = vunpack.c.l.b16 %v842
        %v937 = vunpack.c.h.b16 %v842
        %v938 = vunpack.c.l.b16 %v843
        %v939 = vunpack.c.h.b16 %v843
        %v940 = vunpack.c.l.b16 %v844
        %v941 = vunpack.c.h.b16 %v844
        %v942 = vunpack.c.l.b16 %v845
        %v943 = vunpack.c.h.b16 %v845
        %v944 = vunpack.c.l.b16 %v846
        %v945 = vunpack.c.h.b16 %v846
        %v946 = vunpack.c.l.b16 %v847
        %v947 = vunpack.c.h.b16 %v847
        %v948 = vunpack.c.l.b16 %v848
        %v949 = vunpack.c.h.b16 %v848
        %v950 = vunpack.c.l.b16 %v849
        %v951 = vunpack.c.h.b16 %v849
        %v952 = vunpack.c.l.b16 %v850
        %v953 = vunpack.c.h.b16 %v850
        %v954 = vunpack.c.l.b16 %v851
        %v955 = vunpack.c.h.b16 %v851
        %v956 = vunpack.c.l.b16 %v852
        %v957 = vunpack.c.h.b16 %v852
        %v958 = vunpack.c.l.b16 %v853
        %v959 = vunpack.c.h.b16 %v853
        %v960 = vunpack.c.l.b16 %v854
        %v961 = vunpack.c.h.b16 %v854
        %v962 = vunpack.c.l.b16 %v855
        %v963 = vunpack.c.h.b16 %v855
        %v964 = vunpack.c.l.b16 %v856
        %v965 = vunpack.c.h.b16 %v856
        %v966 = vunpack.c.l.b16 %v857
        %v967 = vunpack.c.h.b16 %v857
        %v968 = vunpack.c.l.b16 %v858
        %v969 = vunpack.c.h.b16 %v858
        %v970 = vunpack.c.l.b16 %v859
        %v971 = vunpack.c.h.b16 %v859
        %v972 = vunpack.c.l.b16 %v860
        %v973 = vunpack.c.h.b16 %v860
        %v974 = vunpack.c.l.b16 %v861
        %v975 = vunpack.c.h.b16 %v861
        %v976 = vunpack.c.l.b16 %v862
        %v977 = vunpack.c.h.b16 %v862
        %v978 = vunpack.c.l.b16 %v863
        %v979 = vunpack.c.h.b16 %v863
        %v980 = vunpack.c.l.b16 %v864
        %v981 = vunpack.c.h.b16 %v864
        %v982 = vunpack.c.l.b16 %v865
        %v983 = vunpack.c.h.b16 %v865
        %v984 = vpack.c.b16 %v922, %v920
        %v985 = vpack.c.b16 %v923, %v921
        %v986 = vpack.c.b16 %v926, %v924
        %v987 = vpack.c.b16 %v927, %v925
        %v988 = vpack.c.b16 %v930, %v928
        %v989 = vpack.c.b16 %v931, %v929
        %v990 = vpack.c.b16 %v934, %v932
        %v991 = vpack.c.b16 %v935, %v933
        %v992 = vpack.c.b16 %v938, %v936
        %v993 = vpack.c.b16 %v939, %v937
        %v994 = vpack.c.b16 %v942, %v940
        %v995 = vpack.c.b16 %v943, %v941
        %v996 = vpack.c.b16 %v946, %v944
        %v997 = vpack.c.b16 %v947, %v945
        %v998 = vpack.c.b16 %v950, %v948
        %v999 = vpack.c.b16 %v951, %v949
        %v1000 = vpack.c.b16 %v954, %v952
        %v1001 = vpack.c.b16 %v955, %v953
        %v1002 = vpack.c.b16 %v958, %v956
        %v1003 = vpack.c.b16 %v959, %v957
        %v1004 = vpack.c.b16 %v962, %v960
        %v1005 = vpack.c.b16 %v963, %v961
        %v1006 = vpack.c.b16 %v966, %v964
        %v1007 = vpack.c.b16 %v967, %v965
        %v1008 = vpack.c.b16 %v970, %v968
        %v1009 = vpack.c.b16 %v971, %v969
        %v1010 = vpack.c.b16 %v974, %v972
        %v1011 = vpack.c.b16 %v975, %v973
        %v1012 = vpack.c.b16 %v978, %v976
        %v1013 = vpack.c.b16 %v979, %v977
        %v1014 = vpack.c.b16 %v982, %v980
        %v1015 = vpack.c.b16 %v983, %v981
        %1048 = vmatprep.subr.bf16.mxu0 %v985
        %1049 = vmatpush1.bf16.msra.mxu0 %v984
        %1050 = vmatprep.subr.bf16.mxu0 %v987
        %1051 = vmatpush1.bf16.msra.mxu0 %v986
        %1052 = vmatprep.subr.bf16.mxu0 %v989
        %1053 = vmatpush1.bf16.msra.mxu0 %v988
        %1054 = vmatprep.subr.bf16.mxu0 %v991
        %1055 = vmatpush1.bf16.msra.mxu0 %v990
        %1056 = vmatprep.subr.bf16.mxu0 %v993
        %1057 = vmatpush1.bf16.msra.mxu0 %v992
        %1058 = vmatprep.subr.bf16.mxu0 %v995
        %1059 = vmatpush1.bf16.msra.mxu0 %v994
        %1060 = vmatprep.subr.bf16.mxu0 %v997
        %1061 = vmatpush1.bf16.msra.mxu0 %v996
        %1062 = vmatprep.subr.bf16.mxu0 %v999
        %1063 = vmatpush1.bf16.msra.mxu0 %v998
        %1064 = vmatprep.subr.bf16.mxu0 %v1001
        %1065 = vmatpush1.bf16.msra.mxu0 %v1000
        %1066 = vmatprep.subr.bf16.mxu0 %v1003
        %1067 = vmatpush1.bf16.msra.mxu0 %v1002
        %1068 = vmatprep.subr.bf16.mxu0 %v1005
        %1069 = vmatpush1.bf16.msra.mxu0 %v1004
        %1070 = vmatprep.subr.bf16.mxu0 %v1007
        %1071 = vmatpush1.bf16.msra.mxu0 %v1006
        %1072 = vmatprep.subr.bf16.mxu0 %v1009
        %1073 = vmatpush1.bf16.msra.mxu0 %v1008
        %1074 = vmatprep.subr.bf16.mxu0 %v1011
        %1075 = vmatpush1.bf16.msra.mxu0 %v1010
        %1076 = vmatprep.subr.bf16.mxu0 %v1013
        %1077 = vmatpush1.bf16.msra.mxu0 %v1012
        %1078 = vmatprep.subr.bf16.mxu0 %v1015
        %1079 = vmatpush1.bf16.msra.mxu0 %v1014
        %1080 = vmatprep.mubr.bf16.mxu0 %v885
        %1081 = vmatmul.mubr.bf16.gmra.mrb[0].mxu0 %v884
        %v1082 = vpop.f32.mrb[0].mxu0
        %v1083 = vadd.f32 %v871, %v1082
        %v1084 = vpop.f32.mrb[0].mxu0
        %v1085 = vadd.f32 %v871, %v1084
        %v1086 = vpop.f32.mrb[0].mxu0
        %v1087 = vadd.f32 %v876, %v1086
        %v1088 = vpop.f32.mrb[0].mxu0
        %v1089 = vadd.f32 %v876, %v1088
        %1090 = vdwg.mxu0
        %v1091 = vmax.f32 %v1083, 0.0
        %v1092 = vmax.f32 %v1085, 0.0
        %v1093 = vmax.f32 %v1087, 0.0
        %v1094 = vmax.f32 %v1089, 0.0
        %v1095 = vpack.c.bf16 %v1093, %v1091
        %v1096 = vpack.c.bf16 %v1094, %v1092
        %v1099 = vunpack.c.l.b16 %v1095
        %v1100 = vunpack.c.l.b16 %v1096
        %v1101 = vunpack.c.h.b16 %v1095
        %v1102 = vunpack.c.h.b16 %v1096
        %v1103 = vpack.c.b16 %v1100, %v1099
        %v1104 = vpack.c.b16 %v1102, %v1101
        %1107 = vst [vmem:[%s821] sm:$0xff] %v1103
        %1108 = vst [vmem:[%s821 + $0x8] sm:$0xff] %v1104
        %s1109 = sand.u32 %s90, 1
        %s1110 = sand.u32 %s90, 1
        %s1111 = smul.addr %s1110, 16
        %s1112 = scalar_lea.vmem [#allocation3], %s1111
        // Predicated region
        $region99: #{eenetwork_forward.5} parent=93 // pred_check
          %p1113 = pneg %p100
        $region100: #{eenetwork_forward.5} parent=93 // pred_check_branch
          %1115 = sbr.rel (%p1113) target = $region102
        $region101: #{eenetwork_forward.5} parent=93 // pred_region
          %s1116 = smul.u32 2, %s14
          %s1117 = ssub.s32 3, %s1116
          %p1118 = scmp.lt.s32.totalorder %s1117, 2
          %s1119 = scalar_select %p1118, %s1117, 2
          %s1120 = smul.u32 128, %s1119
          %p1121 = scmp.ne.s32.totalorder 0, %s1120
          %s1122 = smul.addr %s1116, 4
          %s1123 = scalar_lea.vmem %s3, %s1122
          %s1124 = smul.u32 %s1119, 4
          // Predicated region
          $region103: #{eenetwork_forward.5} parent=101 // pred_check
            %p1125 = pneg %p1121
          $region104: #{eenetwork_forward.5} parent=101 // pred_check_branch
            %1127 = sbr.rel (%p1125) target = $region106
          $region105: #{eenetwork_forward.5} parent=101 // pred_region
            %p1128 = scmp.lt.u32.totalorder %s1124, 8
            %p1129 = pneg %p1128
            // Predicated region
            $region107: #{eenetwork_forward.5} parent=105 // pred_check
              _
            $region108: #{eenetwork_forward.5} parent=105 // pred_check_branch
              %1131 = sbr.rel (%p1128) target = $region110
            $region109: #{eenetwork_forward.5} parent=105 // pred_region
              %s1148 = sand.u32 %s1124, 7
              %p1149 = scmp.eq.s32.totalorder %s1148, 0
              // Predicated region
              $region122: #{eenetwork_forward.5} parent=109 // pred_check
                %p1150 = pneg %p1149
              $region123: #{eenetwork_forward.5} parent=109 // pred_check_branch
                %1152 = sbr.rel (%p1150) target = $region125
              $region124: #{eenetwork_forward.5} parent=109 // pred_region
                %s1153 = sshrl.u32 %s1124, 3
                %s1154 = sshrl.u32 %s1153, 5
                // While loop
                $region126: #{eenetwork_forward.5} parent=124 // loop_pre_header
                  _
                $region127: #{eenetwork_forward.5} parent=124 // loop_header
                  %s1158 = sphi 0, %s1160
                  %p1159 = scmp.ge.s32.totalorder %s1158, %s1154
                  %s1163 = sphi 0, %s1296
                  %s1164 = sphi %s1112, %s1299
                  %s1165 = sphi %s1123, %s1300
                $region128: #{eenetwork_forward.5} parent=124 // loop_header_branch
                  %1162 = sbr.rel (%p1159) target = $region132
                $region129: #{eenetwork_forward.5} parent=124 // loop_body
                  %v1166 = vld [vmem:[%s1164] sm:$0xff]
                  %1167 = vst [vmem:[%s1165] sm:$0xff] %v1166
                  %v1168 = vld [vmem:[%s1164 + $0x8] sm:$0xff]
                  %1169 = vst [vmem:[%s1165 + $0x8] sm:$0xff] %v1168
                  %v1170 = vld [vmem:[%s1164 + $0x10] sm:$0xff]
                  %1171 = vst [vmem:[%s1165 + $0x10] sm:$0xff] %v1170
                  %v1172 = vld [vmem:[%s1164 + $0x18] sm:$0xff]
                  %1173 = vst [vmem:[%s1165 + $0x18] sm:$0xff] %v1172
                  %v1174 = vld [vmem:[%s1164 + $0x20] sm:$0xff]
                  %1175 = vst [vmem:[%s1165 + $0x20] sm:$0xff] %v1174
                  %v1176 = vld [vmem:[%s1164 + $0x28] sm:$0xff]
                  %1177 = vst [vmem:[%s1165 + $0x28] sm:$0xff] %v1176
                  %v1178 = vld [vmem:[%s1164 + $0x30] sm:$0xff]
                  %1179 = vst [vmem:[%s1165 + $0x30] sm:$0xff] %v1178
                  %v1180 = vld [vmem:[%s1164 + $0x38] sm:$0xff]
                  %1181 = vst [vmem:[%s1165 + $0x38] sm:$0xff] %v1180
                  %v1182 = vld [vmem:[%s1164 + $0x40] sm:$0xff]
                  %1183 = vst [vmem:[%s1165 + $0x40] sm:$0xff] %v1182
                  %v1184 = vld [vmem:[%s1164 + $0x48] sm:$0xff]
                  %1185 = vst [vmem:[%s1165 + $0x48] sm:$0xff] %v1184
                  %v1186 = vld [vmem:[%s1164 + $0x50] sm:$0xff]
                  %1187 = vst [vmem:[%s1165 + $0x50] sm:$0xff] %v1186
                  %v1188 = vld [vmem:[%s1164 + $0x58] sm:$0xff]
                  %1189 = vst [vmem:[%s1165 + $0x58] sm:$0xff] %v1188
                  %v1190 = vld [vmem:[%s1164 + $0x60] sm:$0xff]
                  %1191 = vst [vmem:[%s1165 + $0x60] sm:$0xff] %v1190
                  %v1192 = vld [vmem:[%s1164 + $0x68] sm:$0xff]
                  %1193 = vst [vmem:[%s1165 + $0x68] sm:$0xff] %v1192
                  %v1194 = vld [vmem:[%s1164 + $0x70] sm:$0xff]
                  %1195 = vst [vmem:[%s1165 + $0x70] sm:$0xff] %v1194
                  %v1196 = vld [vmem:[%s1164 + $0x78] sm:$0xff]
                  %1197 = vst [vmem:[%s1165 + $0x78] sm:$0xff] %v1196
                  %v1198 = vld [vmem:[%s1164 + $0x80] sm:$0xff]
                  %1199 = vst [vmem:[%s1165 + $0x80] sm:$0xff] %v1198
                  %v1200 = vld [vmem:[%s1164 + $0x88] sm:$0xff]
                  %1201 = vst [vmem:[%s1165 + $0x88] sm:$0xff] %v1200
                  %v1202 = vld [vmem:[%s1164 + $0x90] sm:$0xff]
                  %1203 = vst [vmem:[%s1165 + $0x90] sm:$0xff] %v1202
                  %v1204 = vld [vmem:[%s1164 + $0x98] sm:$0xff]
                  %1205 = vst [vmem:[%s1165 + $0x98] sm:$0xff] %v1204
                  %v1206 = vld [vmem:[%s1164 + $0xa0] sm:$0xff]
                  %1207 = vst [vmem:[%s1165 + $0xa0] sm:$0xff] %v1206
                  %v1208 = vld [vmem:[%s1164 + $0xa8] sm:$0xff]
                  %1209 = vst [vmem:[%s1165 + $0xa8] sm:$0xff] %v1208
                  %v1210 = vld [vmem:[%s1164 + $0xb0] sm:$0xff]
                  %1211 = vst [vmem:[%s1165 + $0xb0] sm:$0xff] %v1210
                  %v1212 = vld [vmem:[%s1164 + $0xb8] sm:$0xff]
                  %1213 = vst [vmem:[%s1165 + $0xb8] sm:$0xff] %v1212
                  %v1214 = vld [vmem:[%s1164 + $0xc0] sm:$0xff]
                  %1215 = vst [vmem:[%s1165 + $0xc0] sm:$0xff] %v1214
                  %v1216 = vld [vmem:[%s1164 + $0xc8] sm:$0xff]
                  %1217 = vst [vmem:[%s1165 + $0xc8] sm:$0xff] %v1216
                  %v1218 = vld [vmem:[%s1164 + $0xd0] sm:$0xff]
                  %1219 = vst [vmem:[%s1165 + $0xd0] sm:$0xff] %v1218
                  %v1220 = vld [vmem:[%s1164 + $0xd8] sm:$0xff]
                  %1221 = vst [vmem:[%s1165 + $0xd8] sm:$0xff] %v1220
                  %v1222 = vld [vmem:[%s1164 + $0xe0] sm:$0xff]
                  %1223 = vst [vmem:[%s1165 + $0xe0] sm:$0xff] %v1222
                  %v1224 = vld [vmem:[%s1164 + $0xe8] sm:$0xff]
                  %1225 = vst [vmem:[%s1165 + $0xe8] sm:$0xff] %v1224
                  %v1226 = vld [vmem:[%s1164 + $0xf0] sm:$0xff]
                  %1227 = vst [vmem:[%s1165 + $0xf0] sm:$0xff] %v1226
                  %v1228 = vld [vmem:[%s1164 + $0xf8] sm:$0xff]
                  %1229 = vst [vmem:[%s1165 + $0xf8] sm:$0xff] %v1228
                  %v1230 = vld [vmem:[%s1164 + $0x8] sm:$0xff]
                  %1231 = vst [vmem:[%s1165 + $0xc] sm:$0xff] %v1230
                  %v1232 = vld [vmem:[%s1164 + $0x10] sm:$0xff]
                  %1233 = vst [vmem:[%s1165 + $0x14] sm:$0xff] %v1232
                  %v1234 = vld [vmem:[%s1164 + $0x18] sm:$0xff]
                  %1235 = vst [vmem:[%s1165 + $0x1c] sm:$0xff] %v1234
                  %v1236 = vld [vmem:[%s1164 + $0x20] sm:$0xff]
                  %1237 = vst [vmem:[%s1165 + $0x24] sm:$0xff] %v1236
                  %v1238 = vld [vmem:[%s1164 + $0x28] sm:$0xff]
                  %1239 = vst [vmem:[%s1165 + $0x2c] sm:$0xff] %v1238
                  %v1240 = vld [vmem:[%s1164 + $0x30] sm:$0xff]
                  %1241 = vst [vmem:[%s1165 + $0x34] sm:$0xff] %v1240
                  %v1242 = vld [vmem:[%s1164 + $0x38] sm:$0xff]
                  %1243 = vst [vmem:[%s1165 + $0x3c] sm:$0xff] %v1242
                  %v1244 = vld [vmem:[%s1164 + $0x40] sm:$0xff]
                  %1245 = vst [vmem:[%s1165 + $0x44] sm:$0xff] %v1244
                  %v1246 = vld [vmem:[%s1164 + $0x48] sm:$0xff]
                  %1247 = vst [vmem:[%s1165 + $0x4c] sm:$0xff] %v1246
                  %v1248 = vld [vmem:[%s1164 + $0x50] sm:$0xff]
                  %1249 = vst [vmem:[%s1165 + $0x54] sm:$0xff] %v1248
                  %v1250 = vld [vmem:[%s1164 + $0x58] sm:$0xff]
                  %1251 = vst [vmem:[%s1165 + $0x5c] sm:$0xff] %v1250
                  %v1252 = vld [vmem:[%s1164 + $0x60] sm:$0xff]
                  %1253 = vst [vmem:[%s1165 + $0x64] sm:$0xff] %v1252
                  %v1254 = vld [vmem:[%s1164 + $0x68] sm:$0xff]
                  %1255 = vst [vmem:[%s1165 + $0x6c] sm:$0xff] %v1254
                  %v1256 = vld [vmem:[%s1164 + $0x70] sm:$0xff]
                  %1257 = vst [vmem:[%s1165 + $0x74] sm:$0xff] %v1256
                  %v1258 = vld [vmem:[%s1164 + $0x78] sm:$0xff]
                  %1259 = vst [vmem:[%s1165 + $0x7c] sm:$0xff] %v1258
                  %v1260 = vld [vmem:[%s1164 + $0x80] sm:$0xff]
                  %1261 = vst [vmem:[%s1165 + $0x84] sm:$0xff] %v1260
                  %v1262 = vld [vmem:[%s1164 + $0x88] sm:$0xff]
                  %1263 = vst [vmem:[%s1165 + $0x8c] sm:$0xff] %v1262
                  %v1264 = vld [vmem:[%s1164 + $0x90] sm:$0xff]
                  %1265 = vst [vmem:[%s1165 + $0x94] sm:$0xff] %v1264
                  %v1266 = vld [vmem:[%s1164 + $0x98] sm:$0xff]
                  %1267 = vst [vmem:[%s1165 + $0x9c] sm:$0xff] %v1266
                  %v1268 = vld [vmem:[%s1164 + $0xa0] sm:$0xff]
                  %1269 = vst [vmem:[%s1165 + $0xa4] sm:$0xff] %v1268
                  %v1270 = vld [vmem:[%s1164 + $0xa8] sm:$0xff]
                  %1271 = vst [vmem:[%s1165 + $0xac] sm:$0xff] %v1270
                  %v1272 = vld [vmem:[%s1164 + $0xb0] sm:$0xff]
                  %1273 = vst [vmem:[%s1165 + $0xb4] sm:$0xff] %v1272
                  %v1274 = vld [vmem:[%s1164 + $0xb8] sm:$0xff]
                  %1275 = vst [vmem:[%s1165 + $0xbc] sm:$0xff] %v1274
                  %v1276 = vld [vmem:[%s1164 + $0xc0] sm:$0xff]
                  %1277 = vst [vmem:[%s1165 + $0xc4] sm:$0xff] %v1276
                  %v1278 = vld [vmem:[%s1164 + $0xc8] sm:$0xff]
                  %1279 = vst [vmem:[%s1165 + $0xcc] sm:$0xff] %v1278
                  %v1280 = vld [vmem:[%s1164 + $0xd0] sm:$0xff]
                  %1281 = vst [vmem:[%s1165 + $0xd4] sm:$0xff] %v1280
                  %v1282 = vld [vmem:[%s1164 + $0xd8] sm:$0xff]
                  %1283 = vst [vmem:[%s1165 + $0xdc] sm:$0xff] %v1282
                  %v1284 = vld [vmem:[%s1164 + $0xe0] sm:$0xff]
                  %1285 = vst [vmem:[%s1165 + $0xe4] sm:$0xff] %v1284
                  %v1286 = vld [vmem:[%s1164 + $0xe8] sm:$0xff]
                  %1287 = vst [vmem:[%s1165 + $0xec] sm:$0xff] %v1286
                  %v1288 = vld [vmem:[%s1164 + $0xf0] sm:$0xff]
                  %1289 = vst [vmem:[%s1165 + $0xf4] sm:$0xff] %v1288
                  %v1290 = vld [vmem:[%s1164 + $0xf8] sm:$0xff]
                  %1291 = vst [vmem:[%s1165 + $0xfc] sm:$0xff] %v1290
                  %v1292 = vld [vmem:[%s1164 + $0x100] sm:$0xff]
                  %1293 = vst [vmem:[%s1165 + $0x104] sm:$0xff] %v1292
                  %s1294 = sadd.s32 1, %s1163
                  %p1295 = scmp.ge.s32.totalorder %s1294, %s1154
                  %s1296 = scalar_select %p1295, 0, %s1294
                  %s1297 = smul.u32 %s1296, 256
                  %s1298 = smul.u32 %s1296, 256
                  %s1299 = scalar_lea.vmem %s1112, %s1297 [#allocation3]
                  %s1300 = scalar_lea.vmem %s1123, %s1298
                $region130: #{eenetwork_forward.5} parent=124 // loop_footer
                  %s1160 = sadd.s32 %s1158, 1
                $region131: #{eenetwork_forward.5} parent=124 // loop_footer_branch
                  %1157 = sbr.rel target = $region127
                $region132: #{eenetwork_forward.5} parent=124 // loop_exit
                  _
                %s1301 = sshrl.u32 %s1153, 5
                %s1302 = sand.u32 %s1153, 31
                %s1303 = smul.u32 %s1301, 32
                %s1304 = smul.u32 128, %s1303
                %s1305 = sshra.s32 %s1304, 4
                %s1306 = scalar_lea.vmem %s1112, %s1305 [#allocation3]
                %s1307 = smul.u32 128, %s1303
                %s1308 = sshra.s32 %s1307, 4
                %s1309 = scalar_lea.vmem %s1123, %s1308
                // While loop
                $region133: #{eenetwork_forward.5} parent=124 // loop_pre_header
                  _
                $region134: #{eenetwork_forward.5} parent=124 // loop_header
                  %s1313 = sphi 0, %s1315
                  %p1314 = scmp.ge.s32.totalorder %s1313, %s1302
                  %s1318 = sphi 0, %s1327
                  %s1319 = sphi %s1306, %s1330
                  %s1320 = sphi %s1309, %s1331
                $region135: #{eenetwork_forward.5} parent=124 // loop_header_branch
                  %1317 = sbr.rel (%p1314) target = $region139
                $region136: #{eenetwork_forward.5} parent=124 // loop_body
                  %v1321 = vld [vmem:[%s1319] sm:$0xff]
                  %1322 = vst [vmem:[%s1320] sm:$0xff] %v1321
                  %v1323 = vld [vmem:[%s1319 + $0x8] sm:$0xff]
                  %1324 = vst [vmem:[%s1320 + $0xc] sm:$0xff] %v1323
                  %s1325 = sadd.s32 1, %s1318
                  %p1326 = scmp.ge.s32.totalorder %s1325, %s1302
                  %s1327 = scalar_select %p1326, 0, %s1325
                  %s1328 = smul.u32 %s1327, 8
                  %s1329 = smul.u32 %s1327, 8
                  %s1330 = scalar_lea.vmem %s1306, %s1328 [#allocation3]
                  %s1331 = scalar_lea.vmem %s1309, %s1329
                $region137: #{eenetwork_forward.5} parent=124 // loop_footer
                  %s1315 = sadd.s32 %s1313, 1
                $region138: #{eenetwork_forward.5} parent=124 // loop_footer_branch
                  %1312 = sbr.rel target = $region134
                $region139: #{eenetwork_forward.5} parent=124 // loop_exit
                  _
              $region125: #{eenetwork_forward.5} parent=109 // pred_fallthru
                _
              %p1332 = pneg %p1149
              // Predicated region
              $region140: #{eenetwork_forward.5} parent=109 // pred_check
                _
              $region141: #{eenetwork_forward.5} parent=109 // pred_check_branch
                %1334 = sbr.rel (%p1149) target = $region143
              $region142: #{eenetwork_forward.5} parent=109 // pred_region
                %s1335 = sand.u32 %s1124, 7
                %s1336 = ssub.s32 %s1124, %s1335
                %s1337 = scalar_lea.vmem %s1112, %s1336 [#allocation3]
                %s1338 = ssub.s32 %s1124, %s1335
                %s1339 = scalar_lea.vmem %s1123, %s1338
                %s1340 = sshrl.u32 %s1124, 3
                %s1341 = sshrl.u32 %s1340, 5
                // While loop
                $region144: #{eenetwork_forward.5} parent=142 // loop_pre_header
                  _
                $region145: #{eenetwork_forward.5} parent=142 // loop_header
                  %s1345 = sphi 0, %s1347
                  %p1346 = scmp.ge.s32.totalorder %s1345, %s1341
                  %s1350 = sphi 0, %s1483
                  %s1351 = sphi %s1112, %s1486
                  %s1352 = sphi %s1123, %s1487
                $region146: #{eenetwork_forward.5} parent=142 // loop_header_branch
                  %1349 = sbr.rel (%p1346) target = $region150
                $region147: #{eenetwork_forward.5} parent=142 // loop_body
                  %v1353 = vld [vmem:[%s1351] sm:$0xff]
                  %1354 = vst [vmem:[%s1352] sm:$0xff] %v1353
                  %v1355 = vld [vmem:[%s1351 + $0x8] sm:$0xff]
                  %1356 = vst [vmem:[%s1352 + $0x8] sm:$0xff] %v1355
                  %v1357 = vld [vmem:[%s1351 + $0x10] sm:$0xff]
                  %1358 = vst [vmem:[%s1352 + $0x10] sm:$0xff] %v1357
                  %v1359 = vld [vmem:[%s1351 + $0x18] sm:$0xff]
                  %1360 = vst [vmem:[%s1352 + $0x18] sm:$0xff] %v1359
                  %v1361 = vld [vmem:[%s1351 + $0x20] sm:$0xff]
                  %1362 = vst [vmem:[%s1352 + $0x20] sm:$0xff] %v1361
                  %v1363 = vld [vmem:[%s1351 + $0x28] sm:$0xff]
                  %1364 = vst [vmem:[%s1352 + $0x28] sm:$0xff] %v1363
                  %v1365 = vld [vmem:[%s1351 + $0x30] sm:$0xff]
                  %1366 = vst [vmem:[%s1352 + $0x30] sm:$0xff] %v1365
                  %v1367 = vld [vmem:[%s1351 + $0x38] sm:$0xff]
                  %1368 = vst [vmem:[%s1352 + $0x38] sm:$0xff] %v1367
                  %v1369 = vld [vmem:[%s1351 + $0x40] sm:$0xff]
                  %1370 = vst [vmem:[%s1352 + $0x40] sm:$0xff] %v1369
                  %v1371 = vld [vmem:[%s1351 + $0x48] sm:$0xff]
                  %1372 = vst [vmem:[%s1352 + $0x48] sm:$0xff] %v1371
                  %v1373 = vld [vmem:[%s1351 + $0x50] sm:$0xff]
                  %1374 = vst [vmem:[%s1352 + $0x50] sm:$0xff] %v1373
                  %v1375 = vld [vmem:[%s1351 + $0x58] sm:$0xff]
                  %1376 = vst [vmem:[%s1352 + $0x58] sm:$0xff] %v1375
                  %v1377 = vld [vmem:[%s1351 + $0x60] sm:$0xff]
                  %1378 = vst [vmem:[%s1352 + $0x60] sm:$0xff] %v1377
                  %v1379 = vld [vmem:[%s1351 + $0x68] sm:$0xff]
                  %1380 = vst [vmem:[%s1352 + $0x68] sm:$0xff] %v1379
                  %v1381 = vld [vmem:[%s1351 + $0x70] sm:$0xff]
                  %1382 = vst [vmem:[%s1352 + $0x70] sm:$0xff] %v1381
                  %v1383 = vld [vmem:[%s1351 + $0x78] sm:$0xff]
                  %1384 = vst [vmem:[%s1352 + $0x78] sm:$0xff] %v1383
                  %v1385 = vld [vmem:[%s1351 + $0x80] sm:$0xff]
                  %1386 = vst [vmem:[%s1352 + $0x80] sm:$0xff] %v1385
                  %v1387 = vld [vmem:[%s1351 + $0x88] sm:$0xff]
                  %1388 = vst [vmem:[%s1352 + $0x88] sm:$0xff] %v1387
                  %v1389 = vld [vmem:[%s1351 + $0x90] sm:$0xff]
                  %1390 = vst [vmem:[%s1352 + $0x90] sm:$0xff] %v1389
                  %v1391 = vld [vmem:[%s1351 + $0x98] sm:$0xff]
                  %1392 = vst [vmem:[%s1352 + $0x98] sm:$0xff] %v1391
                  %v1393 = vld [vmem:[%s1351 + $0xa0] sm:$0xff]
                  %1394 = vst [vmem:[%s1352 + $0xa0] sm:$0xff] %v1393
                  %v1395 = vld [vmem:[%s1351 + $0xa8] sm:$0xff]
                  %1396 = vst [vmem:[%s1352 + $0xa8] sm:$0xff] %v1395
                  %v1397 = vld [vmem:[%s1351 + $0xb0] sm:$0xff]
                  %1398 = vst [vmem:[%s1352 + $0xb0] sm:$0xff] %v1397
                  %v1399 = vld [vmem:[%s1351 + $0xb8] sm:$0xff]
                  %1400 = vst [vmem:[%s1352 + $0xb8] sm:$0xff] %v1399
                  %v1401 = vld [vmem:[%s1351 + $0xc0] sm:$0xff]
                  %1402 = vst [vmem:[%s1352 + $0xc0] sm:$0xff] %v1401
                  %v1403 = vld [vmem:[%s1351 + $0xc8] sm:$0xff]
                  %1404 = vst [vmem:[%s1352 + $0xc8] sm:$0xff] %v1403
                  %v1405 = vld [vmem:[%s1351 + $0xd0] sm:$0xff]
                  %1406 = vst [vmem:[%s1352 + $0xd0] sm:$0xff] %v1405
                  %v1407 = vld [vmem:[%s1351 + $0xd8] sm:$0xff]
                  %1408 = vst [vmem:[%s1352 + $0xd8] sm:$0xff] %v1407
                  %v1409 = vld [vmem:[%s1351 + $0xe0] sm:$0xff]
                  %1410 = vst [vmem:[%s1352 + $0xe0] sm:$0xff] %v1409
                  %v1411 = vld [vmem:[%s1351 + $0xe8] sm:$0xff]
                  %1412 = vst [vmem:[%s1352 + $0xe8] sm:$0xff] %v1411
                  %v1413 = vld [vmem:[%s1351 + $0xf0] sm:$0xff]
                  %1414 = vst [vmem:[%s1352 + $0xf0] sm:$0xff] %v1413
                  %v1415 = vld [vmem:[%s1351 + $0xf8] sm:$0xff]
                  %1416 = vst [vmem:[%s1352 + $0xf8] sm:$0xff] %v1415
                  %v1417 = vld [vmem:[%s1351 + $0x8] sm:$0xff]
                  %1418 = vst [vmem:[%s1352 + $0xc] sm:$0xff] %v1417
                  %v1419 = vld [vmem:[%s1351 + $0x10] sm:$0xff]
                  %1420 = vst [vmem:[%s1352 + $0x14] sm:$0xff] %v1419
                  %v1421 = vld [vmem:[%s1351 + $0x18] sm:$0xff]
                  %1422 = vst [vmem:[%s1352 + $0x1c] sm:$0xff] %v1421
                  %v1423 = vld [vmem:[%s1351 + $0x20] sm:$0xff]
                  %1424 = vst [vmem:[%s1352 + $0x24] sm:$0xff] %v1423
                  %v1425 = vld [vmem:[%s1351 + $0x28] sm:$0xff]
                  %1426 = vst [vmem:[%s1352 + $0x2c] sm:$0xff] %v1425
                  %v1427 = vld [vmem:[%s1351 + $0x30] sm:$0xff]
                  %1428 = vst [vmem:[%s1352 + $0x34] sm:$0xff] %v1427
                  %v1429 = vld [vmem:[%s1351 + $0x38] sm:$0xff]
                  %1430 = vst [vmem:[%s1352 + $0x3c] sm:$0xff] %v1429
                  %v1431 = vld [vmem:[%s1351 + $0x40] sm:$0xff]
                  %1432 = vst [vmem:[%s1352 + $0x44] sm:$0xff] %v1431
                  %v1433 = vld [vmem:[%s1351 + $0x48] sm:$0xff]
                  %1434 = vst [vmem:[%s1352 + $0x4c] sm:$0xff] %v1433
                  %v1435 = vld [vmem:[%s1351 + $0x50] sm:$0xff]
                  %1436 = vst [vmem:[%s1352 + $0x54] sm:$0xff] %v1435
                  %v1437 = vld [vmem:[%s1351 + $0x58] sm:$0xff]
                  %1438 = vst [vmem:[%s1352 + $0x5c] sm:$0xff] %v1437
                  %v1439 = vld [vmem:[%s1351 + $0x60] sm:$0xff]
                  %1440 = vst [vmem:[%s1352 + $0x64] sm:$0xff] %v1439
                  %v1441 = vld [vmem:[%s1351 + $0x68] sm:$0xff]
                  %1442 = vst [vmem:[%s1352 + $0x6c] sm:$0xff] %v1441
                  %v1443 = vld [vmem:[%s1351 + $0x70] sm:$0xff]
                  %1444 = vst [vmem:[%s1352 + $0x74] sm:$0xff] %v1443
                  %v1445 = vld [vmem:[%s1351 + $0x78] sm:$0xff]
                  %1446 = vst [vmem:[%s1352 + $0x7c] sm:$0xff] %v1445
                  %v1447 = vld [vmem:[%s1351 + $0x80] sm:$0xff]
                  %1448 = vst [vmem:[%s1352 + $0x84] sm:$0xff] %v1447
                  %v1449 = vld [vmem:[%s1351 + $0x88] sm:$0xff]
                  %1450 = vst [vmem:[%s1352 + $0x8c] sm:$0xff] %v1449
                  %v1451 = vld [vmem:[%s1351 + $0x90] sm:$0xff]
                  %1452 = vst [vmem:[%s1352 + $0x94] sm:$0xff] %v1451
                  %v1453 = vld [vmem:[%s1351 + $0x98] sm:$0xff]
                  %1454 = vst [vmem:[%s1352 + $0x9c] sm:$0xff] %v1453
                  %v1455 = vld [vmem:[%s1351 + $0xa0] sm:$0xff]
                  %1456 = vst [vmem:[%s1352 + $0xa4] sm:$0xff] %v1455
                  %v1457 = vld [vmem:[%s1351 + $0xa8] sm:$0xff]
                  %1458 = vst [vmem:[%s1352 + $0xac] sm:$0xff] %v1457
                  %v1459 = vld [vmem:[%s1351 + $0xb0] sm:$0xff]
                  %1460 = vst [vmem:[%s1352 + $0xb4] sm:$0xff] %v1459
                  %v1461 = vld [vmem:[%s1351 + $0xb8] sm:$0xff]
                  %1462 = vst [vmem:[%s1352 + $0xbc] sm:$0xff] %v1461
                  %v1463 = vld [vmem:[%s1351 + $0xc0] sm:$0xff]
                  %1464 = vst [vmem:[%s1352 + $0xc4] sm:$0xff] %v1463
                  %v1465 = vld [vmem:[%s1351 + $0xc8] sm:$0xff]
                  %1466 = vst [vmem:[%s1352 + $0xcc] sm:$0xff] %v1465
                  %v1467 = vld [vmem:[%s1351 + $0xd0] sm:$0xff]
                  %1468 = vst [vmem:[%s1352 + $0xd4] sm:$0xff] %v1467
                  %v1469 = vld [vmem:[%s1351 + $0xd8] sm:$0xff]
                  %1470 = vst [vmem:[%s1352 + $0xdc] sm:$0xff] %v1469
                  %v1471 = vld [vmem:[%s1351 + $0xe0] sm:$0xff]
                  %1472 = vst [vmem:[%s1352 + $0xe4] sm:$0xff] %v1471
                  %v1473 = vld [vmem:[%s1351 + $0xe8] sm:$0xff]
                  %1474 = vst [vmem:[%s1352 + $0xec] sm:$0xff] %v1473
                  %v1475 = vld [vmem:[%s1351 + $0xf0] sm:$0xff]
                  %1476 = vst [vmem:[%s1352 + $0xf4] sm:$0xff] %v1475
                  %v1477 = vld [vmem:[%s1351 + $0xf8] sm:$0xff]
                  %1478 = vst [vmem:[%s1352 + $0xfc] sm:$0xff] %v1477
                  %v1479 = vld [vmem:[%s1351 + $0x100] sm:$0xff]
                  %1480 = vst [vmem:[%s1352 + $0x104] sm:$0xff] %v1479
                  %s1481 = sadd.s32 1, %s1350
                  %p1482 = scmp.ge.s32.totalorder %s1481, %s1341
                  %s1483 = scalar_select %p1482, 0, %s1481
                  %s1484 = smul.u32 %s1483, 256
                  %s1485 = smul.u32 %s1483, 256
                  %s1486 = scalar_lea.vmem %s1112, %s1484 [#allocation3]
                  %s1487 = scalar_lea.vmem %s1123, %s1485
                $region148: #{eenetwork_forward.5} parent=142 // loop_footer
                  %s1347 = sadd.s32 %s1345, 1
                $region149: #{eenetwork_forward.5} parent=142 // loop_footer_branch
                  %1344 = sbr.rel target = $region145
                $region150: #{eenetwork_forward.5} parent=142 // loop_exit
                  _
                %s1488 = sshrl.u32 %s1340, 5
                %s1489 = sand.u32 %s1340, 31
                %s1490 = smul.u32 %s1488, 32
                %s1491 = smul.u32 128, %s1490
                %s1492 = sshra.s32 %s1491, 4
                %s1493 = scalar_lea.vmem %s1112, %s1492 [#allocation3]
                %s1494 = smul.u32 128, %s1490
                %s1495 = sshra.s32 %s1494, 4
                %s1496 = scalar_lea.vmem %s1123, %s1495
                // While loop
                $region151: #{eenetwork_forward.5} parent=142 // loop_pre_header
                  _
                $region152: #{eenetwork_forward.5} parent=142 // loop_header
                  %s1500 = sphi 0, %s1502
                  %p1501 = scmp.ge.s32.totalorder %s1500, %s1489
                  %s1505 = sphi 0, %s1514
                  %s1506 = sphi %s1493, %s1517
                  %s1507 = sphi %s1496, %s1518
                $region153: #{eenetwork_forward.5} parent=142 // loop_header_branch
                  %1504 = sbr.rel (%p1501) target = $region157
                $region154: #{eenetwork_forward.5} parent=142 // loop_body
                  %v1508 = vld [vmem:[%s1506] sm:$0xff]
                  %1509 = vst [vmem:[%s1507] sm:$0xff] %v1508
                  %v1510 = vld [vmem:[%s1506 + $0x8] sm:$0xff]
                  %1511 = vst [vmem:[%s1507 + $0xc] sm:$0xff] %v1510
                  %s1512 = sadd.s32 1, %s1505
                  %p1513 = scmp.ge.s32.totalorder %s1512, %s1489
                  %s1514 = scalar_select %p1513, 0, %s1512
                  %s1515 = smul.u32 %s1514, 8
                  %s1516 = smul.u32 %s1514, 8
                  %s1517 = scalar_lea.vmem %s1493, %s1515 [#allocation3]
                  %s1518 = scalar_lea.vmem %s1496, %s1516
                $region155: #{eenetwork_forward.5} parent=142 // loop_footer
                  %s1502 = sadd.s32 %s1500, 1
                $region156: #{eenetwork_forward.5} parent=142 // loop_footer_branch
                  %1499 = sbr.rel target = $region152
                $region157: #{eenetwork_forward.5} parent=142 // loop_exit
                  _
                %s1519 = sshllo.u32 0, %s1335
                loop: start=0, step=1, limit=1
                $region158: #{eenetwork_forward.5} parent=142 // loop_pre_header
                  _
                $region159: #{eenetwork_forward.5} parent=142 // loop_header
                  %s1521 = sphi 0, %s1525
                  %p1522 = scmp.ge.s32.totalorder %s1521, 1
                  %s1526 = sphi %s1337, %s1337
                  %s1527 = sphi %s1339, %s1339
                $region160: #{eenetwork_forward.5} parent=142 // loop_header_branch
                  %1524 = sbr.rel (%p1522) target = $region164
                $region161: #{eenetwork_forward.5} parent=142 // loop_body
                  %v1528 = vld [vmem:[%s1526] sm:%s1519]
                  %1529 = vst [vmem:[%s1527] sm:%s1519] %v1528
                  %v1530 = vld [vmem:[%s1526 + $0x8] sm:%s1519]
                  %1531 = vst [vmem:[%s1527 + $0xc] sm:%s1519] %v1530
                $region162: #{eenetwork_forward.5} parent=142 // loop_footer
                  %s1525 = sadd.s32 1, %s1521
                $region163: #{eenetwork_forward.5} parent=142 // loop_footer_branch
                  %1520 = sbr.rel target = $region159
                $region164: #{eenetwork_forward.5} parent=142 // loop_exit
                  _
              $region143: #{eenetwork_forward.5} parent=109 // pred_fallthru
                _
            $region110: #{eenetwork_forward.5} parent=105 // pred_fallthru
              _
            // Predicated region
            $region111: #{eenetwork_forward.5} parent=105 // pred_check
              %p1132 = pneg %p1128
            $region112: #{eenetwork_forward.5} parent=105 // pred_check_branch
              %1134 = sbr.rel (%p1132) target = $region114
            $region113: #{eenetwork_forward.5} parent=105 // pred_region
              %s1135 = sshllo.u32 0, %s1124
              loop: start=0, step=1, limit=1
              $region115: #{eenetwork_forward.5} parent=113 // loop_pre_header
                _
              $region116: #{eenetwork_forward.5} parent=113 // loop_header
                %s1137 = sphi 0, %s1141
                %p1138 = scmp.ge.s32.totalorder %s1137, 1
                %s1142 = sphi %s1112, %s1112
                %s1143 = sphi %s1123, %s1123
              $region117: #{eenetwork_forward.5} parent=113 // loop_header_branch
                %1140 = sbr.rel (%p1138) target = $region121
              $region118: #{eenetwork_forward.5} parent=113 // loop_body
                %v1144 = vld [vmem:[%s1142] sm:%s1135]
                %1145 = vst [vmem:[%s1143] sm:%s1135] %v1144
                %v1146 = vld [vmem:[%s1142 + $0x8] sm:%s1135]
                %1147 = vst [vmem:[%s1143 + $0xc] sm:%s1135] %v1146
              $region119: #{eenetwork_forward.5} parent=113 // loop_footer
                %s1141 = sadd.s32 1, %s1137
              $region120: #{eenetwork_forward.5} parent=113 // loop_footer_branch
                %1136 = sbr.rel target = $region116
              $region121: #{eenetwork_forward.5} parent=113 // loop_exit
                _
            $region114: #{eenetwork_forward.5} parent=105 // pred_fallthru
              _
          $region106: #{eenetwork_forward.5} parent=101 // pred_fallthru
            _
          %1532 = vnop
        $region102: #{eenetwork_forward.5} parent=93 // pred_fallthru
          _
      $region94: #{eenetwork_forward.5} parent=5 // pred_fallthru
        _
      %p1533 = scmp.le.s32.totalorder 2, %s9
      // Predicated region
      $region165: #{eenetwork_forward.5} parent=5 // pred_check
        %p1534 = pneg %p1533
      $region166: #{eenetwork_forward.5} parent=5 // pred_check_branch
        %1536 = sbr.rel (%p1534) target = $region168
      $region167: #{eenetwork_forward.5} parent=5 // pred_region
        %s1537 = ssub.s32 %s9, 2
        // Predicated region
        $region169: #{eenetwork_forward.5} parent=167 // pred_check
          %p1538 = pneg %p106
        $region170: #{eenetwork_forward.5} parent=167 // pred_check_branch
          %1540 = sbr.rel (%p1538) target = $region172
        $region171: #{eenetwork_forward.5} parent=167 // pred_region
          %s1541 = sand.u32 %s91, 1
          %s1542 = sand.u32 %s91, 1
          %s1543 = smul.addr %s1542, 16
          %s1544 = scalar_lea.vmem [#allocation3], %s1543
        $region172: #{eenetwork_forward.5} parent=167 // pred_fallthru
          _
      $region168: #{eenetwork_forward.5} parent=5 // pred_fallthru
        _
    $region6: #{eenetwork_forward.5} parent=1 // loop_footer
      %s13 = sadd.s32 1, %s9
    $region7: #{eenetwork_forward.5} parent=1 // loop_footer_branch
      %8 = sbr.rel target = $region3
    $region8: #{eenetwork_forward.5} parent=1 // loop_exit
      _

// kernel: eenetwork_forward.6
$region0: #{eenetwork_forward.6}
  #allocation0 [shape = 'u32[]', space=smem, size = 0x4, offset = 0x4, fixed_abs, tag = 'smem constant byte address 0x4 - core index']
  #allocation1 [shape = 'u32[144,128]{1,0:T(1,128)}', space=vmem, size = 0x12000, scoped, tag = 'internal scratch']
  %s0 = inlined_call_operand.vmem [shape: bf16[144,196], index: 0, kind: input, shape index: {}]
  %s1 = inlined_call_operand.vmem [shape: bf16[16,144], index: 1, kind: input, shape index: {}]
  %s2 = inlined_call_operand.vmem [shape: f32[16,1], index: 2, kind: input, shape index: {}]
  %s3 = inlined_call_operand.vmem [shape: bf16[16,196], index: 3, kind: output, shape index: {}]
  %s4 = sld [smem:[#allocation0]]
  $region123: #{eenetwork_forward.6} parent=0
    _
  %s6 = ssub.s32 1, %s4
  %s7 = scalar_select 0, %s6, %s4
  $region1: #{eenetwork_forward.6} parent=0
    #allocation2 [shape = 'u8[73728]{0}', space=vmem, size = 0x12000, scoped, tag = 'input window, operand 0']
    #allocation3 [shape = 'u8[8192]{0}', space=vmem, size = 0x2000, scoped, tag = 'output window, operand 0']
    loop: start=0, step=1, limit=4
    $region2: #{eenetwork_forward.6} parent=1 // loop_pre_header
      _
    $region3: #{eenetwork_forward.6} parent=1 // loop_header
      %s9 = sphi 0, %s13
      %p10 = scmp.ge.s32.totalorder %s9, 4
      %s19 = sphi 0, %s21
      %s22 = sphi 0, %s19
      %s23 = sphi 0, %s22
      %s39 = sphi 0, %s23
      %s43 = sphi 0, %s43
      %s45 = sphi 0, %s43
      %s46 = sphi 0, %s45
      %s60 = sphi 0, %s46
      %s64 = sphi 0, %s64
      %s66 = sphi 0, %s64
      %s67 = sphi 0, %s66
      %s81 = sphi 0, %s67
      %s87 = sphi 0, %s89
      %s90 = sphi 0, %s87
      %s91 = sphi 0, %s90
      %s107 = sphi 0, %s91
    $region4: #{eenetwork_forward.6} parent=1 // loop_header_branch
      %12 = sbr.rel (%p10) target = $region8
    $region5: #{eenetwork_forward.6} parent=1 // loop_body
      %s14 = ssub.s32 %s9, 1
      %s15 = ssub.s32 %s9, 2
      %s16 = sadd.s32 %s9, 1
      %s17 = ssub.s32 %s9, %s16
      %p18 = scmp.eq.s32.totalorder %s17, 0
      %s20 = sadd.s32 %s19, 1
      %s21 = scalar_select %p18, %s19, %s20
      %p24 = pneg %p18
      %p25 = scmp.eq.s32.totalorder %s9, 1
      %p26 = por %p24, %p25
      %p27 = scmp.ne.s32.totalorder %s19, %s22
      %p28 = scmp.eq.s32.totalorder %s9, 0
      %p29 = por %p27, %p28
      %p30 = scmp.ne.s32.totalorder %s19, %s22
      %p31 = scmp.eq.s32.totalorder %s14, 1
      %p32 = por %p30, %p31
      %p33 = scmp.ne.s32.totalorder %s22, %s23
      %p34 = scmp.eq.s32.totalorder %s14, 0
      %p35 = por %p33, %p34
      %p36 = scmp.ne.s32.totalorder %s22, %s23
      %p37 = scmp.eq.s32.totalorder %s15, 1
      %p38 = por %p36, %p37
      %p40 = scmp.ne.s32.totalorder %s23, %s39
      %p41 = scmp.eq.s32.totalorder %s15, 0
      %p42 = por %p40, %p41
      %s44 = sadd.s32 %s43, 1
      %p47 = scmp.eq.s32.totalorder %s9, 1
      %p48 = scmp.ne.s32.totalorder %s43, %s45
      %p49 = scmp.eq.s32.totalorder %s9, 0
      %p50 = por %p48, %p49
      %p51 = scmp.ne.s32.totalorder %s43, %s45
      %p52 = scmp.eq.s32.totalorder %s14, 1
      %p53 = por %p51, %p52
      %p54 = scmp.ne.s32.totalorder %s45, %s46
      %p55 = scmp.eq.s32.totalorder %s14, 0
      %p56 = por %p54, %p55
      %p57 = scmp.ne.s32.totalorder %s45, %s46
      %p58 = scmp.eq.s32.totalorder %s15, 1
      %p59 = por %p57, %p58
      %p61 = scmp.ne.s32.totalorder %s46, %s60
      %p62 = scmp.eq.s32.totalorder %s15, 0
      %p63 = por %p61, %p62
      %s65 = sadd.s32 %s64, 1
      %p68 = scmp.eq.s32.totalorder %s9, 1
      %p69 = scmp.ne.s32.totalorder %s64, %s66
      %p70 = scmp.eq.s32.totalorder %s9, 0
      %p71 = por %p69, %p70
      %p72 = scmp.ne.s32.totalorder %s64, %s66
      %p73 = scmp.eq.s32.totalorder %s14, 1
      %p74 = por %p72, %p73
      %p75 = scmp.ne.s32.totalorder %s66, %s67
      %p76 = scmp.eq.s32.totalorder %s14, 0
      %p77 = por %p75, %p76
      %p78 = scmp.ne.s32.totalorder %s66, %s67
      %p79 = scmp.eq.s32.totalorder %s15, 1
      %p80 = por %p78, %p79
      %p82 = scmp.ne.s32.totalorder %s67, %s81
      %p83 = scmp.eq.s32.totalorder %s15, 0
      %p84 = por %p82, %p83
      %s85 = ssub.s32 %s9, %s16
      %p86 = scmp.eq.s32.totalorder %s85, 0
      %s88 = sadd.s32 %s87, 1
      %s89 = scalar_select %p86, %s87, %s88
      %p92 = pneg %p86
      %p93 = scmp.eq.s32.totalorder %s9, 1
      %p94 = por %p92, %p93
      %p95 = scmp.ne.s32.totalorder %s87, %s90
      %p96 = scmp.eq.s32.totalorder %s9, 0
      %p97 = por %p95, %p96
      %p98 = scmp.ne.s32.totalorder %s87, %s90
      %p99 = scmp.eq.s32.totalorder %s14, 1
      %p100 = por %p98, %p99
      %p101 = scmp.ne.s32.totalorder %s90, %s91
      %p102 = scmp.eq.s32.totalorder %s14, 0
      %p103 = por %p101, %p102
      %p104 = scmp.ne.s32.totalorder %s90, %s91
      %p105 = scmp.eq.s32.totalorder %s15, 1
      %p106 = por %p104, %p105
      %p108 = scmp.ne.s32.totalorder %s91, %s107
      %p109 = scmp.eq.s32.totalorder %s15, 0
      %p110 = por %p108, %p109
      %p111 = scmp.le.s32.totalorder 1, %s9
      %p112 = scmp.lt.s32.totalorder %s9, 3
      %p113 = pnand %p111, %p112
      %p114 = pneg %p113
      // Predicated region
      $region9: #{eenetwork_forward.6} parent=5 // pred_check
        _
      $region10: #{eenetwork_forward.6} parent=5 // pred_check_branch
        %116 = sbr.rel (%p113) target = $region12
      $region11: #{eenetwork_forward.6} parent=5 // pred_region
        %s117 = ssub.s32 %s9, 1
        // Predicated region
        $region13: #{eenetwork_forward.6} parent=11 // pred_check
          %p118 = pneg %p56
        $region14: #{eenetwork_forward.6} parent=11 // pred_check_branch
          %120 = sbr.rel (%p118) target = $region16
        $region15: #{eenetwork_forward.6} parent=11 // pred_region
          _
        $region16: #{eenetwork_forward.6} parent=11 // pred_fallthru
          _
        // Predicated region
        $region17: #{eenetwork_forward.6} parent=11 // pred_check
          %p121 = pneg %p77
        $region18: #{eenetwork_forward.6} parent=11 // pred_check_branch
          %123 = sbr.rel (%p121) target = $region20
        $region19: #{eenetwork_forward.6} parent=11 // pred_region
          _
        $region20: #{eenetwork_forward.6} parent=11 // pred_fallthru
          _
      $region12: #{eenetwork_forward.6} parent=5 // pred_fallthru
        _
      %p124 = scmp.lt.s32.totalorder %s9, 2
      // Predicated region
      $region21: #{eenetwork_forward.6} parent=5 // pred_check
        %p125 = pneg %p124
      $region22: #{eenetwork_forward.6} parent=5 // pred_check_branch
        %127 = sbr.rel (%p125) target = $region24
      $region23: #{eenetwork_forward.6} parent=5 // pred_region
        // Predicated region
        $region25: #{eenetwork_forward.6} parent=23 // pred_check
          %p128 = pneg %p29
        $region26: #{eenetwork_forward.6} parent=23 // pred_check_branch
          %130 = sbr.rel (%p128) target = $region28
        $region27: #{eenetwork_forward.6} parent=23 // pred_region
          %s131 = sand.u32 %s19, 1
          %s132 = sand.u32 %s19, 1
          %s133 = smul.addr %s132, 72
          %s134 = scalar_lea.vmem [#allocation2], %s133
          %s135 = smul.addr %s9, 4
          %s136 = scalar_lea.vmem %s0, %s135
          // Predicated region
          $region29: #{eenetwork_forward.6} parent=27 // pred_check
            _
          $region30: #{eenetwork_forward.6} parent=27 // pred_check_branch
            %138 = sbr.rel (0) target = $region32
          $region31: #{eenetwork_forward.6} parent=27 // pred_region
            // Predicated region
            $region33: #{eenetwork_forward.6} parent=31 // pred_check
              _
            $region34: #{eenetwork_forward.6} parent=31 // pred_check_branch
              %140 = sbr.rel target = $region36
            $region35: #{eenetwork_forward.6} parent=31 // pred_region
              // Predicated region
              $region48: #{eenetwork_forward.6} parent=35 // pred_check
                _
              $region49: #{eenetwork_forward.6} parent=35 // pred_check_branch
                %189 = sbr.rel (0) target = $region51
              $region50: #{eenetwork_forward.6} parent=35 // pred_region
                loop: start=0, step=1, limit=1
                $region52: #{eenetwork_forward.6} parent=50 // loop_pre_header
                  _
                $region53: #{eenetwork_forward.6} parent=50 // loop_header
                  %s191 = sphi 0, %s195
                  %p192 = scmp.ge.s32.totalorder %s191, 1
                  %s196 = sphi %s136, %s136
                  %s197 = sphi %s134, %s134
                $region54: #{eenetwork_forward.6} parent=50 // loop_header_branch
                  %194 = sbr.rel (%p192) target = $region58
                $region55: #{eenetwork_forward.6} parent=50 // loop_body
                  _
                $region56: #{eenetwork_forward.6} parent=50 // loop_footer
                  %s195 = sadd.s32 1, %s191
                $region57: #{eenetwork_forward.6} parent=50 // loop_footer_branch
                  %190 = sbr.rel target = $region53
                $region58: #{eenetwork_forward.6} parent=50 // loop_exit
                  _
                loop: start=0, step=1, limit=1
                $region59: #{eenetwork_forward.6} parent=50 // loop_pre_header
                  _
                $region60: #{eenetwork_forward.6} parent=50 // loop_header
                  %s200 = sphi 0, %s204
                  %p201 = scmp.ge.s32.totalorder %s200, 1
                  %s205 = sphi %s136, %s136
                  %s206 = sphi %s134, %s134
                $region61: #{eenetwork_forward.6} parent=50 // loop_header_branch
                  %203 = sbr.rel (%p201) target = $region65
                $region62: #{eenetwork_forward.6} parent=50 // loop_body
                  %v207 = vld [vmem:[%s205] sm:$0xf]
                  %208 = vst [vmem:[%s206] sm:$0xf] %v207
                  %v209 = vld [vmem:[%s205 + $0x8] sm:$0xf]
                  %210 = vst [vmem:[%s206 + $0x4] sm:$0xf] %v209
                  %v211 = vld [vmem:[%s205 + $0x10] sm:$0xf]
                  %212 = vst [vmem:[%s206 + $0x8] sm:$0xf] %v211
                  %v213 = vld [vmem:[%s205 + $0x18] sm:$0xf]
                  %214 = vst [vmem:[%s206 + $0xc] sm:$0xf] %v213
                  %v215 = vld [vmem:[%s205 + $0x20] sm:$0xf]
                  %216 = vst [vmem:[%s206 + $0x10] sm:$0xf] %v215
                  %v217 = vld [vmem:[%s205 + $0x28] sm:$0xf]
                  %218 = vst [vmem:[%s206 + $0x14] sm:$0xf] %v217
                  %v219 = vld [vmem:[%s205 + $0x30] sm:$0xf]
                  %220 = vst [vmem:[%s206 + $0x18] sm:$0xf] %v219
                  %v221 = vld [vmem:[%s205 + $0x38] sm:$0xf]
                  %222 = vst [vmem:[%s206 + $0x1c] sm:$0xf] %v221
                  %v223 = vld [vmem:[%s205 + $0x40] sm:$0xf]
                  %224 = vst [vmem:[%s206 + $0x20] sm:$0xf] %v223
                  %v225 = vld [vmem:[%s205 + $0x48] sm:$0xf]
                  %226 = vst [vmem:[%s206 + $0x24] sm:$0xf] %v225
                  %v227 = vld [vmem:[%s205 + $0x50] sm:$0xf]
                  %228 = vst [vmem:[%s206 + $0x28] sm:$0xf] %v227
                  %v229 = vld [vmem:[%s205 + $0x58] sm:$0xf]
                  %230 = vst [vmem:[%s206 + $0x2c] sm:$0xf] %v229
                  %v231 = vld [vmem:[%s205 + $0x60] sm:$0xf]
                  %232 = vst [vmem:[%s206 + $0x30] sm:$0xf] %v231
                  %v233 = vld [vmem:[%s205 + $0x68] sm:$0xf]
                  %234 = vst [vmem:[%s206 + $0x34] sm:$0xf] %v233
                  %v235 = vld [vmem:[%s205 + $0x70] sm:$0xf]
                  %236 = vst [vmem:[%s206 + $0x38] sm:$0xf] %v235
                  %v237 = vld [vmem:[%s205 + $0x78] sm:$0xf]
                  %238 = vst [vmem:[%s206 + $0x3c] sm:$0xf] %v237
                  %v239 = vld [vmem:[%s205 + $0x80] sm:$0xf]
                  %240 = vst [vmem:[%s206 + $0x40] sm:$0xf] %v239
                  %v241 = vld [vmem:[%s205 + $0x88] sm:$0xf]
                  %242 = vst [vmem:[%s206 + $0x44] sm:$0xf] %v241
                $region63: #{eenetwork_forward.6} parent=50 // loop_footer
                  %s204 = sadd.s32 1, %s200
                $region64: #{eenetwork_forward.6} parent=50 // loop_footer_branch
                  %199 = sbr.rel target = $region60
                $region65: #{eenetwork_forward.6} parent=50 // loop_exit
                  _
              $region51: #{eenetwork_forward.6} parent=35 // pred_fallthru
                _
            $region36: #{eenetwork_forward.6} parent=31 // pred_fallthru
              _
            // Predicated region
            $region37: #{eenetwork_forward.6} parent=31 // pred_check
              _
            $region38: #{eenetwork_forward.6} parent=31 // pred_check_branch
              %142 = sbr.rel (0) target = $region40
            $region39: #{eenetwork_forward.6} parent=31 // pred_region
              loop: start=0, step=1, limit=1
              $region41: #{eenetwork_forward.6} parent=39 // loop_pre_header
                _
              $region42: #{eenetwork_forward.6} parent=39 // loop_header
                %s145 = sphi 0, %s149
                %p146 = scmp.ge.s32.totalorder %s145, 1
                %s150 = sphi %s136, %s136
                %s151 = sphi %s134, %s134
              $region43: #{eenetwork_forward.6} parent=39 // loop_header_branch
                %148 = sbr.rel (%p146) target = $region47
              $region44: #{eenetwork_forward.6} parent=39 // loop_body
                %v152 = vld [vmem:[%s150] sm:$0xf]
                %153 = vst [vmem:[%s151] sm:$0xf] %v152
                %v154 = vld [vmem:[%s150 + $0x8] sm:$0xf]
                %155 = vst [vmem:[%s151 + $0x4] sm:$0xf] %v154
                %v156 = vld [vmem:[%s150 + $0x10] sm:$0xf]
                %157 = vst [vmem:[%s151 + $0x8] sm:$0xf] %v156
                %v158 = vld [vmem:[%s150 + $0x18] sm:$0xf]
                %159 = vst [vmem:[%s151 + $0xc] sm:$0xf] %v158
                %v160 = vld [vmem:[%s150 + $0x20] sm:$0xf]
                %161 = vst [vmem:[%s151 + $0x10] sm:$0xf] %v160
                %v162 = vld [vmem:[%s150 + $0x28] sm:$0xf]
                %163 = vst [vmem:[%s151 + $0x14] sm:$0xf] %v162
                %v164 = vld [vmem:[%s150 + $0x30] sm:$0xf]
                %165 = vst [vmem:[%s151 + $0x18] sm:$0xf] %v164
                %v166 = vld [vmem:[%s150 + $0x38] sm:$0xf]
                %167 = vst [vmem:[%s151 + $0x1c] sm:$0xf] %v166
                %v168 = vld [vmem:[%s150 + $0x40] sm:$0xf]
                %169 = vst [vmem:[%s151 + $0x20] sm:$0xf] %v168
                %v170 = vld [vmem:[%s150 + $0x48] sm:$0xf]
                %171 = vst [vmem:[%s151 + $0x24] sm:$0xf] %v170
                %v172 = vld [vmem:[%s150 + $0x50] sm:$0xf]
                %173 = vst [vmem:[%s151 + $0x28] sm:$0xf] %v172
                %v174 = vld [vmem:[%s150 + $0x58] sm:$0xf]
                %175 = vst [vmem:[%s151 + $0x2c] sm:$0xf] %v174
                %v176 = vld [vmem:[%s150 + $0x60] sm:$0xf]
                %177 = vst [vmem:[%s151 + $0x30] sm:$0xf] %v176
                %v178 = vld [vmem:[%s150 + $0x68] sm:$0xf]
                %179 = vst [vmem:[%s151 + $0x34] sm:$0xf] %v178
                %v180 = vld [vmem:[%s150 + $0x70] sm:$0xf]
                %181 = vst [vmem:[%s151 + $0x38] sm:$0xf] %v180
                %v182 = vld [vmem:[%s150 + $0x78] sm:$0xf]
                %183 = vst [vmem:[%s151 + $0x3c] sm:$0xf] %v182
                %v184 = vld [vmem:[%s150 + $0x80] sm:$0xf]
                %185 = vst [vmem:[%s151 + $0x40] sm:$0xf] %v184
                %v186 = vld [vmem:[%s150 + $0x88] sm:$0xf]
                %187 = vst [vmem:[%s151 + $0x44] sm:$0xf] %v186
              $region45: #{eenetwork_forward.6} parent=39 // loop_footer
                %s149 = sadd.s32 1, %s145
              $region46: #{eenetwork_forward.6} parent=39 // loop_footer_branch
                %144 = sbr.rel target = $region42
              $region47: #{eenetwork_forward.6} parent=39 // loop_exit
                _
            $region40: #{eenetwork_forward.6} parent=31 // pred_fallthru
              _
          $region32: #{eenetwork_forward.6} parent=27 // pred_fallthru
            _
          %243 = vnop
        $region28: #{eenetwork_forward.6} parent=23 // pred_fallthru
          _
      $region24: #{eenetwork_forward.6} parent=5 // pred_fallthru
        _
      %p244 = scmp.le.s32.totalorder 1, %s9
      %p245 = scmp.lt.s32.totalorder %s9, 3
      %p246 = pnand %p244, %p245
      %p247 = pneg %p246
      // Predicated region
      $region66: #{eenetwork_forward.6} parent=5 // pred_check
        _
      $region67: #{eenetwork_forward.6} parent=5 // pred_check_branch
        %249 = sbr.rel (%p246) target = $region69
      $region68: #{eenetwork_forward.6} parent=5 // pred_region
        %s250 = ssub.s32 %s9, 1
        %s251 = sand.u32 %s22, 1
        %s252 = sand.u32 %s22, 1
        %s253 = smul.addr %s252, 72
        %s254 = scalar_lea.vmem [#allocation2], %s253
        // Predicated region
        $region70: #{eenetwork_forward.6} parent=68 // pred_check
          %p255 = pneg %p35
        $region71: #{eenetwork_forward.6} parent=68 // pred_check_branch
          %257 = sbr.rel (%p255) target = $region73
        $region72: #{eenetwork_forward.6} parent=68 // pred_region
          _
        $region73: #{eenetwork_forward.6} parent=68 // pred_fallthru
          _
        %s258 = sand.u32 %s22, 1
        %s259 = sand.u32 %s22, 1
        %s260 = smul.addr %s259, 72
        %s261 = scalar_lea.vmem [#allocation2], %s260
        %p262 = pneg %p35
        %p263 = pneg %p32
        %p264 = pneg %p56
        %p265 = pneg %p53
        %p266 = pneg %p77
        %p267 = pneg %p74
        %p268 = pneg %p103
        %p269 = pneg %p100
        %s270 = sand.u32 %s90, 1
        %s271 = sand.u32 %s90, 1
        %s272 = smul.addr %s271, 8
        %s273 = scalar_lea.vmem [#allocation3], %s272
        %v275 = vld [vmem:[%s1] sm:$0xff]
        %v276 = vld [vmem:[%s1 + $0x8] sm:$0xff]
        %v277 = vld [vmem:[%s254] sm:$0xf]
        %v278 = vld [vmem:[%s254 + $0x4] sm:$0xf]
        %v279 = vld [vmem:[%s254 + $0x8] sm:$0xf]
        %v280 = vld [vmem:[%s254 + $0xc] sm:$0xf]
        %v281 = vld [vmem:[%s254 + $0x10] sm:$0xf]
        %v282 = vld [vmem:[%s254 + $0x14] sm:$0xf]
        %v283 = vld [vmem:[%s254 + $0x18] sm:$0xf]
        %v284 = vld [vmem:[%s254 + $0x1c] sm:$0xf]
        %v285 = vld [vmem:[%s254 + $0x20] sm:$0xf]
        %v286 = vld [vmem:[%s254 + $0x24] sm:$0xf]
        %v287 = vld [vmem:[%s254 + $0x28] sm:$0xf]
        %v288 = vld [vmem:[%s254 + $0x2c] sm:$0xf]
        %v289 = vld [vmem:[%s254 + $0x30] sm:$0xf]
        %v290 = vld [vmem:[%s254 + $0x34] sm:$0xf]
        %v291 = vld [vmem:[%s254 + $0x38] sm:$0xf]
        %v292 = vld [vmem:[%s254 + $0x3c] sm:$0xf]
        %v293 = vld [vmem:[%s254 + $0x40] sm:$0xf]
        %v294 = vld [vmem:[%s254 + $0x44] sm:$0xf]
        %v295 = vld [vmem:[%s2] sm:$0xff]
        %v296 = vld [vmem:[%s2 + $0x8] sm:$0xff]
        %298 = vset.pattern.permute.xlu0 0
        %299 = vperm.xlu0 %298, %v295
        %v300 = vpop.permute.xlu0 %299
        %303 = vset.pattern.permute.xlu0 0
        %304 = vperm.xlu0 %303, %v296
        %v305 = vpop.permute.xlu0 %304
        %v309 = vunpack.c.l.b16 %v275
        %v310 = vunpack.c.h.b16 %v275
        %v311 = vunpack.c.l.b16 %v276
        %v312 = vunpack.c.h.b16 %v276
        %v313 = vpack.c.b16 %v311, %v309
        %v314 = vpack.c.b16 %v312, %v310
        %v334 = vunpack.c.l.b16 %v277
        %v335 = vunpack.c.l.b16 %v278
        %v336 = vunpack.c.l.b16 %v279
        %v337 = vunpack.c.l.b16 %v280
        %v338 = vunpack.c.l.b16 %v281
        %v339 = vunpack.c.l.b16 %v282
        %v340 = vunpack.c.l.b16 %v283
        %v341 = vunpack.c.l.b16 %v284
        %v342 = vunpack.c.l.b16 %v285
        %v343 = vunpack.c.l.b16 %v286
        %v344 = vunpack.c.l.b16 %v287
        %v345 = vunpack.c.l.b16 %v288
        %v346 = vunpack.c.l.b16 %v289
        %v347 = vunpack.c.l.b16 %v290
        %v348 = vunpack.c.l.b16 %v291
        %v349 = vunpack.c.l.b16 %v292
        %v350 = vunpack.c.l.b16 %v293
        %v351 = vunpack.c.l.b16 %v294
        %v352 = vpack.c.b16 %v335, %v334
        %v353 = vpack.c.b16 %v337, %v336
        %v354 = vpack.c.b16 %v339, %v338
        %v355 = vpack.c.b16 %v341, %v340
        %v356 = vpack.c.b16 %v343, %v342
        %v357 = vpack.c.b16 %v345, %v344
        %v358 = vpack.c.b16 %v347, %v346
        %v359 = vpack.c.b16 %v349, %v348
        %v360 = vpack.c.b16 %v351, %v350
        %vm370 = vcmask 130048
        %v372 = vsel %vm370, %v314, 0
        %374 = vmatprep.subr.bf16.mxu0 0
        %375 = vmatpush1.bf16.msra.mxu0 %v352
        %376 = vmatprep.subr.bf16.mxu0 0
        %377 = vmatpush1.bf16.msra.mxu0 %v353
        %378 = vmatprep.subr.bf16.mxu0 0
        %379 = vmatpush1.bf16.msra.mxu0 %v354
        %380 = vmatprep.subr.bf16.mxu0 0
        %381 = vmatpush1.bf16.msra.mxu0 %v355
        %382 = vmatprep.subr.bf16.mxu0 0
        %383 = vmatpush1.bf16.msra.mxu0 %v356
        %384 = vmatprep.subr.bf16.mxu0 0
        %385 = vmatpush1.bf16.msra.mxu0 %v357
        %386 = vmatprep.subr.bf16.mxu0 0
        %387 = vmatpush1.bf16.msra.mxu0 %v358
        %388 = vmatprep.subr.bf16.mxu0 0
        %389 = vmatpush1.bf16.msra.mxu0 %v359
        %390 = vmatprep.subr.bf16.mxu0 0
        %391 = vmatpush1.bf16.msra.mxu0 %v360
        %392 = vmatprep.subr.bf16.mxu0 0
        %393 = vmatpush1.bf16.msra.mxu0 0
        %394 = vmatprep.subr.bf16.mxu0 0
        %395 = vmatpush1.bf16.msra.mxu0 0
        %396 = vmatprep.subr.bf16.mxu0 0
        %397 = vmatpush1.bf16.msra.mxu0 0
        %398 = vmatprep.subr.bf16.mxu0 0
        %399 = vmatpush1.bf16.msra.mxu0 0
        %400 = vmatprep.subr.bf16.mxu0 0
        %401 = vmatpush1.bf16.msra.mxu0 0
        %402 = vmatprep.subr.bf16.mxu0 0
        %403 = vmatpush1.bf16.msra.mxu0 0
        %404 = vmatprep.subr.bf16.mxu0 0
        %405 = vmatpush1.bf16.msra.mxu0 0
        %406 = vmatprep.mubr.bf16.mxu0 %v372
        %407 = vmatmul.mubr.bf16.gmra.mrb[0].mxu0 %v313
        %v408 = vpop.f32.mrb[0].mxu0
        %v409 = vadd.f32 %v300, %v408
        %v410 = vpop.f32.mrb[0].mxu0
        %v411 = vpop.f32.mrb[0].mxu0
        %v412 = vadd.f32 %v305, %v411
        %v413 = vpop.f32.mrb[0].mxu0
        %414 = vdwg.mxu0
        %v415 = vmax.f32 %v409, 0.0
        %v416 = vmax.f32 %v412, 0.0
        %v417 = vpack.c.bf16 %v416, %v415
        %v419 = vunpack.c.l.b16 %v417
        %v420 = vunpack.c.h.b16 %v417
        %v421 = vpack.c.b16 %v419, %v419
        %v422 = vpack.c.b16 %v420, %v420
        %425 = vst [vmem:[%s273] sm:$0xf] %v421
        %426 = vst [vmem:[%s273 + $0x4] sm:$0xf] %v422
        %s427 = sand.u32 %s90, 1
        %s428 = sand.u32 %s90, 1
        %s429 = smul.addr %s428, 8
        %s430 = scalar_lea.vmem [#allocation3], %s429
        // Predicated region
        $region74: #{eenetwork_forward.6} parent=68 // pred_check
          %p431 = pneg %p100
        $region75: #{eenetwork_forward.6} parent=68 // pred_check_branch
          %433 = sbr.rel (%p431) target = $region77
        $region76: #{eenetwork_forward.6} parent=68 // pred_region
          %s434 = smul.addr %s14, 4
          %s435 = scalar_lea.vmem %s3, %s434
          // Predicated region
          $region78: #{eenetwork_forward.6} parent=76 // pred_check
            _
          $region79: #{eenetwork_forward.6} parent=76 // pred_check_branch
            %437 = sbr.rel (0) target = $region81
          $region80: #{eenetwork_forward.6} parent=76 // pred_region
            // Predicated region
            $region82: #{eenetwork_forward.6} parent=80 // pred_check
              _
            $region83: #{eenetwork_forward.6} parent=80 // pred_check_branch
              %439 = sbr.rel target = $region85
            $region84: #{eenetwork_forward.6} parent=80 // pred_region
              // Predicated region
              $region97: #{eenetwork_forward.6} parent=84 // pred_check
                _
              $region98: #{eenetwork_forward.6} parent=84 // pred_check_branch
                %456 = sbr.rel (0) target = $region100
              $region99: #{eenetwork_forward.6} parent=84 // pred_region
                loop: start=0, step=1, limit=1
                $region101: #{eenetwork_forward.6} parent=99 // loop_pre_header
                  _
                $region102: #{eenetwork_forward.6} parent=99 // loop_header
                  %s458 = sphi 0, %s462
                  %p459 = scmp.ge.s32.totalorder %s458, 1
                  %s463 = sphi %s430, %s430
                  %s464 = sphi %s435, %s435
                $region103: #{eenetwork_forward.6} parent=99 // loop_header_branch
                  %461 = sbr.rel (%p459) target = $region107
                $region104: #{eenetwork_forward.6} parent=99 // loop_body
                  _
                $region105: #{eenetwork_forward.6} parent=99 // loop_footer
                  %s462 = sadd.s32 1, %s458
                $region106: #{eenetwork_forward.6} parent=99 // loop_footer_branch
                  %457 = sbr.rel target = $region102
                $region107: #{eenetwork_forward.6} parent=99 // loop_exit
                  _
                loop: start=0, step=1, limit=1
                $region108: #{eenetwork_forward.6} parent=99 // loop_pre_header
                  _
                $region109: #{eenetwork_forward.6} parent=99 // loop_header
                  %s467 = sphi 0, %s471
                  %p468 = scmp.ge.s32.totalorder %s467, 1
                  %s472 = sphi %s430, %s430
                  %s473 = sphi %s435, %s435
                $region110: #{eenetwork_forward.6} parent=99 // loop_header_branch
                  %470 = sbr.rel (%p468) target = $region114
                $region111: #{eenetwork_forward.6} parent=99 // loop_body
                  %v474 = vld [vmem:[%s472] sm:$0xf]
                  %475 = vst [vmem:[%s473] sm:$0xf] %v474
                  %v476 = vld [vmem:[%s472 + $0x4] sm:$0xf]
                  %477 = vst [vmem:[%s473 + $0x8] sm:$0xf] %v476
                $region112: #{eenetwork_forward.6} parent=99 // loop_footer
                  %s471 = sadd.s32 1, %s467
                $region113: #{eenetwork_forward.6} parent=99 // loop_footer_branch
                  %466 = sbr.rel target = $region109
                $region114: #{eenetwork_forward.6} parent=99 // loop_exit
                  _
              $region100: #{eenetwork_forward.6} parent=84 // pred_fallthru
                _
            $region85: #{eenetwork_forward.6} parent=80 // pred_fallthru
              _
            // Predicated region
            $region86: #{eenetwork_forward.6} parent=80 // pred_check
              _
            $region87: #{eenetwork_forward.6} parent=80 // pred_check_branch
              %441 = sbr.rel (0) target = $region89
            $region88: #{eenetwork_forward.6} parent=80 // pred_region
              loop: start=0, step=1, limit=1
              $region90: #{eenetwork_forward.6} parent=88 // loop_pre_header
                _
              $region91: #{eenetwork_forward.6} parent=88 // loop_header
                %s444 = sphi 0, %s448
                %p445 = scmp.ge.s32.totalorder %s444, 1
                %s449 = sphi %s430, %s430
                %s450 = sphi %s435, %s435
              $region92: #{eenetwork_forward.6} parent=88 // loop_header_branch
                %447 = sbr.rel (%p445) target = $region96
              $region93: #{eenetwork_forward.6} parent=88 // loop_body
                %v451 = vld [vmem:[%s449] sm:$0xf]
                %452 = vst [vmem:[%s450] sm:$0xf] %v451
                %v453 = vld [vmem:[%s449 + $0x4] sm:$0xf]
                %454 = vst [vmem:[%s450 + $0x8] sm:$0xf] %v453
              $region94: #{eenetwork_forward.6} parent=88 // loop_footer
                %s448 = sadd.s32 1, %s444
              $region95: #{eenetwork_forward.6} parent=88 // loop_footer_branch
                %443 = sbr.rel target = $region91
              $region96: #{eenetwork_forward.6} parent=88 // loop_exit
                _
            $region89: #{eenetwork_forward.6} parent=80 // pred_fallthru
              _
          $region81: #{eenetwork_forward.6} parent=76 // pred_fallthru
            _
          %478 = vnop
        $region77: #{eenetwork_forward.6} parent=68 // pred_fallthru
          _
      $region69: #{eenetwork_forward.6} parent=5 // pred_fallthru
        _
      %p479 = scmp.le.s32.totalorder 2, %s9
      // Predicated region
      $region115: #{eenetwork_forward.6} parent=5 // pred_check
        %p480 = pneg %p479
      $region116: #{eenetwork_forward.6} parent=5 // pred_check_branch
        %482 = sbr.rel (%p480) target = $region118
      $region117: #{eenetwork_forward.6} parent=5 // pred_region
        %s483 = ssub.s32 %s9, 2
        // Predicated region
        $region119: #{eenetwork_forward.6} parent=117 // pred_check
          %p484 = pneg %p106
        $region120: #{eenetwork_forward.6} parent=117 // pred_check_branch
          %486 = sbr.rel (%p484) target = $region122
        $region121: #{eenetwork_forward.6} parent=117 // pred_region
          %s487 = sand.u32 %s91, 1
          %s488 = sand.u32 %s91, 1
          %s489 = smul.addr %s488, 8
          %s490 = scalar_lea.vmem [#allocation3], %s489
        $region122: #{eenetwork_forward.6} parent=117 // pred_fallthru
          _
      $region118: #{eenetwork_forward.6} parent=5 // pred_fallthru
        _
    $region6: #{eenetwork_forward.6} parent=1 // loop_footer
      %s13 = sadd.s32 1, %s9
    $region7: #{eenetwork_forward.6} parent=1 // loop_footer_branch
      %8 = sbr.rel target = $region3
    $region8: #{eenetwork_forward.6} parent=1 // loop_exit
      _

// kernel: eenetwork_forward.7
$region0: #{eenetwork_forward.7}
  #allocation0 [shape = 'u32[]', space=smem, size = 0x4, offset = 0x4, fixed_abs, tag = 'smem constant byte address 0x4 - core index']
  #allocation1 [shape = 'u32[144,128]{1,0:T(1,128)}', space=vmem, size = 0x12000, scoped, tag = 'internal scratch']
  %s0 = inlined_call_operand.vmem [shape: bf16[4,784], index: 0, kind: input, shape index: {}]
  %s1 = inlined_call_operand.vmem [shape: f32[2,16], index: 1, kind: input, shape index: {}]
  %s2 = inlined_call_operand.vmem [shape: bf16[784,128], index: 2, kind: input, shape index: {}]
  %s3 = inlined_call_operand.vmem [shape: bf16[16,128], index: 3, kind: input, shape index: {}]
  %s4 = inlined_call_operand.vmem [shape: f32[1,128], index: 4, kind: input, shape index: {}]
  %s5 = inlined_call_operand.vmem [shape: bf16[128,6], index: 5, kind: input, shape index: {}]
  %s6 = inlined_call_operand.vmem [shape: f32[1,6], index: 6, kind: input, shape index: {}]
  %s7 = inlined_call_operand.hbm [shape: f32[2,6], index: 7, kind: output, shape index: {}]
  %s8 = sld [smem:[#allocation0]]
  $region38: #{eenetwork_forward.7} parent=0
    _
  %s10 = ssub.s32 1, %s8
  %s11 = scalar_select 0, %s10, %s8
  $region1: #{eenetwork_forward.7} parent=0
    #allocation2 [shape = 'u8[1024]{0}', space=vmem, size = 0x400, scoped, tag = 'output window, operand 0, single buffered']
    #allocation3 [shape = 's32[1]{0}', space=sflag, size = 0x4, scoped, tag = 'scoped memory for eenetwork_forward.7']
    %12 = vsyncpa [#allocation3], 0
    // Predicated region
    $region2: #{eenetwork_forward.7} parent=1 // pred_check
      _
    $region3: #{eenetwork_forward.7} parent=1 // pred_check_branch
      %14 = sbr.rel (0) target = $region5
    $region4: #{eenetwork_forward.7} parent=1 // pred_region
      _
    $region5: #{eenetwork_forward.7} parent=1 // pred_fallthru
      _
    // Predicated region
    $region6: #{eenetwork_forward.7} parent=1 // pred_check
      _
    $region7: #{eenetwork_forward.7} parent=1 // pred_check_branch
      %16 = sbr.rel (0) target = $region9
    $region8: #{eenetwork_forward.7} parent=1 // pred_region
      _
    $region9: #{eenetwork_forward.7} parent=1 // pred_fallthru
      _
    // Predicated region
    $region10: #{eenetwork_forward.7} parent=1 // pred_check
      _
    $region11: #{eenetwork_forward.7} parent=1 // pred_check_branch
      %18 = sbr.rel (0) target = $region13
    $region12: #{eenetwork_forward.7} parent=1 // pred_region
      _
    $region13: #{eenetwork_forward.7} parent=1 // pred_fallthru
      _
    // Predicated region
    $region14: #{eenetwork_forward.7} parent=1 // pred_check
      _
    $region15: #{eenetwork_forward.7} parent=1 // pred_check_branch
      %20 = sbr.rel (0) target = $region17
    $region16: #{eenetwork_forward.7} parent=1 // pred_region
      _
    $region17: #{eenetwork_forward.7} parent=1 // pred_fallthru
      _
    // Predicated region
    $region18: #{eenetwork_forward.7} parent=1 // pred_check
      _
    $region19: #{eenetwork_forward.7} parent=1 // pred_check_branch
      %22 = sbr.rel (0) target = $region21
    $region20: #{eenetwork_forward.7} parent=1 // pred_region
      _
    $region21: #{eenetwork_forward.7} parent=1 // pred_fallthru
      _
    // Predicated region
    $region22: #{eenetwork_forward.7} parent=1 // pred_check
      _
    $region23: #{eenetwork_forward.7} parent=1 // pred_check_branch
      %24 = sbr.rel (0) target = $region25
    $region24: #{eenetwork_forward.7} parent=1 // pred_region
      _
    $region25: #{eenetwork_forward.7} parent=1 // pred_fallthru
      _
    // Predicated region
    $region26: #{eenetwork_forward.7} parent=1 // pred_check
      _
    $region27: #{eenetwork_forward.7} parent=1 // pred_check_branch
      %26 = sbr.rel (0) target = $region29
    $region28: #{eenetwork_forward.7} parent=1 // pred_region
      _
    $region29: #{eenetwork_forward.7} parent=1 // pred_fallthru
      _
    %v28 = vld [vmem:[%s0] sm:$0xff]
    %v29 = vld [vmem:[%s0 + $0x8] sm:$0x3f]
    %v30 = vunpack.c.l.bf16 %v28
    %v31 = vunpack.c.h.bf16 %v28
    %v32 = vunpack.c.l.bf16 %v29
    %v33 = vunpack.c.h.bf16 %v29
    %v38 = vrot.slane %v30, 6
    %v39 = vrot.slane %v38, 4
    %v40 = vrot.slane %v31, 6
    %v41 = vrot.slane %v40, 4
    %v42 = vrot.slane %v32, 6
    %v43 = vrot.slane %v42, 4
    %v44 = vrot.slane %v33, 6
    %v45 = vrot.slane %v44, 4
    %v50 = vsub.f32 %v30, %v39
    %v51 = vsub.f32 %v31, %v41
    %v52 = vsub.f32 %v32, %v43
    %v53 = vsub.f32 %v33, %v45
    %v57 = vcombine.high %v50, %v50
    %v58 = vcombine.high %v51, %v51
    %v59 = vcombine.high %v52, %v52
    %v63 = vpack.c.bf16 %v50, %v50
    %v64 = vpack.c.bf16 %v57, %v57
    %v65 = vpack.c.bf16 %v51, %v51
    %v66 = vpack.c.bf16 %v58, %v58
    %v67 = vpack.c.bf16 %v52, %v52
    %v68 = vpack.c.bf16 %v59, %v59
    %v69 = vpack.c.bf16 %v53, %v53
    %v70 = vld [vmem:[%s2] sm:$0xf]
    %v71 = vld [vmem:[%s2 + $0x4] sm:$0xf]
    %v72 = vld [vmem:[%s2 + $0x8] sm:$0xf]
    %v73 = vld [vmem:[%s2 + $0xc] sm:$0xf]
    %v74 = vld [vmem:[%s2 + $0x10] sm:$0xf]
    %v75 = vld [vmem:[%s2 + $0x14] sm:$0xf]
    %v76 = vld [vmem:[%s2 + $0x18] sm:$0xf]
    %v77 = vld [vmem:[%s2 + $0x1c] sm:$0xf]
    %v78 = vld [vmem:[%s2 + $0x20] sm:$0xf]
    %v79 = vld [vmem:[%s2 + $0x24] sm:$0xf]
    %v80 = vld [vmem:[%s2 + $0x28] sm:$0xf]
    %v81 = vld [vmem:[%s2 + $0x2c] sm:$0xf]
    %v82 = vld [vmem:[%s2 + $0x30] sm:$0xf]
    %v83 = vld [vmem:[%s2 + $0x34] sm:$0xf]
    %v84 = vld [vmem:[%s2 + $0x38] sm:$0xf]
    %v85 = vld [vmem:[%s2 + $0x3c] sm:$0xf]
    %v86 = vld [vmem:[%s2 + $0x40] sm:$0xf]
    %v87 = vld [vmem:[%s2 + $0x44] sm:$0xf]
    %v88 = vld [vmem:[%s2 + $0x48] sm:$0xf]
    %v89 = vld [vmem:[%s2 + $0x4c] sm:$0xf]
    %v90 = vld [vmem:[%s2 + $0x50] sm:$0xf]
    %v91 = vld [vmem:[%s2 + $0x54] sm:$0xf]
    %v92 = vld [vmem:[%s2 + $0x58] sm:$0xf]
    %v93 = vld [vmem:[%s2 + $0x5c] sm:$0xf]
    %v94 = vld [vmem:[%s2 + $0x60] sm:$0xf]
    %v95 = vld [vmem:[%s2 + $0x64] sm:$0xf]
    %v96 = vld [vmem:[%s2 + $0x68] sm:$0xf]
    %v97 = vld [vmem:[%s2 + $0x6c] sm:$0xf]
    %v98 = vld [vmem:[%s2 + $0x70] sm:$0xf]
    %v99 = vld [vmem:[%s2 + $0x74] sm:$0xf]
    %v100 = vld [vmem:[%s2 + $0x78] sm:$0xf]
    %v101 = vld [vmem:[%s2 + $0x7c] sm:$0xf]
    %v102 = vld [vmem:[%s2 + $0x80] sm:$0xf]
    %v103 = vld [vmem:[%s2 + $0x84] sm:$0xf]
    %v104 = vld [vmem:[%s2 + $0x88] sm:$0xf]
    %v105 = vld [vmem:[%s2 + $0x8c] sm:$0xf]
    %v106 = vld [vmem:[%s2 + $0x90] sm:$0xf]
    %v107 = vld [vmem:[%s2 + $0x94] sm:$0xf]
    %v108 = vld [vmem:[%s2 + $0x98] sm:$0xf]
    %v109 = vld [vmem:[%s2 + $0x9c] sm:$0xf]
    %v110 = vld [vmem:[%s2 + $0xa0] sm:$0xf]
    %v111 = vld [vmem:[%s2 + $0xa4] sm:$0xf]
    %v112 = vld [vmem:[%s2 + $0xa8] sm:$0xf]
    %v113 = vld [vmem:[%s2 + $0xac] sm:$0xf]
    %v114 = vld [vmem:[%s2 + $0xb0] sm:$0xf]
    %v115 = vld [vmem:[%s2 + $0xb4] sm:$0xf]
    %v116 = vld [vmem:[%s2 + $0xb8] sm:$0xf]
    %v117 = vld [vmem:[%s2 + $0xbc] sm:$0xf]
    %v118 = vld [vmem:[%s2 + $0xc0] sm:$0xf]
    %v119 = vld [vmem:[%s2 + $0xc4] sm:$0xf]
    %v120 = vld [vmem:[%s2 + $0xc8] sm:$0xf]
    %v121 = vld [vmem:[%s2 + $0xcc] sm:$0xf]
    %v122 = vld [vmem:[%s2 + $0xd0] sm:$0xf]
    %v123 = vld [vmem:[%s2 + $0xd4] sm:$0xf]
    %v124 = vld [vmem:[%s2 + $0xd8] sm:$0xf]
    %v125 = vld [vmem:[%s2 + $0xdc] sm:$0xf]
    %v126 = vld [vmem:[%s2 + $0xe0] sm:$0xf]
    %v127 = vld [vmem:[%s2 + $0xe4] sm:$0xf]
    %v128 = vld [vmem:[%s2 + $0xe8] sm:$0xf]
    %v129 = vld [vmem:[%s2 + $0xec] sm:$0xf]
    %v130 = vld [vmem:[%s2 + $0xf0] sm:$0xf]
    %v131 = vld [vmem:[%s2 + $0xf4] sm:$0xf]
    %v132 = vld [vmem:[%s2 + $0xf8] sm:$0xf]
    %v133 = vld [vmem:[%s2 + $0xfc] sm:$0xf]
    %v134 = vld [vmem:[%s2 + $0x100] sm:$0xf]
    %v135 = vld [vmem:[%s2 + $0x104] sm:$0xf]
    %v136 = vld [vmem:[%s2 + $0x108] sm:$0xf]
    %v137 = vld [vmem:[%s2 + $0x10c] sm:$0xf]
    %v138 = vld [vmem:[%s2 + $0x110] sm:$0xf]
    %v139 = vld [vmem:[%s2 + $0x114] sm:$0xf]
    %v140 = vld [vmem:[%s2 + $0x118] sm:$0xf]
    %v141 = vld [vmem:[%s2 + $0x11c] sm:$0xf]
    %v142 = vld [vmem:[%s2 + $0x120] sm:$0xf]
    %v143 = vld [vmem:[%s2 + $0x124] sm:$0xf]
    %v144 = vld [vmem:[%s2 + $0x128] sm:$0xf]
    %v145 = vld [vmem:[%s2 + $0x12c] sm:$0xf]
    %v146 = vld [vmem:[%s2 + $0x130] sm:$0xf]
    %v147 = vld [vmem:[%s2 + $0x134] sm:$0xf]
    %v148 = vld [vmem:[%s2 + $0x138] sm:$0xf]
    %v149 = vld [vmem:[%s2 + $0x13c] sm:$0xf]
    %v150 = vld [vmem:[%s2 + $0x140] sm:$0xf]
    %v151 = vld [vmem:[%s2 + $0x144] sm:$0xf]
    %v152 = vld [vmem:[%s2 + $0x148] sm:$0xf]
    %v153 = vld [vmem:[%s2 + $0x14c] sm:$0xf]
    %v154 = vld [vmem:[%s2 + $0x150] sm:$0xf]
    %v155 = vld [vmem:[%s2 + $0x154] sm:$0xf]
    %v156 = vld [vmem:[%s2 + $0x158] sm:$0xf]
    %v157 = vld [vmem:[%s2 + $0x15c] sm:$0xf]
    %v158 = vld [vmem:[%s2 + $0x160] sm:$0xf]
    %v159 = vld [vmem:[%s2 + $0x164] sm:$0xf]
    %v160 = vld [vmem:[%s2 + $0x168] sm:$0xf]
    %v161 = vld [vmem:[%s2 + $0x16c] sm:$0xf]
    %v162 = vld [vmem:[%s2 + $0x170] sm:$0xf]
    %v163 = vld [vmem:[%s2 + $0x174] sm:$0xf]
    %v164 = vld [vmem:[%s2 + $0x178] sm:$0xf]
    %v165 = vld [vmem:[%s2 + $0x17c] sm:$0xf]
    %v166 = vld [vmem:[%s2 + $0x180] sm:$0xf]
    %v167 = vld [vmem:[%s2 + $0x184] sm:$0xf]
    %v168 = vld [vmem:[%s1] sm:$0x3]
    %v169 = vpack.c.bf16 %v168, %v168
    %v170 = vld [vmem:[%s3] sm:$0xf]
    %v171 = vld [vmem:[%s3 + $0x4] sm:$0xf]
    %v174 = vunpack.c.l.b16 %v170
    %v175 = vunpack.c.l.b16 %v171
    %v176 = vpack.c.b16 %v175, %v174
    %vm178 = vcmask 130048
    %v180 = vsel %vm178, %v169, 0
    %182 = vmatprep.subr.bf16.mxu0 0
    %183 = vmatpush1.bf16.msra.mxu0 %v176
    %184 = vmatprep.subr.bf16.mxu0 0
    %185 = vmatpush1.bf16.msra.mxu0 0
    %186 = vmatprep.subr.bf16.mxu0 0
    %187 = vmatpush1.bf16.msra.mxu0 0
    %188 = vmatprep.subr.bf16.mxu0 0
    %189 = vmatpush1.bf16.msra.mxu0 0
    %190 = vmatprep.subr.bf16.mxu0 0
    %191 = vmatpush1.bf16.msra.mxu0 0
    %192 = vmatprep.subr.bf16.mxu0 0
    %193 = vmatpush1.bf16.msra.mxu0 0
    %194 = vmatprep.subr.bf16.mxu0 0
    %195 = vmatpush1.bf16.msra.mxu0 0
    %196 = vmatprep.subr.bf16.mxu0 0
    %197 = vmatpush1.bf16.msra.mxu0 0
    %198 = vmatprep.subr.bf16.mxu0 0
    %199 = vmatpush1.bf16.msra.mxu0 0
    %200 = vmatprep.subr.bf16.mxu0 0
    %201 = vmatpush1.bf16.msra.mxu0 0
    %202 = vmatprep.subr.bf16.mxu0 0
    %203 = vmatpush1.bf16.msra.mxu0 0
    %204 = vmatprep.subr.bf16.mxu0 0
    %205 = vmatpush1.bf16.msra.mxu0 0
    %206 = vmatprep.subr.bf16.mxu0 0
    %207 = vmatpush1.bf16.msra.mxu0 0
    %208 = vmatprep.subr.bf16.mxu0 0
    %209 = vmatpush1.bf16.msra.mxu0 0
    %210 = vmatprep.subr.bf16.mxu0 0
    %211 = vmatpush1.bf16.msra.mxu0 0
    %212 = vmatprep.subr.bf16.mxu0 0
    %213 = vmatpush1.bf16.msra.mxu0 0
    %214 = vmatprep.mubr.bf16.mxu0 0
    %215 = vmatmul.mubr.bf16.gmra.mrb[0].mxu0 %v180
    %v216 = vpop.f32.mrb[0].mxu0
    %v217 = vadd.f32 0.0, %v216
    %v218 = vpop.f32.mrb[0].mxu0
    %v219 = vpop.f32.mrb[0].mxu0
    %v220 = vpop.f32.mrb[0].mxu0
    %221 = vdwg.mxu0
    %v320 = vunpack.c.l.b16 %v70
    %v321 = vunpack.c.l.b16 %v71
    %v322 = vunpack.c.l.b16 %v72
    %v323 = vunpack.c.l.b16 %v73
    %v324 = vunpack.c.l.b16 %v74
    %v325 = vunpack.c.l.b16 %v75
    %v326 = vunpack.c.l.b16 %v76
    %v327 = vunpack.c.l.b16 %v77
    %v328 = vunpack.c.l.b16 %v78
    %v329 = vunpack.c.l.b16 %v79
    %v330 = vunpack.c.l.b16 %v80
    %v331 = vunpack.c.l.b16 %v81
    %v332 = vunpack.c.l.b16 %v82
    %v333 = vunpack.c.l.b16 %v83
    %v334 = vunpack.c.l.b16 %v84
    %v335 = vunpack.c.l.b16 %v85
    %v336 = vunpack.c.l.b16 %v86
    %v337 = vunpack.c.l.b16 %v87
    %v338 = vunpack.c.l.b16 %v88
    %v339 = vunpack.c.l.b16 %v89
    %v340 = vunpack.c.l.b16 %v90
    %v341 = vunpack.c.l.b16 %v91
    %v342 = vunpack.c.l.b16 %v92
    %v343 = vunpack.c.l.b16 %v93
    %v344 = vunpack.c.l.b16 %v94
    %v345 = vunpack.c.l.b16 %v95
    %v346 = vunpack.c.l.b16 %v96
    %v347 = vunpack.c.l.b16 %v97
    %v348 = vunpack.c.l.b16 %v98
    %v349 = vunpack.c.l.b16 %v99
    %v350 = vunpack.c.l.b16 %v100
    %v351 = vunpack.c.l.b16 %v101
    %v352 = vunpack.c.l.b16 %v102
    %v353 = vunpack.c.l.b16 %v103
    %v354 = vunpack.c.l.b16 %v104
    %v355 = vunpack.c.l.b16 %v105
    %v356 = vunpack.c.l.b16 %v106
    %v357 = vunpack.c.l.b16 %v107
    %v358 = vunpack.c.l.b16 %v108
    %v359 = vunpack.c.l.b16 %v109
    %v360 = vunpack.c.l.b16 %v110
    %v361 = vunpack.c.l.b16 %v111
    %v362 = vunpack.c.l.b16 %v112
    %v363 = vunpack.c.l.b16 %v113
    %v364 = vunpack.c.l.b16 %v114
    %v365 = vunpack.c.l.b16 %v115
    %v366 = vunpack.c.l.b16 %v116
    %v367 = vunpack.c.l.b16 %v117
    %v368 = vunpack.c.l.b16 %v118
    %v369 = vunpack.c.l.b16 %v119
    %v370 = vunpack.c.l.b16 %v120
    %v371 = vunpack.c.l.b16 %v121
    %v372 = vunpack.c.l.b16 %v122
    %v373 = vunpack.c.l.b16 %v123
    %v374 = vunpack.c.l.b16 %v124
    %v375 = vunpack.c.l.b16 %v125
    %v376 = vunpack.c.l.b16 %v126
    %v377 = vunpack.c.l.b16 %v127
    %v378 = vunpack.c.l.b16 %v128
    %v379 = vunpack.c.l.b16 %v129
    %v380 = vunpack.c.l.b16 %v130
    %v381 = vunpack.c.l.b16 %v131
    %v382 = vunpack.c.l.b16 %v132
    %v383 = vunpack.c.l.b16 %v133
    %v384 = vunpack.c.l.b16 %v134
    %v385 = vunpack.c.l.b16 %v135
    %v386 = vunpack.c.l.b16 %v136
    %v387 = vunpack.c.l.b16 %v137
    %v388 = vunpack.c.l.b16 %v138
    %v389 = vunpack.c.l.b16 %v139
    %v390 = vunpack.c.l.b16 %v140
    %v391 = vunpack.c.l.b16 %v141
    %v392 = vunpack.c.l.b16 %v142
    %v393 = vunpack.c.l.b16 %v143
    %v394 = vunpack.c.l.b16 %v144
    %v395 = vunpack.c.l.b16 %v145
    %v396 = vunpack.c.l.b16 %v146
    %v397 = vunpack.c.l.b16 %v147
    %v398 = vunpack.c.l.b16 %v148
    %v399 = vunpack.c.l.b16 %v149
    %v400 = vunpack.c.l.b16 %v150
    %v401 = vunpack.c.l.b16 %v151
    %v402 = vunpack.c.l.b16 %v152
    %v403 = vunpack.c.l.b16 %v153
    %v404 = vunpack.c.l.b16 %v154
    %v405 = vunpack.c.l.b16 %v155
    %v406 = vunpack.c.l.b16 %v156
    %v407 = vunpack.c.l.b16 %v157
    %v408 = vunpack.c.l.b16 %v158
    %v409 = vunpack.c.l.b16 %v159
    %v410 = vunpack.c.l.b16 %v160
    %v411 = vunpack.c.l.b16 %v161
    %v412 = vunpack.c.l.b16 %v162
    %v413 = vunpack.c.l.b16 %v163
    %v414 = vunpack.c.l.b16 %v164
    %v415 = vunpack.c.l.b16 %v165
    %v416 = vunpack.c.l.b16 %v166
    %v417 = vunpack.c.l.b16 %v167
    %v418 = vpack.c.b16 %v321, %v320
    %v419 = vpack.c.b16 %v323, %v322
    %v420 = vpack.c.b16 %v325, %v324
    %v421 = vpack.c.b16 %v327, %v326
    %v422 = vpack.c.b16 %v329, %v328
    %v423 = vpack.c.b16 %v331, %v330
    %v424 = vpack.c.b16 %v333, %v332
    %v425 = vpack.c.b16 %v335, %v334
    %v426 = vpack.c.b16 %v337, %v336
    %v427 = vpack.c.b16 %v339, %v338
    %v428 = vpack.c.b16 %v341, %v340
    %v429 = vpack.c.b16 %v343, %v342
    %v430 = vpack.c.b16 %v345, %v344
    %v431 = vpack.c.b16 %v347, %v346
    %v432 = vpack.c.b16 %v349, %v348
    %v433 = vpack.c.b16 %v351, %v350
    %v434 = vpack.c.b16 %v353, %v352
    %v435 = vpack.c.b16 %v355, %v354
    %v436 = vpack.c.b16 %v357, %v356
    %v437 = vpack.c.b16 %v359, %v358
    %v438 = vpack.c.b16 %v361, %v360
    %v439 = vpack.c.b16 %v363, %v362
    %v440 = vpack.c.b16 %v365, %v364
    %v441 = vpack.c.b16 %v367, %v366
    %v442 = vpack.c.b16 %v369, %v368
    %v443 = vpack.c.b16 %v371, %v370
    %v444 = vpack.c.b16 %v373, %v372
    %v445 = vpack.c.b16 %v375, %v374
    %v446 = vpack.c.b16 %v377, %v376
    %v447 = vpack.c.b16 %v379, %v378
    %v448 = vpack.c.b16 %v381, %v380
    %v449 = vpack.c.b16 %v383, %v382
    %v450 = vpack.c.b16 %v385, %v384
    %v451 = vpack.c.b16 %v387, %v386
    %v452 = vpack.c.b16 %v389, %v388
    %v453 = vpack.c.b16 %v391, %v390
    %v454 = vpack.c.b16 %v393, %v392
    %v455 = vpack.c.b16 %v395, %v394
    %v456 = vpack.c.b16 %v397, %v396
    %v457 = vpack.c.b16 %v399, %v398
    %v458 = vpack.c.b16 %v401, %v400
    %v459 = vpack.c.b16 %v403, %v402
    %v460 = vpack.c.b16 %v405, %v404
    %v461 = vpack.c.b16 %v407, %v406
    %v462 = vpack.c.b16 %v409, %v408
    %v463 = vpack.c.b16 %v411, %v410
    %v464 = vpack.c.b16 %v413, %v412
    %v465 = vpack.c.b16 %v415, %v414
    %v466 = vpack.c.b16 %v417, %v416
    %v517 = vsel %vm178, %v69, 0
    %519 = vmatprep.subr.bf16.mxu0 0
    %520 = vmatpush1.bf16.msra.mxu0 %v418
    %521 = vmatprep.subr.bf16.mxu0 0
    %522 = vmatpush1.bf16.msra.mxu0 %v419
    %523 = vmatprep.subr.bf16.mxu0 0
    %524 = vmatpush1.bf16.msra.mxu0 %v420
    %525 = vmatprep.subr.bf16.mxu0 0
    %526 = vmatpush1.bf16.msra.mxu0 %v421
    %527 = vmatprep.subr.bf16.mxu0 0
    %528 = vmatpush1.bf16.msra.mxu0 %v422
    %529 = vmatprep.subr.bf16.mxu0 0
    %530 = vmatpush1.bf16.msra.mxu0 %v423
    %531 = vmatprep.subr.bf16.mxu0 0
    %532 = vmatpush1.bf16.msra.mxu0 %v424
    %533 = vmatprep.subr.bf16.mxu0 0
    %534 = vmatpush1.bf16.msra.mxu0 %v425
    %535 = vmatprep.subr.bf16.mxu0 0
    %536 = vmatpush1.bf16.msra.mxu0 %v426
    %537 = vmatprep.subr.bf16.mxu0 0
    %538 = vmatpush1.bf16.msra.mxu0 %v427
    %539 = vmatprep.subr.bf16.mxu0 0
    %540 = vmatpush1.bf16.msra.mxu0 %v428
    %541 = vmatprep.subr.bf16.mxu0 0
    %542 = vmatpush1.bf16.msra.mxu0 %v429
    %543 = vmatprep.subr.bf16.mxu0 0
    %544 = vmatpush1.bf16.msra.mxu0 %v430
    %545 = vmatprep.subr.bf16.mxu0 0
    %546 = vmatpush1.bf16.msra.mxu0 %v431
    %547 = vmatprep.subr.bf16.mxu0 0
    %548 = vmatpush1.bf16.msra.mxu0 %v432
    %549 = vmatprep.subr.bf16.mxu0 0
    %550 = vmatpush1.bf16.msra.mxu0 %v433
    %551 = vmatprep.mubr.bf16.mxu0 %v64
    %552 = vmatmul.mubr.bf16.gmra.mrb[0].mxu0 %v63
    %v553 = vpop.f32.mrb[0].mxu0
    %v554 = vadd.f32 %v217, %v553
    %v555 = vpop.f32.mrb[0].mxu0
    %v556 = vpop.f32.mrb[0].mxu0
    %v557 = vpop.f32.mrb[0].mxu0
    %558 = vdwg.mxu0
    %559 = vmatprep.subr.bf16.mxu0 0
    %560 = vmatpush1.bf16.msra.mxu0 %v434
    %561 = vmatprep.subr.bf16.mxu0 0
    %562 = vmatpush1.bf16.msra.mxu0 %v435
    %563 = vmatprep.subr.bf16.mxu0 0
    %564 = vmatpush1.bf16.msra.mxu0 %v436
    %565 = vmatprep.subr.bf16.mxu0 0
    %566 = vmatpush1.bf16.msra.mxu0 %v437
    %567 = vmatprep.subr.bf16.mxu0 0
    %568 = vmatpush1.bf16.msra.mxu0 %v438
    %569 = vmatprep.subr.bf16.mxu0 0
    %570 = vmatpush1.bf16.msra.mxu0 %v439
    %571 = vmatprep.subr.bf16.mxu0 0
    %572 = vmatpush1.bf16.msra.mxu0 %v440
    %573 = vmatprep.subr.bf16.mxu0 0
    %574 = vmatpush1.bf16.msra.mxu0 %v441
    %575 = vmatprep.subr.bf16.mxu0 0
    %576 = vmatpush1.bf16.msra.mxu0 %v442
    %577 = vmatprep.subr.bf16.mxu0 0
    %578 = vmatpush1.bf16.msra.mxu0 %v443
    %579 = vmatprep.subr.bf16.mxu0 0
    %580 = vmatpush1.bf16.msra.mxu0 %v444
    %581 = vmatprep.subr.bf16.mxu0 0
    %582 = vmatpush1.bf16.msra.mxu0 %v445
    %583 = vmatprep.subr.bf16.mxu0 0
    %584 = vmatpush1.bf16.msra.mxu0 %v446
    %585 = vmatprep.subr.bf16.mxu0 0
    %586 = vmatpush1.bf16.msra.mxu0 %v447
    %587 = vmatprep.subr.bf16.mxu0 0
    %588 = vmatpush1.bf16.msra.mxu0 %v448
    %589 = vmatprep.subr.bf16.mxu0 0
    %590 = vmatpush1.bf16.msra.mxu0 %v449
    %591 = vmatprep.mubr.bf16.mxu0 %v66
    %592 = vmatmul.mubr.bf16.gmra.mrb[0].mxu0 %v65
    %v593 = vpop.f32.mrb[0].mxu0
    %v594 = vadd.f32 %v554, %v593
    %v595 = vpop.f32.mrb[0].mxu0
    %v596 = vpop.f32.mrb[0].mxu0
    %v597 = vpop.f32.mrb[0].mxu0
    %598 = vdwg.mxu0
    %599 = vmatprep.subr.bf16.mxu0 0
    %600 = vmatpush1.bf16.msra.mxu0 %v450
    %601 = vmatprep.subr.bf16.mxu0 0
    %602 = vmatpush1.bf16.msra.mxu0 %v451
    %603 = vmatprep.subr.bf16.mxu0 0
    %604 = vmatpush1.bf16.msra.mxu0 %v452
    %605 = vmatprep.subr.bf16.mxu0 0
    %606 = vmatpush1.bf16.msra.mxu0 %v453
    %607 = vmatprep.subr.bf16.mxu0 0
    %608 = vmatpush1.bf16.msra.mxu0 %v454
    %609 = vmatprep.subr.bf16.mxu0 0
    %610 = vmatpush1.bf16.msra.mxu0 %v455
    %611 = vmatprep.subr.bf16.mxu0 0
    %612 = vmatpush1.bf16.msra.mxu0 %v456
    %613 = vmatprep.subr.bf16.mxu0 0
    %614 = vmatpush1.bf16.msra.mxu0 %v457
    %615 = vmatprep.subr.bf16.mxu0 0
    %616 = vmatpush1.bf16.msra.mxu0 %v458
    %617 = vmatprep.subr.bf16.mxu0 0
    %618 = vmatpush1.bf16.msra.mxu0 %v459
    %619 = vmatprep.subr.bf16.mxu0 0
    %620 = vmatpush1.bf16.msra.mxu0 %v460
    %621 = vmatprep.subr.bf16.mxu0 0
    %622 = vmatpush1.bf16.msra.mxu0 %v461
    %623 = vmatprep.subr.bf16.mxu0 0
    %624 = vmatpush1.bf16.msra.mxu0 %v462
    %625 = vmatprep.subr.bf16.mxu0 0
    %626 = vmatpush1.bf16.msra.mxu0 %v463
    %627 = vmatprep.subr.bf16.mxu0 0
    %628 = vmatpush1.bf16.msra.mxu0 %v464
    %629 = vmatprep.subr.bf16.mxu0 0
    %630 = vmatpush1.bf16.msra.mxu0 %v465
    %631 = vmatprep.mubr.bf16.mxu0 %v68
    %632 = vmatmul.mubr.bf16.gmra.mrb[0].mxu0 %v67
    %v633 = vpop.f32.mrb[0].mxu0
    %v634 = vadd.f32 %v594, %v633
    %v635 = vpop.f32.mrb[0].mxu0
    %v636 = vpop.f32.mrb[0].mxu0
    %v637 = vpop.f32.mrb[0].mxu0
    %638 = vdwg.mxu0
    %639 = vmatprep.subr.bf16.mxu0 0
    %640 = vmatpush1.bf16.msra.mxu0 %v466
    %641 = vmatprep.subr.bf16.mxu0 0
    %642 = vmatpush1.bf16.msra.mxu0 0
    %643 = vmatprep.subr.bf16.mxu0 0
    %644 = vmatpush1.bf16.msra.mxu0 0
    %645 = vmatprep.subr.bf16.mxu0 0
    %646 = vmatpush1.bf16.msra.mxu0 0
    %647 = vmatprep.subr.bf16.mxu0 0
    %648 = vmatpush1.bf16.msra.mxu0 0
    %649 = vmatprep.subr.bf16.mxu0 0
    %650 = vmatpush1.bf16.msra.mxu0 0
    %651 = vmatprep.subr.bf16.mxu0 0
    %652 = vmatpush1.bf16.msra.mxu0 0
    %653 = vmatprep.subr.bf16.mxu0 0
    %654 = vmatpush1.bf16.msra.mxu0 0
    %655 = vmatprep.subr.bf16.mxu0 0
    %656 = vmatpush1.bf16.msra.mxu0 0
    %657 = vmatprep.subr.bf16.mxu0 0
    %658 = vmatpush1.bf16.msra.mxu0 0
    %659 = vmatprep.subr.bf16.mxu0 0
    %660 = vmatpush1.bf16.msra.mxu0 0
    %661 = vmatprep.subr.bf16.mxu0 0
    %662 = vmatpush1.bf16.msra.mxu0 0
    %663 = vmatprep.subr.bf16.mxu0 0
    %664 = vmatpush1.bf16.msra.mxu0 0
    %665 = vmatprep.subr.bf16.mxu0 0
    %666 = vmatpush1.bf16.msra.mxu0 0
    %667 = vmatprep.subr.bf16.mxu0 0
    %668 = vmatpush1.bf16.msra.mxu0 0
    %669 = vmatprep.subr.bf16.mxu0 0
    %670 = vmatpush1.bf16.msra.mxu0 0
    %671 = vmatprep.mubr.bf16.mxu0 0
    %672 = vmatmul.mubr.bf16.gmra.mrb[0].mxu0 %v517
    %v673 = vpop.f32.mrb[0].mxu0
    %v674 = vadd.f32 %v634, %v673
    %v675 = vpop.f32.mrb[0].mxu0
    %v676 = vpop.f32.mrb[0].mxu0
    %v677 = vpop.f32.mrb[0].mxu0
    %678 = vdwg.mxu0
    %v679 = vld [vmem:[%s4] sm:$0x1]
    %v681 = vlaneseq
    %v682 = vshrl.u32 %v681, 7
    %v683 = vsub.s32 0, %v682
    %v684 = vrot.slane %v679, %v683
    %v686 = vadd.f32 %v674, %v684
    %v687 = vmax.f32 %v686, 0.0
    %v688 = vpack.c.bf16 %v687, %v687
    %v689 = vld [vmem:[%s5] sm:$0xf]
    %v690 = vld [vmem:[%s5 + $0x4] sm:$0xf]
    %v691 = vld [vmem:[%s5 + $0x8] sm:$0xf]
    %v692 = vld [vmem:[%s5 + $0xc] sm:$0xf]
    %v693 = vld [vmem:[%s5 + $0x10] sm:$0xf]
    %v694 = vld [vmem:[%s5 + $0x14] sm:$0xf]
    %v695 = vld [vmem:[%s5 + $0x18] sm:$0xf]
    %v696 = vld [vmem:[%s5 + $0x1c] sm:$0xf]
    %v697 = vld [vmem:[%s5 + $0x20] sm:$0xf]
    %v698 = vld [vmem:[%s5 + $0x24] sm:$0xf]
    %v699 = vld [vmem:[%s5 + $0x28] sm:$0xf]
    %v700 = vld [vmem:[%s5 + $0x2c] sm:$0xf]
    %v701 = vld [vmem:[%s5 + $0x30] sm:$0xf]
    %v702 = vld [vmem:[%s5 + $0x34] sm:$0xf]
    %v703 = vld [vmem:[%s5 + $0x38] sm:$0xf]
    %v704 = vld [vmem:[%s5 + $0x3c] sm:$0xf]
    %v705 = vld [vmem:[%s6] sm:$0x1]
    %v707 = vlaneseq
    %v708 = vshrl.u32 %v707, 7
    %v709 = vsub.s32 0, %v708
    %v710 = vrot.slane %v705, %v709
    %v728 = vunpack.c.l.b16 %v689
    %v729 = vunpack.c.l.b16 %v690
    %v730 = vunpack.c.l.b16 %v691
    %v731 = vunpack.c.l.b16 %v692
    %v732 = vunpack.c.l.b16 %v693
    %v733 = vunpack.c.l.b16 %v694
    %v734 = vunpack.c.l.b16 %v695
    %v735 = vunpack.c.l.b16 %v696
    %v736 = vunpack.c.l.b16 %v697
    %v737 = vunpack.c.l.b16 %v698
    %v738 = vunpack.c.l.b16 %v699
    %v739 = vunpack.c.l.b16 %v700
    %v740 = vunpack.c.l.b16 %v701
    %v741 = vunpack.c.l.b16 %v702
    %v742 = vunpack.c.l.b16 %v703
    %v743 = vunpack.c.l.b16 %v704
    %v744 = vpack.c.b16 %v729, %v728
    %v745 = vpack.c.b16 %v731, %v730
    %v746 = vpack.c.b16 %v733, %v732
    %v747 = vpack.c.b16 %v735, %v734
    %v748 = vpack.c.b16 %v737, %v736
    %v749 = vpack.c.b16 %v739, %v738
    %v750 = vpack.c.b16 %v741, %v740
    %v751 = vpack.c.b16 %v743, %v742
    %760 = vmatprep.subr.bf16.mxu0 0
    %761 = vmatpush1.bf16.msra.mxu0 %v744
    %762 = vmatprep.subr.bf16.mxu0 0
    %763 = vmatpush1.bf16.msra.mxu0 %v745
    %764 = vmatprep.subr.bf16.mxu0 0
    %765 = vmatpush1.bf16.msra.mxu0 %v746
    %766 = vmatprep.subr.bf16.mxu0 0
    %767 = vmatpush1.bf16.msra.mxu0 %v747
    %768 = vmatprep.subr.bf16.mxu0 0
    %769 = vmatpush1.bf16.msra.mxu0 %v748
    %770 = vmatprep.subr.bf16.mxu0 0
    %771 = vmatpush1.bf16.msra.mxu0 %v749
    %772 = vmatprep.subr.bf16.mxu0 0
    %773 = vmatpush1.bf16.msra.mxu0 %v750
    %774 = vmatprep.subr.bf16.mxu0 0
    %775 = vmatpush1.bf16.msra.mxu0 %v751
    %776 = vmatprep.subr.bf16.mxu0 0
    %777 = vmatpush1.bf16.msra.mxu0 0
    %778 = vmatprep.subr.bf16.mxu0 0
    %779 = vmatpush1.bf16.msra.mxu0 0
    %780 = vmatprep.subr.bf16.mxu0 0
    %781 = vmatpush1.bf16.msra.mxu0 0
    %782 = vmatprep.subr.bf16.mxu0 0
    %783 = vmatpush1.bf16.msra.mxu0 0
    %784 = vmatprep.subr.bf16.mxu0 0
    %785 = vmatpush1.bf16.msra.mxu0 0
    %786 = vmatprep.subr.bf16.mxu0 0
    %787 = vmatpush1.bf16.msra.mxu0 0
    %788 = vmatprep.subr.bf16.mxu0 0
    %789 = vmatpush1.bf16.msra.mxu0 0
    %790 = vmatprep.subr.bf16.mxu0 0
    %791 = vmatpush1.bf16.msra.mxu0 0
    %792 = vmatprep.mubr.bf16.mxu0 0
    %793 = vmatmul.mubr.bf16.gmra.mrb[0].mxu0 %v688
    %v794 = vpop.f32.mrb[0].mxu0
    %v795 = vadd.f32 %v710, %v794
    %v796 = vpop.f32.mrb[0].mxu0
    %v797 = vpop.f32.mrb[0].mxu0
    %v798 = vpop.f32.mrb[0].mxu0
    %799 = vdwg.mxu0
    %vm800 = vcmask 41984
    %801 = vst.msk [vmem:[#allocation2] sm:$0x3] %vm800, %v795
    // Predicated region
    $region30: #{eenetwork_forward.7} parent=1 // pred_check
      _
    $region31: #{eenetwork_forward.7} parent=1 // pred_check_branch
      %803 = sbr.rel (0) target = $region33
    $region32: #{eenetwork_forward.7} parent=1 // pred_region
      %s805 = ssub.s32 32, 32
      %806 = vsyncadd [#allocation3], %s805
      %s808 = sshll.u32 [#allocation2], 4
      %s809 = int_to_ptr.vmem [resolvable:$true] %s808
      %811 = dma.vmem_to_hbm [thread:$0]  %s809, 32, %s7, [#allocation3]
    $region33: #{eenetwork_forward.7} parent=1 // pred_fallthru
      _
    // Predicated region
    $region34: #{eenetwork_forward.7} parent=1 // pred_check
      _
    $region35: #{eenetwork_forward.7} parent=1 // pred_check_branch
      %813 = sbr.rel (0) target = $region37
    $region36: #{eenetwork_forward.7} parent=1 // pred_region
      %814 = dma.done [#allocation3], 32
    $region37: #{eenetwork_forward.7} parent=1 // pred_fallthru
      _
    %815 = vsyncpa [#allocation3], 1

</llo_original>
